<compile_context>
chip_gen: v7x
topology: tpu7x:2x2x1
jax: 0.10.0
libtpu: 0.0.40
codegen_flags: <defaults>
</compile_context>

<pallas_src>
import functools

import numpy as np
import jax
import jax.numpy as jnp
from jax.experimental import pallas as pl
from jax.experimental.pallas import tpu as pltpu

PAD_SEG_COUNT = 83
PAD_OCR_PHRASE_COUNT = 80

_VMEM_LIMIT = 48 * 1024 * 1024          # < v7x 64 MiB physical, fine on v5e/v6e (128 MiB)
_WEIGHT_BLOCK_BUDGET = 4 * 1024 * 1024  # bytes per bf16 weight block (x2 for double-buffer)


def _round_up(x, m):
    return ((x + m - 1) // m) * m


def _pick_div_tile(total, cap):
    """Largest multiple of 128 <= cap that divides `total` (total is a multiple of 128)."""
    t = max(128, min(total, cap) // 128 * 128)
    while total % t != 0:
        t -= 128
    return t


def _gelu(x):
    # exact (erf) GELU, matching torch nn.GELU() default
    return 0.5 * x * (1.0 + jax.lax.erf(x * 0.7071067811865476))


# ----------------------------------------------------------------------------
# Pallas kernel 1: tiled GEMM (bf16 operands, f32 accum) with fused bias+act.
#   Single-k-step variant (no scratch) used whenever the weight column fits the
#   VMEM budget; multi-k-step fallback kept for generality.
# ----------------------------------------------------------------------------
def _linear_single_kernel(x_ref, w_ref, b_ref, o_ref, *, activation):
    out = jnp.dot(x_ref[...], w_ref[...], preferred_element_type=jnp.float32) + b_ref[...]
    if activation == "relu":
        out = jnp.maximum(out, 0.0)
    elif activation == "gelu":
        out = _gelu(out)
    o_ref[...] = out.astype(o_ref.dtype)


def _linear_multi_kernel(x_ref, w_ref, b_ref, o_ref, acc_ref, *, activation, k_steps):
    @pl.when(pl.program_id(2) == 0)
    def _():
        acc_ref[...] = jnp.zeros_like(acc_ref)

    acc_ref[...] += jnp.dot(x_ref[...], w_ref[...], preferred_element_type=jnp.float32)

    @pl.when(pl.program_id(2) == k_steps - 1)
    def _():
        out = acc_ref[...] + b_ref[...]
        if activation == "relu":
            out = jnp.maximum(out, 0.0)
        elif activation == "gelu":
            out = _gelu(out)
        o_ref[...] = out.astype(o_ref.dtype)


def pack_linear(w, b=None):
    """One-time host-side prep: bf16 cast + pad K/N to multiples of 128."""
    K, N = w.shape
    Kp, Npad = _round_up(K, 128), _round_up(N, 128)
    wp = jnp.pad(jnp.asarray(w, jnp.bfloat16), ((0, Kp - K), (0, Npad - N)))
    if b is None:
        bp = jnp.zeros((1, Npad), jnp.float32)
    else:
        bp = jnp.pad(jnp.asarray(b, jnp.float32).reshape(1, N), ((0, 0), (0, Npad - N)))
    return {"w": wp, "b": bp, "k": K, "n": N}


def linear_pallas(x, packed, activation="none", out_dtype=jnp.float32):
    """x: (M, K) @ pre-packed weight -> (M, N) in out_dtype (bf16 for GEMM consumers)."""
    w, b, K, N = packed["w"], packed["b"], packed["k"], packed["n"]
    Kp, Npad = w.shape
    M = x.shape[0]
    if x.dtype != jnp.bfloat16:
        x = x.astype(jnp.bfloat16)
    TM = min(256, _round_up(max(M, 1), 16))
    Mp = _round_up(M, TM)
    if Mp > M or Kp > K:
        x = jnp.pad(x, ((0, Mp - M), (0, Kp - K)))
    TK = _pick_div_tile(Kp, 4096)
    tn_cap = max(128, (_WEIGHT_BLOCK_BUDGET // (TK * 2)) // 128 * 128)
    if Npad >= 256:  # keep >=2 N tiles so v7x megacore has a parallel axis to split
        tn_cap = min(tn_cap, max(128, (Npad // 2) // 128 * 128))
    TN = _pick_div_tile(Npad, tn_cap)
    k_steps = Kp // TK
    grid = (Mp // TM, Npad // TN, k_steps)

    if k_steps == 1:
        kernel = functools.partial(_linear_single_kernel, activation=activation)
        scratch = []
    else:
        kernel = functools.partial(_linear_multi_kernel, activation=activation,
                                   k_steps=k_steps)
        scratch = [pltpu.VMEM((TM, TN), jnp.float32)]

    out = pl.pallas_call(
        kernel,
        out_shape=jax.ShapeDtypeStruct((Mp, Npad), out_dtype),
        grid_spec=pltpu.PrefetchScalarGridSpec(
            num_scalar_prefetch=0,
            grid=grid,
            in_specs=[
                pl.BlockSpec((TM, TK), lambda i, j, k: (i, k)),
                pl.BlockSpec((TK, TN), lambda i, j, k: (k, j)),
                pl.BlockSpec((1, TN), lambda i, j, k: (0, j)),
            ],
            out_specs=pl.BlockSpec((TM, TN), lambda i, j, k: (i, j)),
            scratch_shapes=scratch,
        ),
        compiler_params=pltpu.CompilerParams(
            dimension_semantics=("parallel", "parallel", "arbitrary"),
            vmem_limit_bytes=_VMEM_LIMIT),
    )(x, w, b)
    if Mp > M or Npad > N:
        out = out[:M, :N]
    return out


# ----------------------------------------------------------------------------
# Pallas kernel 2: row LayerNorm (over last dim), optional fused GELU
# ----------------------------------------------------------------------------
def _ln_rows_kernel(x_ref, w_ref, b_ref, o_ref, *, eps, activation):
    x = x_ref[...].astype(jnp.float32)
    mu = jnp.mean(x, axis=-1, keepdims=True)
    var = jnp.mean((x - mu) ** 2, axis=-1, keepdims=True)
    y = (x - mu) * jax.lax.rsqrt(var + eps)
    y = y * w_ref[...] + b_ref[...]
    if activation == "gelu":
        y = _gelu(y)
    o_ref[...] = y.astype(o_ref.dtype)


def layernorm_rows_pallas(x, w, b, eps, activation="none"):
    """x: (M, C). Normalizes over C."""
    x = x.astype(jnp.float32)
    M, C = x.shape
    TM = min(256, _round_up(max(M, 1), 8))
    Mp = _round_up(M, TM)
    xp = jnp.pad(x, ((0, Mp - M), (0, 0))) if Mp > M else x
    out = pl.pallas_call(
        functools.partial(_ln_rows_kernel, eps=eps, activation=activation),
        out_shape=jax.ShapeDtypeStruct((Mp, C), jnp.float32),
        grid_spec=pltpu.PrefetchScalarGridSpec(
            num_scalar_prefetch=0,
            grid=(Mp // TM,),
            in_specs=[
                pl.BlockSpec((TM, C), lambda i: (i, 0)),
                pl.BlockSpec((1, C), lambda i: (0, 0)),
                pl.BlockSpec((1, C), lambda i: (0, 0)),
            ],
            out_specs=pl.BlockSpec((TM, C), lambda i: (i, 0)),
        ),
        compiler_params=pltpu.CompilerParams(dimension_semantics=("parallel",)),
    )(xp,
      jnp.reshape(w, (1, C)).astype(jnp.float32),
      jnp.reshape(b, (1, C)).astype(jnp.float32))
    return out[:M]


# ----------------------------------------------------------------------------
# Pallas kernel 3: fused multi-head self-attention over the packed QKV matrix.
# Heads are split in-kernel via lane slices; each head writes its output slice
# directly (no transpose of K, no concatenate).  Grid over batch only.
# ----------------------------------------------------------------------------
def _mhsa_kernel(qkv_ref, o_ref, *, heads, dim_head, scale, n_valid, n_pad):
    inner = heads * dim_head
    for h in range(heads):
        q = qkv_ref[0, :, h * dim_head:(h + 1) * dim_head]
        k = qkv_ref[0, :, inner + h * dim_head:inner + (h + 1) * dim_head]
        v = qkv_ref[0, :, 2 * inner + h * dim_head:2 * inner + (h + 1) * dim_head]
        s = jax.lax.dot_general(q, k, (((1,), (1,)), ((), ())),
                                preferred_element_type=jnp.float32) * scale
        if n_valid < n_pad:
            col = jax.lax.broadcasted_iota(jnp.int32, s.shape, 1)
            s = jnp.where(col < n_valid, s, -1e30)
        s = s - jnp.max(s, axis=-1, keepdims=True)
        p = jnp.exp(s)
        p = p * pl.reciprocal(jnp.sum(p, axis=-1, keepdims=True), approx=True)
        o_ref[0, :, h * dim_head:(h + 1) * dim_head] = jnp.dot(
            p.astype(v.dtype), v, preferred_element_type=jnp.float32).astype(o_ref.dtype)


def mhsa_pallas(x, qkv_packed, out_packed, heads, dim_head):
    """ViT-style multi-head self-attention.  x: (B, N, D) -> (B, N, D_out)."""
    B, N, D = x.shape
    inner = heads * dim_head
    qkv = linear_pallas(x.reshape(B * N, D), qkv_packed, out_dtype=jnp.bfloat16)
    Np = max(16, _round_up(N, 16))
    qkv = qkv.reshape(B, N, 3 * inner)
    if Np > N:
        qkv = jnp.pad(qkv, ((0, 0), (0, Np - N), (0, 0)))
    scale = 1.0 / float(np.sqrt(dim_head))
    att = pl.pallas_call(
        functools.partial(_mhsa_kernel, heads=heads, dim_head=dim_head,
                          scale=scale, n_valid=N, n_pad=Np),
        out_shape=jax.ShapeDtypeStruct((B, Np, inner), jnp.bfloat16),
        grid_spec=pltpu.PrefetchScalarGridSpec(
            num_scalar_prefetch=0,
            grid=(B,),
            in_specs=[pl.BlockSpec((1, Np, 3 * inner), lambda b: (b, 0, 0))],
            out_specs=pl.BlockSpec((1, Np, inner), lambda b: (b, 0, 0)),
        ),
        compiler_params=pltpu.CompilerParams(dimension_semantics=("parallel",)),
    )(qkv)
    att = att[:, :N].reshape(B * N, inner)
    y = linear_pallas(att, out_packed)
    return y.reshape(B, N, -1)


# ----------------------------------------------------------------------------
# Pallas kernel 4: 3x3 / stride-2 / pad-1 conv with in-kernel im2col.
# The input is phase-decomposed (stride-2 space-to-depth) once; the kernel
# slices the 9 taps out of VMEM (contiguous shift-0/1 windows) and accumulates
# 9 partial GEMMs, then applies bias (+LayerNorm2d) + GELU in the epilogue.
# ----------------------------------------------------------------------------
_CONV_FUSED_OK = [True]  # flipped off (silently) if the fused path fails to lower


@functools.partial(jax.jit, static_argnames=("channels_first",))
def _phase_decompose(x, channels_first=False):
    """pad=1 + stride-2 space-to-depth: -> (B, 2, 2, Ho+1, Wo+1, C) bf16, one XLA pass."""
    if channels_first:
        x = jnp.transpose(x, (0, 2, 3, 1))
    x = x.astype(jnp.bfloat16)
    B, H, W, C = x.shape
    Ho = (H + 2 - 3) // 2 + 1
    Wo = (W + 2 - 3) // 2 + 1
    Hp2, Wp2 = Ho + 1, Wo + 1
    xp = jnp.pad(x, ((0, 0), (1, 2 * Hp2 - H - 1), (1, 2 * Wp2 - W - 1), (0, 0)))
    return xp.reshape(B, Hp2, 2, Wp2, 2, C).transpose(0, 2, 4, 1, 3, 5)


def _conv_accumulate(x_ref, w_ref, acc_ref, ho, wo):
    cin = x_ref.shape[-1]
    for dh in range(3):
        for dw in range(3):
            t = dh * 3 + dw
            lhs = x_ref[0, dh % 2, dw % 2, dh // 2:dh // 2 + ho, dw // 2:dw // 2 + wo, :]
            lhs = lhs.reshape(ho * wo, cin)
            part = jnp.dot(lhs, w_ref[t], preferred_element_type=jnp.float32)
            if t == 0:
                acc_ref[...] = part
            else:
                acc_ref[...] += part


def _conv_bias_gelu_kernel(x_ref, w_ref, b_ref, o_ref, acc_ref, *, ho, wo):
    _conv_accumulate(x_ref, w_ref, acc_ref, ho, wo)
    o_ref[0] = _gelu(acc_ref[...] + b_ref[...]).astype(o_ref.dtype)


def _conv_ln_gelu_kernel(x_ref, w_ref, b_ref, g_ref, beta_ref, o_ref, acc_ref, *, ho, wo, eps):
    _conv_accumulate(x_ref, w_ref, acc_ref, ho, wo)
    y = acc_ref[...] + b_ref[...]
    mu = jnp.mean(y, axis=-1, keepdims=True)
    var = jnp.mean((y - mu) ** 2, axis=-1, keepdims=True)
    yn = (y - mu) * jax.lax.rsqrt(var + eps)
    yn = yn * g_ref[...] + beta_ref[...]
    o_ref[0] = _gelu(yn).astype(o_ref.dtype)


def _conv_im2col_fallback(x, w_tap, b, ln, nchw_input):
    # Known-good path: materialize the 9 taps in HBM and run one GEMM (extra HBM traffic).
    if nchw_input:
        x = jnp.transpose(x, (0, 2, 3, 1))
    B, H, W, Cin = x.shape
    KK, _, Cout = w_tap.shape
    Ho = (H + 2 - 3) // 2 + 1
    Wo = (W + 2 - 3) // 2 + 1
    xb = jnp.pad(x.astype(jnp.bfloat16), ((0, 0), (1, 1), (1, 1), (0, 0)))
    taps = [xb[:, dh:dh + 2 * Ho:2, dw:dw + 2 * Wo:2, :]
            for dh in range(3) for dw in range(3)]
    patches = jnp.concatenate(taps, axis=-1).reshape(B * Ho * Wo, KK * Cin)
    Npad = _round_up(Cout, 128)
    packed = {"w": jnp.pad(w_tap.reshape(KK * Cin, Cout), ((0, 0), (0, Npad - Cout))),
              "b": jnp.pad(b, ((0, 0), (0, Npad - Cout))),
              "k": KK * Cin, "n": Cout}
    if ln is None:
        y = linear_pallas(patches, packed, activation="gelu", out_dtype=jnp.bfloat16)
    else:
        g, beta, eps = ln
        y = linear_pallas(patches, packed)
        y = layernorm_rows_pallas(y, g, beta, eps, activation="gelu").astype(jnp.bfloat16)
    return y.reshape(B, Ho, Wo, Cout)


def conv2d_s2_pallas(x, w_tap, b, ln=None, nchw_input=False):
    """3x3/stride-2/pad-1 conv (NHWC); fused in-kernel im2col + bias (+LN2d) + GELU -> bf16."""
    if nchw_input:
        B, Cin, H, W = x.shape
    else:
        B, H, W, Cin = x.shape
    KK, _, Cout = w_tap.shape
    Ho = (H + 2 - 3) // 2 + 1
    Wo = (W + 2 - 3) // 2 + 1
    if _CONV_FUSED_OK[0]:
        try:
            xph = _phase_decompose(x, channels_first=nchw_input)
            Hp2, Wp2 = Ho + 1, Wo + 1
            if ln is None:
                kernel = functools.partial(_conv_bias_gelu_kernel, ho=Ho, wo=Wo)
                extra, extra_specs = (), []
            else:
                g, beta, eps = ln
                kernel = functools.partial(_conv_ln_gelu_kernel, ho=Ho, wo=Wo, eps=eps)
                extra = (g, beta)
                extra_specs = [pl.BlockSpec((1, Cout), lambda bi: (0, 0)),
                               pl.BlockSpec((1, Cout), lambda bi: (0, 0))]
            out = pl.pallas_call(
                kernel,
                out_shape=jax.ShapeDtypeStruct((B, Ho * Wo, Cout), jnp.bfloat16),
                grid_spec=pltpu.PrefetchScalarGridSpec(
                    num_scalar_prefetch=0,
                    grid=(B,),
                    in_specs=[
                        pl.BlockSpec((1, 2, 2, Hp2, Wp2, Cin),
                                     lambda bi: (bi, 0, 0, 0, 0, 0)),
                        pl.BlockSpec((KK, Cin, Cout), lambda bi: (0, 0, 0)),
                        pl.BlockSpec((1, Cout), lambda bi: (0, 0)),
                    ] + extra_specs,
                    out_specs=pl.BlockSpec((1, Ho * Wo, Cout), lambda bi: (bi, 0, 0)),
                    scratch_shapes=[pltpu.VMEM((Ho * Wo, Cout), jnp.float32)],
                ),
                compiler_params=pltpu.CompilerParams(
                    dimension_semantics=("parallel",),
                    vmem_limit_bytes=_VMEM_LIMIT),
            )(xph, w_tap, b, *extra)
            return out.reshape(B, Ho, Wo, Cout)
        except Exception:
            _CONV_FUSED_OK[0] = False  # fused im2col failed to lower here; use the safe path
    return _conv_im2col_fallback(x, w_tap, b, ln, nchw_input)


# ----------------------------------------------------------------------------
# Host-side glue reproducing the reference's Python-level helpers
# ----------------------------------------------------------------------------
def get_dura_info_visual(segs, fps, total_frame):
    duration_frames, duration_time = [], []
    for seg in segs:
        s0, s1 = int(seg[0]), int(seg[1])
        if s0 == -1 and s1 == -1:
            continue
        if s0 == 0 and s1 == 0:
            continue
        duration_frames.append(s1 - s0 + 1)
        duration_time.append((s1 - s0 + 1) / fps)
    duration_ratio = [min(d / total_frame, 1) for d in duration_frames]
    return np.asarray(duration_time, np.float64), np.asarray(duration_ratio, np.float64)


def dura_embed(values, edges, table):
    if len(values) == 0:
        return jnp.zeros((1, table.shape[1]), jnp.float32)
    idx = np.searchsorted(edges, np.asarray(values, np.float64), side="left")
    return table[jnp.asarray(idx, jnp.int32)]


def pos_encoding_fix(positions, d):
    w_k = np.array([1.0 / np.power(10000.0, 2 * (i // 2) / d) for i in range(d)])
    embs = []
    for pos in positions:
        if pos == 0:
            embs.append(np.zeros(d))
        else:
            e = w_k * float(pos)
            e[0::2] = np.sin(e[0::2])
            e[1::2] = np.cos(e[1::2])
            embs.append(e)
    return jnp.asarray(np.stack(embs), dtype=jnp.float32)


def segment_feature_aggregation_att(frame_fea, indicator, packed):
    # TODO(synk): per-video ragged segment grouping stays host-side (data dependent);
    # batching across videos would change the reference's per-video padding/mean semantics.
    valid = indicator[indicator != -1]
    counts = np.bincount(valid)
    max_frames = int(counts.max())
    unique_segs = np.unique(valid)
    padded = []
    for seg_id in unique_segs:
        sel = np.where(indicator == seg_id)[0]
        frames = frame_fea[jnp.asarray(sel, jnp.int32)]
        if frames.shape[0] < max_frames:
            frames = jnp.pad(frames, ((0, max_frames - frames.shape[0]), (0, 0)))
        padded.append(frames)
    padded = jnp.stack(padded)                       # (S, max_frames, 128)
    agg = mhsa_pallas(padded, packed["intraseg_qkv"], packed["intraseg_out"],
                      heads=4, dim_head=64)
    return jnp.mean(agg, axis=1)                     # (S, 128)


def transformer_encoder_layer(x, params):
    # nn.TransformerEncoderLayer(d_model=128, nhead=2, batch_first=True),
    # post-norm, ReLU FFN (dim 2048), dropout = identity (eval).
    pk = params["packed"]
    B, S, D = x.shape
    sa = mhsa_pallas(x, pk["in_proj"], pk["out_proj"], heads=2, dim_head=64)
    x = x + sa
    x = layernorm_rows_pallas(x.reshape(B * S, D), params["ln1_w"], params["ln1_b"],
                              1e-5).reshape(B, S, D)
    h = linear_pallas(x.reshape(B * S, D), pk["ff1"], activation="relu",
                      out_dtype=jnp.bfloat16)
    h = linear_pallas(h, pk["ff2"])
    x = x + h.reshape(B, S, D)
    x = layernorm_rows_pallas(x.reshape(B * S, D), params["ln2_w"], params["ln2_b"],
                              1e-5).reshape(B, S, D)
    return x


# ----------------------------------------------------------------------------
# MEAM forward
# ----------------------------------------------------------------------------
def meam_forward(params, inputs):
    pk = params["packed"]
    B = inputs["ocr_pattern_fea"].shape[0]

    # --- ocr pattern downscaling branch (conv1+LN2d+GELU fused, conv2+GELU, MLP) ---
    x = conv2d_s2_pallas(inputs["ocr_pattern_fea"], params["conv1_w_tap"],
                         params["conv1_b2"],
                         ln=(params["ln2d_g2"], params["ln2d_beta2"], 1e-6),
                         nchw_input=True)                                    # (B,32,32,64) bf16
    x = conv2d_s2_pallas(x, params["conv2_w_tap"], params["conv2_b2"])       # (B,16,16,16) bf16
    flat = x.reshape(B, -1)                    # NHWC flatten; mlp1 rows pre-permuted to match
    h = linear_pallas(flat, pk["mlp1"], activation="relu", out_dtype=jnp.bfloat16)
    h = linear_pallas(h, pk["mlp2"], activation="relu", out_dtype=jnp.bfloat16)
    ocr_layout_pattern = linear_pallas(h, pk["mlp3"], activation="relu")     # (B, 128) f32

    # --- visual temporal branch ---
    vff = inputs["visual_frames_fea"]                                        # (B, F, 512)
    Bv, F, _ = vff.shape
    narrative_v_fea = linear_pallas(vff.reshape(Bv * F, 512),
                                    pk["proj_v"]).reshape(Bv, F, 128)
    v_temporal = []
    for v_idx in range(Bv):
        v_seg_fea = segment_feature_aggregation_att(
            narrative_v_fea[v_idx], inputs["visual_frames_seg_indicator"][v_idx], pk)
        v_ab, v_re = get_dura_info_visual(inputs["visual_seg_paded"][v_idx],
                                          inputs["fps"][v_idx], inputs["total_frame"][v_idx])
        v_ab_emb = dura_embed(v_ab, params["ab_edges"], params["ab_table"])
        v_re_emb = dura_embed(v_re, params["re_edges"], params["re_table"])
        dura_emd = jnp.concatenate([v_ab_emb, v_re_emb], axis=1)
        _ = v_seg_fea + dura_emd   # dead in the reference (immediately overwritten); kept for fidelity
        S = v_seg_fea.shape[0]
        seg_pos = pos_encoding_fix(np.arange(S), 128)
        seg_general_fea = v_seg_fea + seg_pos
        if S < PAD_SEG_COUNT:
            seg_general_fea = jnp.concatenate(
                [seg_general_fea, jnp.zeros((PAD_SEG_COUNT - S, 128), jnp.float32)], axis=0)
        v_temporal.append(seg_general_fea)
    v_temporal = jnp.stack(v_temporal, axis=0)                               # (B, 83, 128)

    # --- ocr temporal branch ---
    opf = inputs["ocr_phrase_fea"]                                           # (B, P, 512)
    _, P, _ = opf.shape
    proj_t_all = linear_pallas(opf.reshape(B * P, 512),
                               pk["proj_t"]).reshape(B, P, 128)
    t_temporal = []
    for v_idx in range(B):
        ab, re = get_dura_info_visual(inputs["ocr_time_region"][v_idx],
                                      inputs["fps"][v_idx], inputs["total_frame"][v_idx])
        ab_emb = dura_embed(ab, params["ocr_ab_edges"], params["ocr_ab_table"])
        re_emb = dura_embed(re, params["ocr_re_edges"], params["ocr_re_table"])
        ocr_dura = jnp.concatenate([ab_emb, re_emb], axis=1)
        Sv = ocr_dura.shape[0]
        ocr_phrase = proj_t_all[v_idx][:Sv]
        ocr_word = ocr_phrase + ocr_dura
        pos = pos_encoding_fix(np.arange(re_emb.shape[0]), 128)
        ocr_word = ocr_word + pos
        if ocr_word.shape[0] < PAD_OCR_PHRASE_COUNT:
            ocr_word = jnp.concatenate(
                [ocr_word,
                 jnp.zeros((PAD_OCR_PHRASE_COUNT - ocr_word.shape[0], 128), jnp.float32)],
                axis=0)
        t_temporal.append(ocr_word)
    t_temporal = jnp.stack(t_temporal, axis=0)                               # (B, 80, 128)

    # --- inter-segment attentions + pooling (reference: no pad-mask, divide
    #     by the padded segment-list length) ---
    narative_t = mhsa_pallas(t_temporal, pk["t_att_qkv"], pk["t_att_out"],
                             heads=4, dim_head=64)
    ocr_seg_count = jnp.asarray(
        np.array([len(inputs["ocr_time_region"][i]) for i in range(B)], np.float32))
    narative_t = jnp.sum(narative_t, axis=1) / ocr_seg_count[:, None]

    narrative_v = mhsa_pallas(v_temporal, pk["v_att_qkv"], pk["v_att_out"],
                              heads=4, dim_head=64)
    v_seg_count = jnp.asarray(
        np.array([len(inputs["visual_seg_paded"][i]) for i in range(B)], np.float32))
    narrative_v = jnp.sum(narrative_v, axis=1) / v_seg_count[:, None]

    # --- multimodal interaction + classifier ---
    multi = jnp.concatenate([narative_t[:, None, :], narrative_v[:, None, :]], axis=1)
    multi = transformer_encoder_layer(multi, params)
    narrative_temporal_fea = jnp.mean(multi, axis=1)                         # (B, 128)
    meam_fea = jnp.concatenate([ocr_layout_pattern, narrative_temporal_fea], axis=1)
    h = linear_pallas(meam_fea, pk["cls1"], activation="relu", out_dtype=jnp.bfloat16)
    out = linear_pallas(h, pk["cls2"])
    return out                                                               # (B, 2) f32


# ----------------------------------------------------------------------------
# Deterministic parameter init (shapes follow MEAM.__init__)
# ----------------------------------------------------------------------------
def init_params(key):
    keys = iter(jax.random.split(key, 64))

    def nrm(shape, scale=0.02):
        return scale * jax.random.normal(next(keys), shape, jnp.float32)

    p = dict(
        # ocr_pattern_fea_downscaling
        conv1_w=nrm((64, 256, 3, 3)), conv1_b=jnp.zeros((64,), jnp.float32),
        ln2d_w=jnp.ones((64,), jnp.float32), ln2d_b=jnp.zeros((64,), jnp.float32),
        conv2_w=nrm((16, 64, 3, 3)), conv2_b=jnp.zeros((16,), jnp.float32),
        # mlp_ocr_pattern (mlp1_w stored in PyTorch NCHW-flatten row order)
        mlp1_w=nrm((4096, 2048)), mlp1_b=jnp.zeros((2048,), jnp.float32),
        mlp2_w=nrm((2048, 512)), mlp2_b=jnp.zeros((512,), jnp.float32),
        mlp3_w=nrm((512, 128)), mlp3_b=jnp.zeros((128,), jnp.float32),
        # projections
        proj_t_w=nrm((512, 128)), proj_t_b=jnp.zeros((128,), jnp.float32),
        proj_v_w=nrm((512, 128)), proj_v_b=jnp.zeros((128,), jnp.float32),
        # attentions (ViT-style: inner = heads * dim_head = 256)
        t_att_qkv_w=nrm((128, 768)), t_att_out_w=nrm((256, 128)),
        t_att_out_b=jnp.zeros((128,), jnp.float32),
        v_att_qkv_w=nrm((128, 768)), v_att_out_w=nrm((256, 128)),
        v_att_out_b=jnp.zeros((128,), jnp.float32),
        intraseg_qkv_w=nrm((128, 768)), intraseg_out_w=nrm((256, 128)),
        intraseg_out_b=jnp.zeros((128,), jnp.float32),
        # TransformerEncoderLayer(d_model=128, nhead=2)
        in_proj_w=nrm((128, 384)), in_proj_b=jnp.zeros((384,), jnp.float32),
        out_proj_w=nrm((128, 128)), out_proj_b=jnp.zeros((128,), jnp.float32),
        ln1_w=jnp.ones((128,), jnp.float32), ln1_b=jnp.zeros((128,), jnp.float32),
        ff1_w=nrm((128, 2048)), ff1_b=jnp.zeros((2048,), jnp.float32),
        ff2_w=nrm((2048, 128)), ff2_b=jnp.zeros((128,), jnp.float32),
        ln2_w=jnp.ones((128,), jnp.float32), ln2_b=jnp.zeros((128,), jnp.float32),
        # classifier
        cls1_w=nrm((256, 128)), cls1_b=jnp.zeros((128,), jnp.float32),
        cls2_w=nrm((128, 2)), cls2_b=jnp.zeros((2,), jnp.float32),
        # DurationEncoding(64) embedding tables
        ab_table=nrm((101, 64)), re_table=nrm((51, 64)),
        ocr_ab_table=nrm((101, 64)), ocr_re_table=nrm((51, 64)),
    )
    # TODO(synk): the reference derives bin edges from dataset-quantile JSON files;
    # replaced with deterministic synthetic monotone edges here (no file I/O allowed).
    p["ab_edges"] = np.linspace(0.0, 5.0, 101)
    p["re_edges"] = np.linspace(0.0, 1.0, 51)
    p["ocr_ab_edges"] = np.linspace(0.0, 5.0, 101)
    p["ocr_re_edges"] = np.linspace(0.0, 1.0, 51)
    return p


def pack_conv(w, b):
    """Conv weight -> tap-major im2col layout (KH*KW, Cin, Cout) bf16; bias -> (1, Cout) f32."""
    Cout, Cin, KH, KW = w.shape
    w_tap = jnp.transpose(w, (2, 3, 1, 0)).reshape(KH * KW, Cin, Cout).astype(jnp.bfloat16)
    b2 = jnp.asarray(b, jnp.float32).reshape(1, Cout)
    return w_tap, b2


def prepare_params(params, conv_out_hwc=(16, 16, 16)):
    """One-time host-side prep: permute mlp1 rows to NHWC flatten order, pre-pad /
    pre-cast every GEMM weight (bf16, N padded to 128), and lay conv weights out in
    tap-major im2col order -- no weight pad/transpose inside the forward."""
    H2, W2, C2 = conv_out_hwc
    h, w_, c = np.meshgrid(np.arange(H2), np.arange(W2), np.arange(C2), indexing="ij")
    perm = (c * H2 * W2 + h * W2 + w_).reshape(-1)          # NHWC idx -> NCHW idx
    p = dict(params)
    mlp1_w_nhwc = params["mlp1_w"][jnp.asarray(perm, jnp.int32)]
    p["packed"] = {
        "mlp1": pack_linear(mlp1_w_nhwc, params["mlp1_b"]),
        "mlp2": pack_linear(params["mlp2_w"], params["mlp2_b"]),
        "mlp3": pack_linear(params["mlp3_w"], params["mlp3_b"]),
        "proj_t": pack_linear(params["proj_t_w"], params["proj_t_b"]),
        "proj_v": pack_linear(params["proj_v_w"], params["proj_v_b"]),
        "t_att_qkv": pack_linear(params["t_att_qkv_w"]),
        "t_att_out": pack_linear(params["t_att_out_w"], params["t_att_out_b"]),
        "v_att_qkv": pack_linear(params["v_att_qkv_w"]),
        "v_att_out": pack_linear(params["v_att_out_w"], params["v_att_out_b"]),
        "intraseg_qkv": pack_linear(params["intraseg_qkv_w"]),
        "intraseg_out": pack_linear(params["intraseg_out_w"], params["intraseg_out_b"]),
        "in_proj": pack_linear(params["in_proj_w"], params["in_proj_b"]),
        "out_proj": pack_linear(params["out_proj_w"], params["out_proj_b"]),
        "ff1": pack_linear(params["ff1_w"], params["ff1_b"]),
        "ff2": pack_linear(params["ff2_w"], params["ff2_b"]),
        "cls1": pack_linear(params["cls1_w"], params["cls1_b"]),
        "cls2": pack_linear(params["cls2_w"], params["cls2_b"]),
    }
    p["conv1_w_tap"], p["conv1_b2"] = pack_conv(params["conv1_w"], params["conv1_b"])
    p["conv2_w_tap"], p["conv2_b2"] = pack_conv(params["conv2_w"], params["conv2_b"])
    p["ln2d_g2"] = jnp.asarray(params["ln2d_w"], jnp.float32).reshape(1, -1)
    p["ln2d_beta2"] = jnp.asarray(params["ln2d_b"], jnp.float32).reshape(1, -1)
    return p


if __name__ == "__main__":
    key = jax.random.PRNGKey(0)
    k_param, k1, k2, k3 = jax.random.split(key, 4)
    params = init_params(k_param)
    # spatial 64x64 -> two stride-2 convs -> (16, 16, 16) before the MLP flatten
    params = prepare_params(params, conv_out_hwc=(16, 16, 16))

    B = 2
    inputs = {
        "ocr_pattern_fea": jax.random.normal(k1, (B, 256, 64, 64), jnp.float32),
        "visual_frames_fea": jax.random.normal(k2, (B, 8, 512), jnp.float32),
        "visual_frames_seg_indicator": np.array(
            [[0, 0, 0, 1, 1, 2, 2, 2],
             [0, 0, 1, 1, 1, 1, 2, -1]], np.int32),
        "visual_seg_paded": [
            np.array([[0, 2], [3, 4], [5, 7], [-1, -1]], np.int32),
            np.array([[0, 1], [2, 5], [6, 6], [0, 0]], np.int32),
        ],
        "ocr_phrase_fea": jax.random.normal(k3, (B, 6, 512), jnp.float32),
        "ocr_time_region": [
            np.array([[0, 10], [11, 40], [41, 80], [-1, -1]], np.int32),
            np.array([[0, 20], [21, 50], [-1, -1], [-1, -1]], np.int32),
        ],
        "fps": [30.0, 25.0],
        "total_frame": [100, 120],
    }

    out = meam_forward(params, inputs)
    out = jax.block_until_ready(out)
    assert out.shape == (B, 2) and out.dtype == jnp.float32
    assert bool(jnp.all(jnp.isfinite(out)))
    print("KERNEL_OK")
</pallas_src>

<mosaic_0001>
module attributes {stable_mosaic.version = 11 : i64} {
  func.func @_linear_single_kernel(%arg0: i32, %arg1: i32, %arg2: i32, %arg3: memref<256x2304xbf16, #tpu.memory_space<vmem>>, %arg4: memref<2304x128xbf16, #tpu.memory_space<vmem>>, %arg5: memref<1x128xf32, #tpu.memory_space<vmem>>, %arg6: memref<256x128xf32, #tpu.memory_space<vmem>>) attributes {dimension_semantics = [#tpu.dimension_semantics<parallel>, #tpu.dimension_semantics<parallel>, #tpu.dimension_semantics<arbitrary>], iteration_bounds = array<i64: 8, 1, 1>, scalar_prefetch = 0 : i64, scratch_operands = 0 : i64, tpu.core_type = #tpu.core_type<tc>, window_params = [{transform_indices = @transform_0, window_bounds = array<i64: 256, 2304>}, {transform_indices = @transform_1, window_bounds = array<i64: 2304, 128>}, {transform_indices = @transform_2, window_bounds = array<i64: 1, 128>}, {transform_indices = @transform_3, window_bounds = array<i64: 256, 128>}]} {
    %c0 = arith.constant 0 : index
    %c0_0 = arith.constant 0 : index
    %0 = vector.load %arg3[%c0, %c0_0] : memref<256x2304xbf16, #tpu.memory_space<vmem>>, vector<256x2304xbf16>
    %c0_1 = arith.constant 0 : index
    %c0_2 = arith.constant 0 : index
    %1 = vector.load %arg4[%c0_1, %c0_2] : memref<2304x128xbf16, #tpu.memory_space<vmem>>, vector<2304x128xbf16>
    %cst = arith.constant dense<0.000000e+00> : vector<256x128xf32>
    %2 = tpu.matmul %0, %1, %cst {dimension_numbers = #tpu.dot_dimension_numbers<[1], [0], [0], [1], [0, 0, 1, 1], [], []>} : vector<256x2304xbf16>, vector<2304x128xbf16>, vector<256x128xf32> -> vector<256x128xf32>
    %c0_3 = arith.constant 0 : index
    %c0_4 = arith.constant 0 : index
    %3 = vector.load %arg5[%c0_3, %c0_4] : memref<1x128xf32, #tpu.memory_space<vmem>>, vector<1x128xf32>
    %4 = vector.broadcast %3 : vector<1x128xf32> to vector<256x128xf32>
    %5 = arith.addf %2, %4 : vector<256x128xf32>
    %c0_5 = arith.constant 0 : index
    %c0_6 = arith.constant 0 : index
    %6 = vector.load %arg6[%c0_5, %c0_6] : memref<256x128xf32, #tpu.memory_space<vmem>>, vector<256x128xf32>
    tpu.vector_store %arg6[%c0_5, %c0_6], %5 {strides = array<i32>} : memref<256x128xf32, #tpu.memory_space<vmem>>, vector<256x128xf32>,
    return
  }
  func.func @transform_0(%arg0: i32, %arg1: i32, %arg2: i32) -> (i32, i32) {
    %c0_i32 = arith.constant 0 : i32
    return %arg0, %arg2 : i32, i32
  }
  func.func @transform_1(%arg0: i32, %arg1: i32, %arg2: i32) -> (i32, i32) {
    %c0_i32 = arith.constant 0 : i32
    return %arg2, %arg1 : i32, i32
  }
  func.func @transform_2(%arg0: i32, %arg1: i32, %arg2: i32) -> (i32, i32) {
    %c0_i32 = arith.constant 0 : i32
    %c0_i32_0 = arith.constant 0 : i32
    return %c0_i32, %arg1 : i32, i32
  }
  func.func @transform_3(%arg0: i32, %arg1: i32, %arg2: i32) -> (i32, i32) {
    %c0_i32 = arith.constant 0 : i32
    return %arg0, %arg1 : i32, i32
  }
}

</mosaic_0001>

<llo_original>
// kernel: tpu_custom_call.1
$region0: #{tpu_custom_call.1}
  #allocation0 [shape = 'u32[]', space=smem, size = 0x4, offset = 0x4, fixed_abs, tag = 'smem constant byte address 0x4 - core index']
  #allocation1 [shape = 'u32[144,128]{1,0:T(1,128)}', space=vmem, size = 0x12000, scoped, tag = 'internal scratch']
  %s0 = inlined_call_operand.hbm [shape: bf16[2048,2304], index: 0, kind: input, shape index: {}]
  %s1 = inlined_call_operand.hbm [shape: bf16[2304,128], index: 1, kind: input, shape index: {}]
  %s2 = inlined_call_operand.hbm [shape: f32[1,128], index: 2, kind: input, shape index: {}]
  %s3 = inlined_call_operand.hbm [shape: f32[2048,128], index: 3, kind: output, shape index: {}]
  %s4 = sld [smem:[#allocation0]]
  $region57: #{tpu_custom_call.1} parent=0
    _
  %s6 = ssub.s32 1, %s4
  %s7 = scalar_select 0, %s6, %s4
  $region1: #{tpu_custom_call.1} parent=0
    #allocation2 [shape = 'u8[2359296]{0}', space=vmem, size = 0x240000, scoped, tag = 'input window, operand 0']
    #allocation3 [shape = 's32[2]{0}', space=sflag, size = 0x8, scoped, tag = 'scoped memory for tpu_custom_call.1']
    #allocation4 [shape = 's32[2]{0}', space=sflag, size = 0x8, scoped, tag = 'scoped memory for tpu_custom_call.1']
    #allocation5 [shape = 'u8[589824]{0}', space=vmem, size = 0x90000, scoped, tag = 'input window, operand 1, single buffered']
    #allocation6 [shape = 's32[1]{0}', space=sflag, size = 0x4, scoped, tag = 'scoped memory for tpu_custom_call.1']
    #allocation7 [shape = 'u8[512]{0}', space=vmem, size = 0x400, scoped, tag = 'input window, operand 2, single buffered']
    #allocation8 [shape = 'u8[262144]{0}', space=vmem, size = 0x40000, scoped, tag = 'output window, operand 0']
    %8 = vsyncpa [#allocation3], 0
    %s9 = scalar_lea.sflag [#allocation3], 1
    %10 = vsyncpa %s9, 0
    %11 = vsyncpa [#allocation6], 0
    %12 = vsyncpa [#allocation4], 0
    %s13 = scalar_lea.sflag [#allocation4], 1
    %14 = vsyncpa %s13, 0
    loop: start=0, step=1, limit=10
    $region2: #{tpu_custom_call.1} parent=1 // loop_pre_header
      _
    $region3: #{tpu_custom_call.1} parent=1 // loop_header
      %s16 = sphi 0, %s20
      %p17 = scmp.ge.s32.totalorder %s16, 10
      %s23 = sphi 0, %s42
      %s24 = sphi 0, %s38
      %s25 = sphi 0, %s34
      %s26 = sphi 0, %s23
      %s27 = sphi 0, %s24
      %s28 = sphi 0, %s25
      %s29 = sphi 0, %s26
      %s30 = sphi 0, %s27
      %s31 = sphi 0, %s28
      %s47 = sphi 0, %s49
      %s50 = sphi 0, %s47
      %s51 = sphi 0, %s50
      %s67 = sphi 0, %s51
      %s75 = sphi 0, %s77
      %s78 = sphi 0, %s75
      %s79 = sphi 0, %s78
      %s95 = sphi 0, %s79
      %s101 = sphi 0, %s103
      %s104 = sphi 0, %s101
      %s105 = sphi 0, %s104
      %s121 = sphi 0, %s105
      %s129 = sphi 0, %s131
      %s132 = sphi 0, %s129
      %s133 = sphi 0, %s132
      %s149 = sphi 0, %s133
    $region4: #{tpu_custom_call.1} parent=1 // loop_header_branch
      %19 = sbr.rel (%p17) target = $region8
    $region5: #{tpu_custom_call.1} parent=1 // loop_body
      %s21 = ssub.s32 %s16, 1
      %s22 = ssub.s32 %s16, 2
      %s32 = sadd.s32 1, %s25
      %p33 = scmp.ge.s32.totalorder %s32, 1
      %s34 = scalar_select %p33, 0, %s32
      %s35 = sadd.s32 1, %s24
      %s36 = scalar_select %p33, %s35, %s24
      %p37 = scmp.ge.s32.totalorder %s36, 1
      %s38 = scalar_select %p37, 0, %s36
      %s39 = sadd.s32 1, %s23
      %s40 = scalar_select %p37, %s39, %s23
      %p41 = scmp.ge.s32.totalorder %s40, 8
      %s42 = scalar_select %p41, 0, %s40
      %s43 = ssub.s32 %s23, %s42
      %s44 = ssub.s32 %s25, %s34
      %s45 = sor.u32 %s43, %s44
      %p46 = scmp.eq.s32.totalorder %s45, 0
      %s48 = sadd.s32 %s47, 1
      %s49 = scalar_select %p46, %s47, %s48
      %p52 = pneg %p46
      %p53 = scmp.eq.s32.totalorder %s16, 7
      %p54 = por %p52, %p53
      %p55 = scmp.ne.s32.totalorder %s47, %s50
      %p56 = scmp.eq.s32.totalorder %s16, 0
      %p57 = por %p55, %p56
      %p58 = scmp.ne.s32.totalorder %s47, %s50
      %p59 = scmp.eq.s32.totalorder %s21, 7
      %p60 = por %p58, %p59
      %p61 = scmp.ne.s32.totalorder %s50, %s51
      %p62 = scmp.eq.s32.totalorder %s21, 0
      %p63 = por %p61, %p62
      %p64 = scmp.ne.s32.totalorder %s50, %s51
      %p65 = scmp.eq.s32.totalorder %s22, 7
      %p66 = por %p64, %p65
      %p68 = scmp.ne.s32.totalorder %s51, %s67
      %p69 = scmp.eq.s32.totalorder %s22, 0
      %p70 = por %p68, %p69
      %s71 = ssub.s32 %s25, %s34
      %s72 = ssub.s32 %s24, %s38
      %s73 = sor.u32 %s71, %s72
      %p74 = scmp.eq.s32.totalorder %s73, 0
      %s76 = sadd.s32 %s75, 1
      %s77 = scalar_select %p74, %s75, %s76
      %p80 = pneg %p74
      %p81 = scmp.eq.s32.totalorder %s16, 7
      %p82 = por %p80, %p81
      %p83 = scmp.ne.s32.totalorder %s75, %s78
      %p84 = scmp.eq.s32.totalorder %s16, 0
      %p85 = por %p83, %p84
      %p86 = scmp.ne.s32.totalorder %s75, %s78
      %p87 = scmp.eq.s32.totalorder %s21, 7
      %p88 = por %p86, %p87
      %p89 = scmp.ne.s32.totalorder %s78, %s79
      %p90 = scmp.eq.s32.totalorder %s21, 0
      %p91 = por %p89, %p90
      %p92 = scmp.ne.s32.totalorder %s78, %s79
      %p93 = scmp.eq.s32.totalorder %s22, 7
      %p94 = por %p92, %p93
      %p96 = scmp.ne.s32.totalorder %s79, %s95
      %p97 = scmp.eq.s32.totalorder %s22, 0
      %p98 = por %p96, %p97
      %s99 = ssub.s32 %s24, %s38
      %p100 = scmp.eq.s32.totalorder %s99, 0
      %s102 = sadd.s32 %s101, 1
      %s103 = scalar_select %p100, %s101, %s102
      %p106 = pneg %p100
      %p107 = scmp.eq.s32.totalorder %s16, 7
      %p108 = por %p106, %p107
      %p109 = scmp.ne.s32.totalorder %s101, %s104
      %p110 = scmp.eq.s32.totalorder %s16, 0
      %p111 = por %p109, %p110
      %p112 = scmp.ne.s32.totalorder %s101, %s104
      %p113 = scmp.eq.s32.totalorder %s21, 7
      %p114 = por %p112, %p113
      %p115 = scmp.ne.s32.totalorder %s104, %s105
      %p116 = scmp.eq.s32.totalorder %s21, 0
      %p117 = por %p115, %p116
      %p118 = scmp.ne.s32.totalorder %s104, %s105
      %p119 = scmp.eq.s32.totalorder %s22, 7
      %p120 = por %p118, %p119
      %p122 = scmp.ne.s32.totalorder %s105, %s121
      %p123 = scmp.eq.s32.totalorder %s22, 0
      %p124 = por %p122, %p123
      %s125 = ssub.s32 %s23, %s42
      %s126 = ssub.s32 %s24, %s38
      %s127 = sor.u32 %s125, %s126
      %p128 = scmp.eq.s32.totalorder %s127, 0
      %s130 = sadd.s32 %s129, 1
      %s131 = scalar_select %p128, %s129, %s130
      %p134 = pneg %p128
      %p135 = scmp.eq.s32.totalorder %s16, 7
      %p136 = por %p134, %p135
      %p137 = scmp.ne.s32.totalorder %s129, %s132
      %p138 = scmp.eq.s32.totalorder %s16, 0
      %p139 = por %p137, %p138
      %p140 = scmp.ne.s32.totalorder %s129, %s132
      %p141 = scmp.eq.s32.totalorder %s21, 7
      %p142 = por %p140, %p141
      %p143 = scmp.ne.s32.totalorder %s132, %s133
      %p144 = scmp.eq.s32.totalorder %s21, 0
      %p145 = por %p143, %p144
      %p146 = scmp.ne.s32.totalorder %s132, %s133
      %p147 = scmp.eq.s32.totalorder %s22, 7
      %p148 = por %p146, %p147
      %p150 = scmp.ne.s32.totalorder %s133, %s149
      %p151 = scmp.eq.s32.totalorder %s22, 0
      %p152 = por %p150, %p151
      %p153 = scmp.le.s32.totalorder 1, %s16
      %p154 = scmp.lt.s32.totalorder %s16, 9
      %p155 = pnand %p153, %p154
      %p156 = pneg %p155
      // Predicated region
      $region9: #{tpu_custom_call.1} parent=5 // pred_check
        _
      $region10: #{tpu_custom_call.1} parent=5 // pred_check_branch
        %158 = sbr.rel (%p155) target = $region12
      $region11: #{tpu_custom_call.1} parent=5 // pred_region
        %s159 = ssub.s32 %s16, 1
        // Predicated region
        $region13: #{tpu_custom_call.1} parent=11 // pred_check
          %p160 = pneg %p91
        $region14: #{tpu_custom_call.1} parent=11 // pred_check_branch
          %162 = sbr.rel (%p160) target = $region16
        $region15: #{tpu_custom_call.1} parent=11 // pred_region
          %s163 = smul.u32 288, %s28
          %s165 = ssub.s32 18432, 18432
          %166 = vsyncadd [#allocation6], %s165
          %s167 = sadd.s32 %s27, %s163
          %s168 = smul.addr %s167, 64
          %s169 = scalar_lea.hbm %s1, %s168
          %s170 = sshll.u32 [#allocation5], 4
          %s171 = int_to_ptr.vmem [resolvable:$true] %s170
          %176 = dma.hbm_to_vmem [thread:$0]  %s169, 18432, %s171, [#allocation6], 64, 64, 4
        $region16: #{tpu_custom_call.1} parent=11 // pred_fallthru
          _
        // Predicated region
        $region17: #{tpu_custom_call.1} parent=11 // pred_check
          %p177 = pneg %p117
        $region18: #{tpu_custom_call.1} parent=11 // pred_check_branch
          %179 = sbr.rel (%p177) target = $region20
        $region19: #{tpu_custom_call.1} parent=11 // pred_region
          %s181 = ssub.s32 16, 16
          %182 = vsyncadd [#allocation6], %s181
          %s183 = smul.addr %s27, 16
          %s184 = scalar_lea.hbm %s2, %s183
          %s186 = sshll.u32 [#allocation7], 4
          %s187 = int_to_ptr.vmem [resolvable:$true] %s186
          %189 = dma.hbm_to_vmem [thread:$0]  %s184, 16, %s187, [#allocation6]
        $region20: #{tpu_custom_call.1} parent=11 // pred_fallthru
          _
      $region12: #{tpu_custom_call.1} parent=5 // pred_fallthru
        _
      %p190 = scmp.lt.s32.totalorder %s16, 8
      // Predicated region
      $region21: #{tpu_custom_call.1} parent=5 // pred_check
        %p191 = pneg %p190
      $region22: #{tpu_custom_call.1} parent=5 // pred_check_branch
        %193 = sbr.rel (%p191) target = $region24
      $region23: #{tpu_custom_call.1} parent=5 // pred_region
        // Predicated region
        $region25: #{tpu_custom_call.1} parent=23 // pred_check
          %p194 = pneg %p57
        $region26: #{tpu_custom_call.1} parent=23 // pred_check_branch
          %196 = sbr.rel (%p194) target = $region28
        $region27: #{tpu_custom_call.1} parent=23 // pred_region
          %s197 = sand.u32 %s47, 1
          %s198 = scalar_lea.sflag [#allocation3], %s197
          %s199 = sand.u32 %s47, 1
          %s200 = smul.addr %s199, 2304
          %s201 = scalar_lea.vmem [#allocation2], %s200
          %s202 = smul.u32 32, %s23
          %s203 = smul.u32 18, %s25
          %s205 = ssub.s32 36864, 36864
          %206 = vsyncadd %s198, %s205
          %s207 = smul.addr %s202, 18
          %s208 = sadd.s32 %s203, %s207
          %s209 = smul.addr %s208, 64
          %s210 = scalar_lea.hbm %s0, %s209
          %s211 = sshll.u32 %s201, 4
          %s212 = int_to_ptr.vmem [resolvable:$true] %s211
          %217 = dma.hbm_to_vmem [thread:$0]  %s210, 36864, %s212, %s198, 1152, 1152, 72
        $region28: #{tpu_custom_call.1} parent=23 // pred_fallthru
          _
      $region24: #{tpu_custom_call.1} parent=5 // pred_fallthru
        _
      %p218 = scmp.le.s32.totalorder 1, %s16
      %p219 = scmp.lt.s32.totalorder %s16, 9
      %p220 = pnand %p218, %p219
      %p221 = pneg %p220
      // Predicated region
      $region29: #{tpu_custom_call.1} parent=5 // pred_check
        _
      $region30: #{tpu_custom_call.1} parent=5 // pred_check_branch
        %223 = sbr.rel (%p220) target = $region32
      $region31: #{tpu_custom_call.1} parent=5 // pred_region
        %s224 = ssub.s32 %s16, 1
        %s225 = sand.u32 %s50, 1
        %s226 = scalar_lea.sflag [#allocation3], %s225
        %s227 = sand.u32 %s50, 1
        %s228 = smul.addr %s227, 2304
        %s229 = scalar_lea.vmem [#allocation2], %s228
        // Predicated region
        $region33: #{tpu_custom_call.1} parent=31 // pred_check
          %p230 = pneg %p63
        $region34: #{tpu_custom_call.1} parent=31 // pred_check_branch
          %232 = sbr.rel (%p230) target = $region36
        $region35: #{tpu_custom_call.1} parent=31 // pred_region
          %233 = dma.done %s226, 36864
        $region36: #{tpu_custom_call.1} parent=31 // pred_fallthru
          _
        // Predicated region
        $region37: #{tpu_custom_call.1} parent=31 // pred_check
          %p234 = pneg %p91
        $region38: #{tpu_custom_call.1} parent=31 // pred_check_branch
          %236 = sbr.rel (%p234) target = $region40
        $region39: #{tpu_custom_call.1} parent=31 // pred_region
          %237 = dma.done [#allocation6], 18432
        $region40: #{tpu_custom_call.1} parent=31 // pred_fallthru
          _
        // Predicated region
        $region41: #{tpu_custom_call.1} parent=31 // pred_check
          %p238 = pneg %p117
        $region42: #{tpu_custom_call.1} parent=31 // pred_check_branch
          %240 = sbr.rel (%p238) target = $region44
        $region43: #{tpu_custom_call.1} parent=31 // pred_region
          %241 = dma.done [#allocation6], 16
        $region44: #{tpu_custom_call.1} parent=31 // pred_fallthru
          _
        %s242 = sand.u32 %s50, 1
        %s243 = scalar_lea.sflag [#allocation3], %s242
        %s244 = sand.u32 %s50, 1
        %s245 = smul.addr %s244, 2304
        %s246 = scalar_lea.vmem [#allocation2], %s245
        %p247 = pneg %p63
        %p248 = pneg %p60
        %p249 = pneg %p91
        %p250 = pneg %p88
        %p251 = pneg %p117
        %p252 = pneg %p114
        %p253 = pneg %p145
        %p254 = pneg %p142
        %s255 = sand.u32 %s132, 1
        %s256 = scalar_lea.sflag [#allocation4], %s255
        %s257 = sand.u32 %s132, 1
        %s258 = smul.addr %s257, 256
        %s259 = scalar_lea.vmem [#allocation8], %s258
        %s260 = smul.u32 32, %s26
        %s261 = smul.u32 18, %s28
        %s262 = smul.u32 288, %s28
        %s263 = smul.u32 32, %s26
        %v265 = vld [vmem:[%s229] sm:$0xff]
        %v266 = vld [vmem:[%s229 + $0x8] sm:$0xff]
        %v267 = vld [vmem:[%s229 + $0x10] sm:$0xff]
        %v268 = vld [vmem:[%s229 + $0x18] sm:$0xff]
        %v269 = vld [vmem:[%s229 + $0x20] sm:$0xff]
        %v270 = vld [vmem:[%s229 + $0x28] sm:$0xff]
        %v271 = vld [vmem:[%s229 + $0x30] sm:$0xff]
        %v272 = vld [vmem:[%s229 + $0x38] sm:$0xff]
        %v273 = vld [vmem:[%s229 + $0x40] sm:$0xff]
        %v274 = vld [vmem:[%s229 + $0x48] sm:$0xff]
        %v275 = vld [vmem:[%s229 + $0x50] sm:$0xff]
        %v276 = vld [vmem:[%s229 + $0x58] sm:$0xff]
        %v277 = vld [vmem:[%s229 + $0x60] sm:$0xff]
        %v278 = vld [vmem:[%s229 + $0x68] sm:$0xff]
        %v279 = vld [vmem:[%s229 + $0x70] sm:$0xff]
        %v280 = vld [vmem:[%s229 + $0x78] sm:$0xff]
        %v281 = vld [vmem:[%s229 + $0x80] sm:$0xff]
        %v282 = vld [vmem:[%s229 + $0x88] sm:$0xff]
        %v283 = vld [vmem:[%s229 + $0x90] sm:$0xff]
        %v284 = vld [vmem:[%s229 + $0x98] sm:$0xff]
        %v285 = vld [vmem:[%s229 + $0xa0] sm:$0xff]
        %v286 = vld [vmem:[%s229 + $0xa8] sm:$0xff]
        %v287 = vld [vmem:[%s229 + $0xb0] sm:$0xff]
        %v288 = vld [vmem:[%s229 + $0xb8] sm:$0xff]
        %v289 = vld [vmem:[%s229 + $0xc0] sm:$0xff]
        %v290 = vld [vmem:[%s229 + $0xc8] sm:$0xff]
        %v291 = vld [vmem:[%s229 + $0xd0] sm:$0xff]
        %v292 = vld [vmem:[%s229 + $0xd8] sm:$0xff]
        %v293 = vld [vmem:[%s229 + $0xe0] sm:$0xff]
        %v294 = vld [vmem:[%s229 + $0xe8] sm:$0xff]
        %v295 = vld [vmem:[%s229 + $0xf0] sm:$0xff]
        %v296 = vld [vmem:[%s229 + $0xf8] sm:$0xff]
        %v297 = vld [vmem:[%s229 + $0x100] sm:$0xff]
        %v298 = vld [vmem:[%s229 + $0x108] sm:$0xff]
        %v299 = vld [vmem:[%s229 + $0x110] sm:$0xff]
        %v300 = vld [vmem:[%s229 + $0x118] sm:$0xff]
        %v301 = vld [vmem:[%s229 + $0x120] sm:$0xff]
        %v302 = vld [vmem:[%s229 + $0x128] sm:$0xff]
        %v303 = vld [vmem:[%s229 + $0x130] sm:$0xff]
        %v304 = vld [vmem:[%s229 + $0x138] sm:$0xff]
        %v305 = vld [vmem:[%s229 + $0x140] sm:$0xff]
        %v306 = vld [vmem:[%s229 + $0x148] sm:$0xff]
        %v307 = vld [vmem:[%s229 + $0x150] sm:$0xff]
        %v308 = vld [vmem:[%s229 + $0x158] sm:$0xff]
        %v309 = vld [vmem:[%s229 + $0x160] sm:$0xff]
        %v310 = vld [vmem:[%s229 + $0x168] sm:$0xff]
        %v311 = vld [vmem:[%s229 + $0x170] sm:$0xff]
        %v312 = vld [vmem:[%s229 + $0x178] sm:$0xff]
        %v313 = vld [vmem:[%s229 + $0x180] sm:$0xff]
        %v314 = vld [vmem:[%s229 + $0x188] sm:$0xff]
        %v315 = vld [vmem:[%s229 + $0x190] sm:$0xff]
        %v316 = vld [vmem:[%s229 + $0x198] sm:$0xff]
        %v317 = vld [vmem:[%s229 + $0x1a0] sm:$0xff]
        %v318 = vld [vmem:[%s229 + $0x1a8] sm:$0xff]
        %v319 = vld [vmem:[%s229 + $0x1b0] sm:$0xff]
        %v320 = vld [vmem:[%s229 + $0x1b8] sm:$0xff]
        %v321 = vld [vmem:[%s229 + $0x1c0] sm:$0xff]
        %v322 = vld [vmem:[%s229 + $0x1c8] sm:$0xff]
        %v323 = vld [vmem:[%s229 + $0x1d0] sm:$0xff]
        %v324 = vld [vmem:[%s229 + $0x1d8] sm:$0xff]
        %v325 = vld [vmem:[%s229 + $0x1e0] sm:$0xff]
        %v326 = vld [vmem:[%s229 + $0x1e8] sm:$0xff]
        %v327 = vld [vmem:[%s229 + $0x1f0] sm:$0xff]
        %v328 = vld [vmem:[%s229 + $0x1f8] sm:$0xff]
        %v329 = vld [vmem:[%s229 + $0x200] sm:$0xff]
        %v330 = vld [vmem:[%s229 + $0x208] sm:$0xff]
        %v331 = vld [vmem:[%s229 + $0x210] sm:$0xff]
        %v332 = vld [vmem:[%s229 + $0x218] sm:$0xff]
        %v333 = vld [vmem:[%s229 + $0x220] sm:$0xff]
        %v334 = vld [vmem:[%s229 + $0x228] sm:$0xff]
        %v335 = vld [vmem:[%s229 + $0x230] sm:$0xff]
        %v336 = vld [vmem:[%s229 + $0x238] sm:$0xff]
        %v337 = vld [vmem:[%s229 + $0x240] sm:$0xff]
        %v338 = vld [vmem:[%s229 + $0x248] sm:$0xff]
        %v339 = vld [vmem:[%s229 + $0x250] sm:$0xff]
        %v340 = vld [vmem:[%s229 + $0x258] sm:$0xff]
        %v341 = vld [vmem:[%s229 + $0x260] sm:$0xff]
        %v342 = vld [vmem:[%s229 + $0x268] sm:$0xff]
        %v343 = vld [vmem:[%s229 + $0x270] sm:$0xff]
        %v344 = vld [vmem:[%s229 + $0x278] sm:$0xff]
        %v345 = vld [vmem:[%s229 + $0x280] sm:$0xff]
        %v346 = vld [vmem:[%s229 + $0x288] sm:$0xff]
        %v347 = vld [vmem:[%s229 + $0x290] sm:$0xff]
        %v348 = vld [vmem:[%s229 + $0x298] sm:$0xff]
        %v349 = vld [vmem:[%s229 + $0x2a0] sm:$0xff]
        %v350 = vld [vmem:[%s229 + $0x2a8] sm:$0xff]
        %v351 = vld [vmem:[%s229 + $0x2b0] sm:$0xff]
        %v352 = vld [vmem:[%s229 + $0x2b8] sm:$0xff]
        %v353 = vld [vmem:[%s229 + $0x2c0] sm:$0xff]
        %v354 = vld [vmem:[%s229 + $0x2c8] sm:$0xff]
        %v355 = vld [vmem:[%s229 + $0x2d0] sm:$0xff]
        %v356 = vld [vmem:[%s229 + $0x2d8] sm:$0xff]
        %v357 = vld [vmem:[%s229 + $0x2e0] sm:$0xff]
        %v358 = vld [vmem:[%s229 + $0x2e8] sm:$0xff]
        %v359 = vld [vmem:[%s229 + $0x2f0] sm:$0xff]
        %v360 = vld [vmem:[%s229 + $0x2f8] sm:$0xff]
        %v361 = vld [vmem:[%s229 + $0x300] sm:$0xff]
        %v362 = vld [vmem:[%s229 + $0x308] sm:$0xff]
        %v363 = vld [vmem:[%s229 + $0x310] sm:$0xff]
        %v364 = vld [vmem:[%s229 + $0x318] sm:$0xff]
        %v365 = vld [vmem:[%s229 + $0x320] sm:$0xff]
        %v366 = vld [vmem:[%s229 + $0x328] sm:$0xff]
        %v367 = vld [vmem:[%s229 + $0x330] sm:$0xff]
        %v368 = vld [vmem:[%s229 + $0x338] sm:$0xff]
        %v369 = vld [vmem:[%s229 + $0x340] sm:$0xff]
        %v370 = vld [vmem:[%s229 + $0x348] sm:$0xff]
        %v371 = vld [vmem:[%s229 + $0x350] sm:$0xff]
        %v372 = vld [vmem:[%s229 + $0x358] sm:$0xff]
        %v373 = vld [vmem:[%s229 + $0x360] sm:$0xff]
        %v374 = vld [vmem:[%s229 + $0x368] sm:$0xff]
        %v375 = vld [vmem:[%s229 + $0x370] sm:$0xff]
        %v376 = vld [vmem:[%s229 + $0x378] sm:$0xff]
        %v377 = vld [vmem:[%s229 + $0x380] sm:$0xff]
        %v378 = vld [vmem:[%s229 + $0x388] sm:$0xff]
        %v379 = vld [vmem:[%s229 + $0x390] sm:$0xff]
        %v380 = vld [vmem:[%s229 + $0x398] sm:$0xff]
        %v381 = vld [vmem:[%s229 + $0x3a0] sm:$0xff]
        %v382 = vld [vmem:[%s229 + $0x3a8] sm:$0xff]
        %v383 = vld [vmem:[%s229 + $0x3b0] sm:$0xff]
        %v384 = vld [vmem:[%s229 + $0x3b8] sm:$0xff]
        %v385 = vld [vmem:[%s229 + $0x3c0] sm:$0xff]
        %v386 = vld [vmem:[%s229 + $0x3c8] sm:$0xff]
        %v387 = vld [vmem:[%s229 + $0x3d0] sm:$0xff]
        %v388 = vld [vmem:[%s229 + $0x3d8] sm:$0xff]
        %v389 = vld [vmem:[%s229 + $0x3e0] sm:$0xff]
        %v390 = vld [vmem:[%s229 + $0x3e8] sm:$0xff]
        %v391 = vld [vmem:[%s229 + $0x3f0] sm:$0xff]
        %v392 = vld [vmem:[%s229 + $0x3f8] sm:$0xff]
        %v393 = vld [vmem:[%s229 + $0x400] sm:$0xff]
        %v394 = vld [vmem:[%s229 + $0x408] sm:$0xff]
        %v395 = vld [vmem:[%s229 + $0x410] sm:$0xff]
        %v396 = vld [vmem:[%s229 + $0x418] sm:$0xff]
        %v397 = vld [vmem:[%s229 + $0x420] sm:$0xff]
        %v398 = vld [vmem:[%s229 + $0x428] sm:$0xff]
        %v399 = vld [vmem:[%s229 + $0x430] sm:$0xff]
        %v400 = vld [vmem:[%s229 + $0x438] sm:$0xff]
        %v401 = vld [vmem:[%s229 + $0x440] sm:$0xff]
        %v402 = vld [vmem:[%s229 + $0x448] sm:$0xff]
        %v403 = vld [vmem:[%s229 + $0x450] sm:$0xff]
        %v404 = vld [vmem:[%s229 + $0x458] sm:$0xff]
        %v405 = vld [vmem:[%s229 + $0x460] sm:$0xff]
        %v406 = vld [vmem:[%s229 + $0x468] sm:$0xff]
        %v407 = vld [vmem:[%s229 + $0x470] sm:$0xff]
        %v408 = vld [vmem:[%s229 + $0x478] sm:$0xff]
        %v409 = vld [vmem:[%s229 + $0x480] sm:$0xff]
        %v410 = vld [vmem:[%s229 + $0x488] sm:$0xff]
        %v411 = vld [vmem:[%s229 + $0x490] sm:$0xff]
        %v412 = vld [vmem:[%s229 + $0x498] sm:$0xff]
        %v413 = vld [vmem:[%s229 + $0x4a0] sm:$0xff]
        %v414 = vld [vmem:[%s229 + $0x4a8] sm:$0xff]
        %v415 = vld [vmem:[%s229 + $0x4b0] sm:$0xff]
        %v416 = vld [vmem:[%s229 + $0x4b8] sm:$0xff]
        %v417 = vld [vmem:[%s229 + $0x4c0] sm:$0xff]
        %v418 = vld [vmem:[%s229 + $0x4c8] sm:$0xff]
        %v419 = vld [vmem:[%s229 + $0x4d0] sm:$0xff]
        %v420 = vld [vmem:[%s229 + $0x4d8] sm:$0xff]
        %v421 = vld [vmem:[%s229 + $0x4e0] sm:$0xff]
        %v422 = vld [vmem:[%s229 + $0x4e8] sm:$0xff]
        %v423 = vld [vmem:[%s229 + $0x4f0] sm:$0xff]
        %v424 = vld [vmem:[%s229 + $0x4f8] sm:$0xff]
        %v425 = vld [vmem:[%s229 + $0x500] sm:$0xff]
        %v426 = vld [vmem:[%s229 + $0x508] sm:$0xff]
        %v427 = vld [vmem:[%s229 + $0x510] sm:$0xff]
        %v428 = vld [vmem:[%s229 + $0x518] sm:$0xff]
        %v429 = vld [vmem:[%s229 + $0x520] sm:$0xff]
        %v430 = vld [vmem:[%s229 + $0x528] sm:$0xff]
        %v431 = vld [vmem:[%s229 + $0x530] sm:$0xff]
        %v432 = vld [vmem:[%s229 + $0x538] sm:$0xff]
        %v433 = vld [vmem:[%s229 + $0x540] sm:$0xff]
        %v434 = vld [vmem:[%s229 + $0x548] sm:$0xff]
        %v435 = vld [vmem:[%s229 + $0x550] sm:$0xff]
        %v436 = vld [vmem:[%s229 + $0x558] sm:$0xff]
        %v437 = vld [vmem:[%s229 + $0x560] sm:$0xff]
        %v438 = vld [vmem:[%s229 + $0x568] sm:$0xff]
        %v439 = vld [vmem:[%s229 + $0x570] sm:$0xff]
        %v440 = vld [vmem:[%s229 + $0x578] sm:$0xff]
        %v441 = vld [vmem:[%s229 + $0x580] sm:$0xff]
        %v442 = vld [vmem:[%s229 + $0x588] sm:$0xff]
        %v443 = vld [vmem:[%s229 + $0x590] sm:$0xff]
        %v444 = vld [vmem:[%s229 + $0x598] sm:$0xff]
        %v445 = vld [vmem:[%s229 + $0x5a0] sm:$0xff]
        %v446 = vld [vmem:[%s229 + $0x5a8] sm:$0xff]
        %v447 = vld [vmem:[%s229 + $0x5b0] sm:$0xff]
        %v448 = vld [vmem:[%s229 + $0x5b8] sm:$0xff]
        %v449 = vld [vmem:[%s229 + $0x5c0] sm:$0xff]
        %v450 = vld [vmem:[%s229 + $0x5c8] sm:$0xff]
        %v451 = vld [vmem:[%s229 + $0x5d0] sm:$0xff]
        %v452 = vld [vmem:[%s229 + $0x5d8] sm:$0xff]
        %v453 = vld [vmem:[%s229 + $0x5e0] sm:$0xff]
        %v454 = vld [vmem:[%s229 + $0x5e8] sm:$0xff]
        %v455 = vld [vmem:[%s229 + $0x5f0] sm:$0xff]
        %v456 = vld [vmem:[%s229 + $0x5f8] sm:$0xff]
        %v457 = vld [vmem:[%s229 + $0x600] sm:$0xff]
        %v458 = vld [vmem:[%s229 + $0x608] sm:$0xff]
        %v459 = vld [vmem:[%s229 + $0x610] sm:$0xff]
        %v460 = vld [vmem:[%s229 + $0x618] sm:$0xff]
        %v461 = vld [vmem:[%s229 + $0x620] sm:$0xff]
        %v462 = vld [vmem:[%s229 + $0x628] sm:$0xff]
        %v463 = vld [vmem:[%s229 + $0x630] sm:$0xff]
        %v464 = vld [vmem:[%s229 + $0x638] sm:$0xff]
        %v465 = vld [vmem:[%s229 + $0x640] sm:$0xff]
        %v466 = vld [vmem:[%s229 + $0x648] sm:$0xff]
        %v467 = vld [vmem:[%s229 + $0x650] sm:$0xff]
        %v468 = vld [vmem:[%s229 + $0x658] sm:$0xff]
        %v469 = vld [vmem:[%s229 + $0x660] sm:$0xff]
        %v470 = vld [vmem:[%s229 + $0x668] sm:$0xff]
        %v471 = vld [vmem:[%s229 + $0x670] sm:$0xff]
        %v472 = vld [vmem:[%s229 + $0x678] sm:$0xff]
        %v473 = vld [vmem:[%s229 + $0x680] sm:$0xff]
        %v474 = vld [vmem:[%s229 + $0x688] sm:$0xff]
        %v475 = vld [vmem:[%s229 + $0x690] sm:$0xff]
        %v476 = vld [vmem:[%s229 + $0x698] sm:$0xff]
        %v477 = vld [vmem:[%s229 + $0x6a0] sm:$0xff]
        %v478 = vld [vmem:[%s229 + $0x6a8] sm:$0xff]
        %v479 = vld [vmem:[%s229 + $0x6b0] sm:$0xff]
        %v480 = vld [vmem:[%s229 + $0x6b8] sm:$0xff]
        %v481 = vld [vmem:[%s229 + $0x6c0] sm:$0xff]
        %v482 = vld [vmem:[%s229 + $0x6c8] sm:$0xff]
        %v483 = vld [vmem:[%s229 + $0x6d0] sm:$0xff]
        %v484 = vld [vmem:[%s229 + $0x6d8] sm:$0xff]
        %v485 = vld [vmem:[%s229 + $0x6e0] sm:$0xff]
        %v486 = vld [vmem:[%s229 + $0x6e8] sm:$0xff]
        %v487 = vld [vmem:[%s229 + $0x6f0] sm:$0xff]
        %v488 = vld [vmem:[%s229 + $0x6f8] sm:$0xff]
        %v489 = vld [vmem:[%s229 + $0x700] sm:$0xff]
        %v490 = vld [vmem:[%s229 + $0x708] sm:$0xff]
        %v491 = vld [vmem:[%s229 + $0x710] sm:$0xff]
        %v492 = vld [vmem:[%s229 + $0x718] sm:$0xff]
        %v493 = vld [vmem:[%s229 + $0x720] sm:$0xff]
        %v494 = vld [vmem:[%s229 + $0x728] sm:$0xff]
        %v495 = vld [vmem:[%s229 + $0x730] sm:$0xff]
        %v496 = vld [vmem:[%s229 + $0x738] sm:$0xff]
        %v497 = vld [vmem:[%s229 + $0x740] sm:$0xff]
        %v498 = vld [vmem:[%s229 + $0x748] sm:$0xff]
        %v499 = vld [vmem:[%s229 + $0x750] sm:$0xff]
        %v500 = vld [vmem:[%s229 + $0x758] sm:$0xff]
        %v501 = vld [vmem:[%s229 + $0x760] sm:$0xff]
        %v502 = vld [vmem:[%s229 + $0x768] sm:$0xff]
        %v503 = vld [vmem:[%s229 + $0x770] sm:$0xff]
        %v504 = vld [vmem:[%s229 + $0x778] sm:$0xff]
        %v505 = vld [vmem:[%s229 + $0x780] sm:$0xff]
        %v506 = vld [vmem:[%s229 + $0x788] sm:$0xff]
        %v507 = vld [vmem:[%s229 + $0x790] sm:$0xff]
        %v508 = vld [vmem:[%s229 + $0x798] sm:$0xff]
        %v509 = vld [vmem:[%s229 + $0x7a0] sm:$0xff]
        %v510 = vld [vmem:[%s229 + $0x7a8] sm:$0xff]
        %v511 = vld [vmem:[%s229 + $0x7b0] sm:$0xff]
        %v512 = vld [vmem:[%s229 + $0x7b8] sm:$0xff]
        %v513 = vld [vmem:[%s229 + $0x7c0] sm:$0xff]
        %v514 = vld [vmem:[%s229 + $0x7c8] sm:$0xff]
        %v515 = vld [vmem:[%s229 + $0x7d0] sm:$0xff]
        %v516 = vld [vmem:[%s229 + $0x7d8] sm:$0xff]
        %v517 = vld [vmem:[%s229 + $0x7e0] sm:$0xff]
        %v518 = vld [vmem:[%s229 + $0x7e8] sm:$0xff]
        %v519 = vld [vmem:[%s229 + $0x7f0] sm:$0xff]
        %v520 = vld [vmem:[%s229 + $0x7f8] sm:$0xff]
        %v521 = vld [vmem:[%s229 + $0x800] sm:$0xff]
        %v522 = vld [vmem:[%s229 + $0x808] sm:$0xff]
        %v523 = vld [vmem:[%s229 + $0x810] sm:$0xff]
        %v524 = vld [vmem:[%s229 + $0x818] sm:$0xff]
        %v525 = vld [vmem:[%s229 + $0x820] sm:$0xff]
        %v526 = vld [vmem:[%s229 + $0x828] sm:$0xff]
        %v527 = vld [vmem:[%s229 + $0x830] sm:$0xff]
        %v528 = vld [vmem:[%s229 + $0x838] sm:$0xff]
        %v529 = vld [vmem:[%s229 + $0x840] sm:$0xff]
        %v530 = vld [vmem:[%s229 + $0x848] sm:$0xff]
        %v531 = vld [vmem:[%s229 + $0x850] sm:$0xff]
        %v532 = vld [vmem:[%s229 + $0x858] sm:$0xff]
        %v533 = vld [vmem:[%s229 + $0x860] sm:$0xff]
        %v534 = vld [vmem:[%s229 + $0x868] sm:$0xff]
        %v535 = vld [vmem:[%s229 + $0x870] sm:$0xff]
        %v536 = vld [vmem:[%s229 + $0x878] sm:$0xff]
        %v537 = vld [vmem:[%s229 + $0x880] sm:$0xff]
        %v538 = vld [vmem:[%s229 + $0x888] sm:$0xff]
        %v539 = vld [vmem:[%s229 + $0x890] sm:$0xff]
        %v540 = vld [vmem:[%s229 + $0x898] sm:$0xff]
        %v541 = vld [vmem:[%s229 + $0x8a0] sm:$0xff]
        %v542 = vld [vmem:[%s229 + $0x8a8] sm:$0xff]
        %v543 = vld [vmem:[%s229 + $0x8b0] sm:$0xff]
        %v544 = vld [vmem:[%s229 + $0x8b8] sm:$0xff]
        %v545 = vld [vmem:[%s229 + $0x8c0] sm:$0xff]
        %v546 = vld [vmem:[%s229 + $0x8c8] sm:$0xff]
        %v547 = vld [vmem:[%s229 + $0x8d0] sm:$0xff]
        %v548 = vld [vmem:[%s229 + $0x8d8] sm:$0xff]
        %v549 = vld [vmem:[%s229 + $0x8e0] sm:$0xff]
        %v550 = vld [vmem:[%s229 + $0x8e8] sm:$0xff]
        %v551 = vld [vmem:[%s229 + $0x8f0] sm:$0xff]
        %v552 = vld [vmem:[%s229 + $0x8f8] sm:$0xff]
        %v553 = vld [vmem:[#allocation5] sm:$0xf]
        %v554 = vld [vmem:[#allocation5 + $0x4] sm:$0xf]
        %v555 = vld [vmem:[#allocation5 + $0x8] sm:$0xf]
        %v556 = vld [vmem:[#allocation5 + $0xc] sm:$0xf]
        %v557 = vld [vmem:[#allocation5 + $0x10] sm:$0xf]
        %v558 = vld [vmem:[#allocation5 + $0x14] sm:$0xf]
        %v559 = vld [vmem:[#allocation5 + $0x18] sm:$0xf]
        %v560 = vld [vmem:[#allocation5 + $0x1c] sm:$0xf]
        %v561 = vld [vmem:[#allocation5 + $0x20] sm:$0xf]
        %v562 = vld [vmem:[#allocation5 + $0x24] sm:$0xf]
        %v563 = vld [vmem:[#allocation5 + $0x28] sm:$0xf]
        %v564 = vld [vmem:[#allocation5 + $0x2c] sm:$0xf]
        %v565 = vld [vmem:[#allocation5 + $0x30] sm:$0xf]
        %v566 = vld [vmem:[#allocation5 + $0x34] sm:$0xf]
        %v567 = vld [vmem:[#allocation5 + $0x38] sm:$0xf]
        %v568 = vld [vmem:[#allocation5 + $0x3c] sm:$0xf]
        %v569 = vld [vmem:[#allocation5 + $0x40] sm:$0xf]
        %v570 = vld [vmem:[#allocation5 + $0x44] sm:$0xf]
        %v571 = vld [vmem:[#allocation5 + $0x48] sm:$0xf]
        %v572 = vld [vmem:[#allocation5 + $0x4c] sm:$0xf]
        %v573 = vld [vmem:[#allocation5 + $0x50] sm:$0xf]
        %v574 = vld [vmem:[#allocation5 + $0x54] sm:$0xf]
        %v575 = vld [vmem:[#allocation5 + $0x58] sm:$0xf]
        %v576 = vld [vmem:[#allocation5 + $0x5c] sm:$0xf]
        %v577 = vld [vmem:[#allocation5 + $0x60] sm:$0xf]
        %v578 = vld [vmem:[#allocation5 + $0x64] sm:$0xf]
        %v579 = vld [vmem:[#allocation5 + $0x68] sm:$0xf]
        %v580 = vld [vmem:[#allocation5 + $0x6c] sm:$0xf]
        %v581 = vld [vmem:[#allocation5 + $0x70] sm:$0xf]
        %v582 = vld [vmem:[#allocation5 + $0x74] sm:$0xf]
        %v583 = vld [vmem:[#allocation5 + $0x78] sm:$0xf]
        %v584 = vld [vmem:[#allocation5 + $0x7c] sm:$0xf]
        %v585 = vld [vmem:[#allocation5 + $0x80] sm:$0xf]
        %v586 = vld [vmem:[#allocation5 + $0x84] sm:$0xf]
        %v587 = vld [vmem:[#allocation5 + $0x88] sm:$0xf]
        %v588 = vld [vmem:[#allocation5 + $0x8c] sm:$0xf]
        %v589 = vld [vmem:[#allocation5 + $0x90] sm:$0xf]
        %v590 = vld [vmem:[#allocation5 + $0x94] sm:$0xf]
        %v591 = vld [vmem:[#allocation5 + $0x98] sm:$0xf]
        %v592 = vld [vmem:[#allocation5 + $0x9c] sm:$0xf]
        %v593 = vld [vmem:[#allocation5 + $0xa0] sm:$0xf]
        %v594 = vld [vmem:[#allocation5 + $0xa4] sm:$0xf]
        %v595 = vld [vmem:[#allocation5 + $0xa8] sm:$0xf]
        %v596 = vld [vmem:[#allocation5 + $0xac] sm:$0xf]
        %v597 = vld [vmem:[#allocation5 + $0xb0] sm:$0xf]
        %v598 = vld [vmem:[#allocation5 + $0xb4] sm:$0xf]
        %v599 = vld [vmem:[#allocation5 + $0xb8] sm:$0xf]
        %v600 = vld [vmem:[#allocation5 + $0xbc] sm:$0xf]
        %v601 = vld [vmem:[#allocation5 + $0xc0] sm:$0xf]
        %v602 = vld [vmem:[#allocation5 + $0xc4] sm:$0xf]
        %v603 = vld [vmem:[#allocation5 + $0xc8] sm:$0xf]
        %v604 = vld [vmem:[#allocation5 + $0xcc] sm:$0xf]
        %v605 = vld [vmem:[#allocation5 + $0xd0] sm:$0xf]
        %v606 = vld [vmem:[#allocation5 + $0xd4] sm:$0xf]
        %v607 = vld [vmem:[#allocation5 + $0xd8] sm:$0xf]
        %v608 = vld [vmem:[#allocation5 + $0xdc] sm:$0xf]
        %v609 = vld [vmem:[#allocation5 + $0xe0] sm:$0xf]
        %v610 = vld [vmem:[#allocation5 + $0xe4] sm:$0xf]
        %v611 = vld [vmem:[#allocation5 + $0xe8] sm:$0xf]
        %v612 = vld [vmem:[#allocation5 + $0xec] sm:$0xf]
        %v613 = vld [vmem:[#allocation5 + $0xf0] sm:$0xf]
        %v614 = vld [vmem:[#allocation5 + $0xf4] sm:$0xf]
        %v615 = vld [vmem:[#allocation5 + $0xf8] sm:$0xf]
        %v616 = vld [vmem:[#allocation5 + $0xfc] sm:$0xf]
        %v617 = vld [vmem:[#allocation5 + $0x100] sm:$0xf]
        %v618 = vld [vmem:[#allocation5 + $0x104] sm:$0xf]
        %v619 = vld [vmem:[#allocation5 + $0x108] sm:$0xf]
        %v620 = vld [vmem:[#allocation5 + $0x10c] sm:$0xf]
        %v621 = vld [vmem:[#allocation5 + $0x110] sm:$0xf]
        %v622 = vld [vmem:[#allocation5 + $0x114] sm:$0xf]
        %v623 = vld [vmem:[#allocation5 + $0x118] sm:$0xf]
        %v624 = vld [vmem:[#allocation5 + $0x11c] sm:$0xf]
        %v625 = vld [vmem:[#allocation5 + $0x120] sm:$0xf]
        %v626 = vld [vmem:[#allocation5 + $0x124] sm:$0xf]
        %v627 = vld [vmem:[#allocation5 + $0x128] sm:$0xf]
        %v628 = vld [vmem:[#allocation5 + $0x12c] sm:$0xf]
        %v629 = vld [vmem:[#allocation5 + $0x130] sm:$0xf]
        %v630 = vld [vmem:[#allocation5 + $0x134] sm:$0xf]
        %v631 = vld [vmem:[#allocation5 + $0x138] sm:$0xf]
        %v632 = vld [vmem:[#allocation5 + $0x13c] sm:$0xf]
        %v633 = vld [vmem:[#allocation5 + $0x140] sm:$0xf]
        %v634 = vld [vmem:[#allocation5 + $0x144] sm:$0xf]
        %v635 = vld [vmem:[#allocation5 + $0x148] sm:$0xf]
        %v636 = vld [vmem:[#allocation5 + $0x14c] sm:$0xf]
        %v637 = vld [vmem:[#allocation5 + $0x150] sm:$0xf]
        %v638 = vld [vmem:[#allocation5 + $0x154] sm:$0xf]
        %v639 = vld [vmem:[#allocation5 + $0x158] sm:$0xf]
        %v640 = vld [vmem:[#allocation5 + $0x15c] sm:$0xf]
        %v641 = vld [vmem:[#allocation5 + $0x160] sm:$0xf]
        %v642 = vld [vmem:[#allocation5 + $0x164] sm:$0xf]
        %v643 = vld [vmem:[#allocation5 + $0x168] sm:$0xf]
        %v644 = vld [vmem:[#allocation5 + $0x16c] sm:$0xf]
        %v645 = vld [vmem:[#allocation5 + $0x170] sm:$0xf]
        %v646 = vld [vmem:[#allocation5 + $0x174] sm:$0xf]
        %v647 = vld [vmem:[#allocation5 + $0x178] sm:$0xf]
        %v648 = vld [vmem:[#allocation5 + $0x17c] sm:$0xf]
        %v649 = vld [vmem:[#allocation5 + $0x180] sm:$0xf]
        %v650 = vld [vmem:[#allocation5 + $0x184] sm:$0xf]
        %v651 = vld [vmem:[#allocation5 + $0x188] sm:$0xf]
        %v652 = vld [vmem:[#allocation5 + $0x18c] sm:$0xf]
        %v653 = vld [vmem:[#allocation5 + $0x190] sm:$0xf]
        %v654 = vld [vmem:[#allocation5 + $0x194] sm:$0xf]
        %v655 = vld [vmem:[#allocation5 + $0x198] sm:$0xf]
        %v656 = vld [vmem:[#allocation5 + $0x19c] sm:$0xf]
        %v657 = vld [vmem:[#allocation5 + $0x1a0] sm:$0xf]
        %v658 = vld [vmem:[#allocation5 + $0x1a4] sm:$0xf]
        %v659 = vld [vmem:[#allocation5 + $0x1a8] sm:$0xf]
        %v660 = vld [vmem:[#allocation5 + $0x1ac] sm:$0xf]
        %v661 = vld [vmem:[#allocation5 + $0x1b0] sm:$0xf]
        %v662 = vld [vmem:[#allocation5 + $0x1b4] sm:$0xf]
        %v663 = vld [vmem:[#allocation5 + $0x1b8] sm:$0xf]
        %v664 = vld [vmem:[#allocation5 + $0x1bc] sm:$0xf]
        %v665 = vld [vmem:[#allocation5 + $0x1c0] sm:$0xf]
        %v666 = vld [vmem:[#allocation5 + $0x1c4] sm:$0xf]
        %v667 = vld [vmem:[#allocation5 + $0x1c8] sm:$0xf]
        %v668 = vld [vmem:[#allocation5 + $0x1cc] sm:$0xf]
        %v669 = vld [vmem:[#allocation5 + $0x1d0] sm:$0xf]
        %v670 = vld [vmem:[#allocation5 + $0x1d4] sm:$0xf]
        %v671 = vld [vmem:[#allocation5 + $0x1d8] sm:$0xf]
        %v672 = vld [vmem:[#allocation5 + $0x1dc] sm:$0xf]
        %v673 = vld [vmem:[#allocation5 + $0x1e0] sm:$0xf]
        %v674 = vld [vmem:[#allocation5 + $0x1e4] sm:$0xf]
        %v675 = vld [vmem:[#allocation5 + $0x1e8] sm:$0xf]
        %v676 = vld [vmem:[#allocation5 + $0x1ec] sm:$0xf]
        %v677 = vld [vmem:[#allocation5 + $0x1f0] sm:$0xf]
        %v678 = vld [vmem:[#allocation5 + $0x1f4] sm:$0xf]
        %v679 = vld [vmem:[#allocation5 + $0x1f8] sm:$0xf]
        %v680 = vld [vmem:[#allocation5 + $0x1fc] sm:$0xf]
        %v681 = vld [vmem:[#allocation5 + $0x200] sm:$0xf]
        %v682 = vld [vmem:[#allocation5 + $0x204] sm:$0xf]
        %v683 = vld [vmem:[#allocation5 + $0x208] sm:$0xf]
        %v684 = vld [vmem:[#allocation5 + $0x20c] sm:$0xf]
        %v685 = vld [vmem:[#allocation5 + $0x210] sm:$0xf]
        %v686 = vld [vmem:[#allocation5 + $0x214] sm:$0xf]
        %v687 = vld [vmem:[#allocation5 + $0x218] sm:$0xf]
        %v688 = vld [vmem:[#allocation5 + $0x21c] sm:$0xf]
        %v689 = vld [vmem:[#allocation5 + $0x220] sm:$0xf]
        %v690 = vld [vmem:[#allocation5 + $0x224] sm:$0xf]
        %v691 = vld [vmem:[#allocation5 + $0x228] sm:$0xf]
        %v692 = vld [vmem:[#allocation5 + $0x22c] sm:$0xf]
        %v693 = vld [vmem:[#allocation5 + $0x230] sm:$0xf]
        %v694 = vld [vmem:[#allocation5 + $0x234] sm:$0xf]
        %v695 = vld [vmem:[#allocation5 + $0x238] sm:$0xf]
        %v696 = vld [vmem:[#allocation5 + $0x23c] sm:$0xf]
        %v697 = vld [vmem:[#allocation5 + $0x240] sm:$0xf]
        %v698 = vld [vmem:[#allocation5 + $0x244] sm:$0xf]
        %v699 = vld [vmem:[#allocation5 + $0x248] sm:$0xf]
        %v700 = vld [vmem:[#allocation5 + $0x24c] sm:$0xf]
        %v701 = vld [vmem:[#allocation5 + $0x250] sm:$0xf]
        %v702 = vld [vmem:[#allocation5 + $0x254] sm:$0xf]
        %v703 = vld [vmem:[#allocation5 + $0x258] sm:$0xf]
        %v704 = vld [vmem:[#allocation5 + $0x25c] sm:$0xf]
        %v705 = vld [vmem:[#allocation5 + $0x260] sm:$0xf]
        %v706 = vld [vmem:[#allocation5 + $0x264] sm:$0xf]
        %v707 = vld [vmem:[#allocation5 + $0x268] sm:$0xf]
        %v708 = vld [vmem:[#allocation5 + $0x26c] sm:$0xf]
        %v709 = vld [vmem:[#allocation5 + $0x270] sm:$0xf]
        %v710 = vld [vmem:[#allocation5 + $0x274] sm:$0xf]
        %v711 = vld [vmem:[#allocation5 + $0x278] sm:$0xf]
        %v712 = vld [vmem:[#allocation5 + $0x27c] sm:$0xf]
        %v713 = vld [vmem:[#allocation5 + $0x280] sm:$0xf]
        %v714 = vld [vmem:[#allocation5 + $0x284] sm:$0xf]
        %v715 = vld [vmem:[#allocation5 + $0x288] sm:$0xf]
        %v716 = vld [vmem:[#allocation5 + $0x28c] sm:$0xf]
        %v717 = vld [vmem:[#allocation5 + $0x290] sm:$0xf]
        %v718 = vld [vmem:[#allocation5 + $0x294] sm:$0xf]
        %v719 = vld [vmem:[#allocation5 + $0x298] sm:$0xf]
        %v720 = vld [vmem:[#allocation5 + $0x29c] sm:$0xf]
        %v721 = vld [vmem:[#allocation5 + $0x2a0] sm:$0xf]
        %v722 = vld [vmem:[#allocation5 + $0x2a4] sm:$0xf]
        %v723 = vld [vmem:[#allocation5 + $0x2a8] sm:$0xf]
        %v724 = vld [vmem:[#allocation5 + $0x2ac] sm:$0xf]
        %v725 = vld [vmem:[#allocation5 + $0x2b0] sm:$0xf]
        %v726 = vld [vmem:[#allocation5 + $0x2b4] sm:$0xf]
        %v727 = vld [vmem:[#allocation5 + $0x2b8] sm:$0xf]
        %v728 = vld [vmem:[#allocation5 + $0x2bc] sm:$0xf]
        %v729 = vld [vmem:[#allocation5 + $0x2c0] sm:$0xf]
        %v730 = vld [vmem:[#allocation5 + $0x2c4] sm:$0xf]
        %v731 = vld [vmem:[#allocation5 + $0x2c8] sm:$0xf]
        %v732 = vld [vmem:[#allocation5 + $0x2cc] sm:$0xf]
        %v733 = vld [vmem:[#allocation5 + $0x2d0] sm:$0xf]
        %v734 = vld [vmem:[#allocation5 + $0x2d4] sm:$0xf]
        %v735 = vld [vmem:[#allocation5 + $0x2d8] sm:$0xf]
        %v736 = vld [vmem:[#allocation5 + $0x2dc] sm:$0xf]
        %v737 = vld [vmem:[#allocation5 + $0x2e0] sm:$0xf]
        %v738 = vld [vmem:[#allocation5 + $0x2e4] sm:$0xf]
        %v739 = vld [vmem:[#allocation5 + $0x2e8] sm:$0xf]
        %v740 = vld [vmem:[#allocation5 + $0x2ec] sm:$0xf]
        %v741 = vld [vmem:[#allocation5 + $0x2f0] sm:$0xf]
        %v742 = vld [vmem:[#allocation5 + $0x2f4] sm:$0xf]
        %v743 = vld [vmem:[#allocation5 + $0x2f8] sm:$0xf]
        %v744 = vld [vmem:[#allocation5 + $0x2fc] sm:$0xf]
        %v745 = vld [vmem:[#allocation5 + $0x300] sm:$0xf]
        %v746 = vld [vmem:[#allocation5 + $0x304] sm:$0xf]
        %v747 = vld [vmem:[#allocation5 + $0x308] sm:$0xf]
        %v748 = vld [vmem:[#allocation5 + $0x30c] sm:$0xf]
        %v749 = vld [vmem:[#allocation5 + $0x310] sm:$0xf]
        %v750 = vld [vmem:[#allocation5 + $0x314] sm:$0xf]
        %v751 = vld [vmem:[#allocation5 + $0x318] sm:$0xf]
        %v752 = vld [vmem:[#allocation5 + $0x31c] sm:$0xf]
        %v753 = vld [vmem:[#allocation5 + $0x320] sm:$0xf]
        %v754 = vld [vmem:[#allocation5 + $0x324] sm:$0xf]
        %v755 = vld [vmem:[#allocation5 + $0x328] sm:$0xf]
        %v756 = vld [vmem:[#allocation5 + $0x32c] sm:$0xf]
        %v757 = vld [vmem:[#allocation5 + $0x330] sm:$0xf]
        %v758 = vld [vmem:[#allocation5 + $0x334] sm:$0xf]
        %v759 = vld [vmem:[#allocation5 + $0x338] sm:$0xf]
        %v760 = vld [vmem:[#allocation5 + $0x33c] sm:$0xf]
        %v761 = vld [vmem:[#allocation5 + $0x340] sm:$0xf]
        %v762 = vld [vmem:[#allocation5 + $0x344] sm:$0xf]
        %v763 = vld [vmem:[#allocation5 + $0x348] sm:$0xf]
        %v764 = vld [vmem:[#allocation5 + $0x34c] sm:$0xf]
        %v765 = vld [vmem:[#allocation5 + $0x350] sm:$0xf]
        %v766 = vld [vmem:[#allocation5 + $0x354] sm:$0xf]
        %v767 = vld [vmem:[#allocation5 + $0x358] sm:$0xf]
        %v768 = vld [vmem:[#allocation5 + $0x35c] sm:$0xf]
        %v769 = vld [vmem:[#allocation5 + $0x360] sm:$0xf]
        %v770 = vld [vmem:[#allocation5 + $0x364] sm:$0xf]
        %v771 = vld [vmem:[#allocation5 + $0x368] sm:$0xf]
        %v772 = vld [vmem:[#allocation5 + $0x36c] sm:$0xf]
        %v773 = vld [vmem:[#allocation5 + $0x370] sm:$0xf]
        %v774 = vld [vmem:[#allocation5 + $0x374] sm:$0xf]
        %v775 = vld [vmem:[#allocation5 + $0x378] sm:$0xf]
        %v776 = vld [vmem:[#allocation5 + $0x37c] sm:$0xf]
        %v777 = vld [vmem:[#allocation5 + $0x380] sm:$0xf]
        %v778 = vld [vmem:[#allocation5 + $0x384] sm:$0xf]
        %v779 = vld [vmem:[#allocation5 + $0x388] sm:$0xf]
        %v780 = vld [vmem:[#allocation5 + $0x38c] sm:$0xf]
        %v781 = vld [vmem:[#allocation5 + $0x390] sm:$0xf]
        %v782 = vld [vmem:[#allocation5 + $0x394] sm:$0xf]
        %v783 = vld [vmem:[#allocation5 + $0x398] sm:$0xf]
        %v784 = vld [vmem:[#allocation5 + $0x39c] sm:$0xf]
        %v785 = vld [vmem:[#allocation5 + $0x3a0] sm:$0xf]
        %v786 = vld [vmem:[#allocation5 + $0x3a4] sm:$0xf]
        %v787 = vld [vmem:[#allocation5 + $0x3a8] sm:$0xf]
        %v788 = vld [vmem:[#allocation5 + $0x3ac] sm:$0xf]
        %v789 = vld [vmem:[#allocation5 + $0x3b0] sm:$0xf]
        %v790 = vld [vmem:[#allocation5 + $0x3b4] sm:$0xf]
        %v791 = vld [vmem:[#allocation5 + $0x3b8] sm:$0xf]
        %v792 = vld [vmem:[#allocation5 + $0x3bc] sm:$0xf]
        %v793 = vld [vmem:[#allocation5 + $0x3c0] sm:$0xf]
        %v794 = vld [vmem:[#allocation5 + $0x3c4] sm:$0xf]
        %v795 = vld [vmem:[#allocation5 + $0x3c8] sm:$0xf]
        %v796 = vld [vmem:[#allocation5 + $0x3cc] sm:$0xf]
        %v797 = vld [vmem:[#allocation5 + $0x3d0] sm:$0xf]
        %v798 = vld [vmem:[#allocation5 + $0x3d4] sm:$0xf]
        %v799 = vld [vmem:[#allocation5 + $0x3d8] sm:$0xf]
        %v800 = vld [vmem:[#allocation5 + $0x3dc] sm:$0xf]
        %v801 = vld [vmem:[#allocation5 + $0x3e0] sm:$0xf]
        %v802 = vld [vmem:[#allocation5 + $0x3e4] sm:$0xf]
        %v803 = vld [vmem:[#allocation5 + $0x3e8] sm:$0xf]
        %v804 = vld [vmem:[#allocation5 + $0x3ec] sm:$0xf]
        %v805 = vld [vmem:[#allocation5 + $0x3f0] sm:$0xf]
        %v806 = vld [vmem:[#allocation5 + $0x3f4] sm:$0xf]
        %v807 = vld [vmem:[#allocation5 + $0x3f8] sm:$0xf]
        %v808 = vld [vmem:[#allocation5 + $0x3fc] sm:$0xf]
        %v809 = vld [vmem:[#allocation5 + $0x400] sm:$0xf]
        %v810 = vld [vmem:[#allocation5 + $0x404] sm:$0xf]
        %v811 = vld [vmem:[#allocation5 + $0x408] sm:$0xf]
        %v812 = vld [vmem:[#allocation5 + $0x40c] sm:$0xf]
        %v813 = vld [vmem:[#allocation5 + $0x410] sm:$0xf]
        %v814 = vld [vmem:[#allocation5 + $0x414] sm:$0xf]
        %v815 = vld [vmem:[#allocation5 + $0x418] sm:$0xf]
        %v816 = vld [vmem:[#allocation5 + $0x41c] sm:$0xf]
        %v817 = vld [vmem:[#allocation5 + $0x420] sm:$0xf]
        %v818 = vld [vmem:[#allocation5 + $0x424] sm:$0xf]
        %v819 = vld [vmem:[#allocation5 + $0x428] sm:$0xf]
        %v820 = vld [vmem:[#allocation5 + $0x42c] sm:$0xf]
        %v821 = vld [vmem:[#allocation5 + $0x430] sm:$0xf]
        %v822 = vld [vmem:[#allocation5 + $0x434] sm:$0xf]
        %v823 = vld [vmem:[#allocation5 + $0x438] sm:$0xf]
        %v824 = vld [vmem:[#allocation5 + $0x43c] sm:$0xf]
        %v825 = vld [vmem:[#allocation5 + $0x440] sm:$0xf]
        %v826 = vld [vmem:[#allocation5 + $0x444] sm:$0xf]
        %v827 = vld [vmem:[#allocation5 + $0x448] sm:$0xf]
        %v828 = vld [vmem:[#allocation5 + $0x44c] sm:$0xf]
        %v829 = vld [vmem:[#allocation5 + $0x450] sm:$0xf]
        %v830 = vld [vmem:[#allocation5 + $0x454] sm:$0xf]
        %v831 = vld [vmem:[#allocation5 + $0x458] sm:$0xf]
        %v832 = vld [vmem:[#allocation5 + $0x45c] sm:$0xf]
        %v833 = vld [vmem:[#allocation5 + $0x460] sm:$0xf]
        %v834 = vld [vmem:[#allocation5 + $0x464] sm:$0xf]
        %v835 = vld [vmem:[#allocation5 + $0x468] sm:$0xf]
        %v836 = vld [vmem:[#allocation5 + $0x46c] sm:$0xf]
        %v837 = vld [vmem:[#allocation5 + $0x470] sm:$0xf]
        %v838 = vld [vmem:[#allocation5 + $0x474] sm:$0xf]
        %v839 = vld [vmem:[#allocation5 + $0x478] sm:$0xf]
        %v840 = vld [vmem:[#allocation5 + $0x47c] sm:$0xf]
        %v841 = vld [vmem:[#allocation7] sm:$0x1]
        %v843 = vlaneseq
        %v844 = vshrl.u32 %v843, 7
        %v845 = vsub.s32 0, %v844
        %v846 = vrot.slane %v841, %v845
        %v1136 = vunpack.c.l.b16 %v265
        %v1137 = vunpack.c.h.b16 %v265
        %v1138 = vunpack.c.l.b16 %v266
        %v1139 = vunpack.c.h.b16 %v266
        %v1140 = vunpack.c.l.b16 %v267
        %v1141 = vunpack.c.h.b16 %v267
        %v1142 = vunpack.c.l.b16 %v268
        %v1143 = vunpack.c.h.b16 %v268
        %v1144 = vunpack.c.l.b16 %v269
        %v1145 = vunpack.c.h.b16 %v269
        %v1146 = vunpack.c.l.b16 %v270
        %v1147 = vunpack.c.h.b16 %v270
        %v1148 = vunpack.c.l.b16 %v271
        %v1149 = vunpack.c.h.b16 %v271
        %v1150 = vunpack.c.l.b16 %v272
        %v1151 = vunpack.c.h.b16 %v272
        %v1152 = vunpack.c.l.b16 %v273
        %v1153 = vunpack.c.h.b16 %v273
        %v1154 = vunpack.c.l.b16 %v274
        %v1155 = vunpack.c.h.b16 %v274
        %v1156 = vunpack.c.l.b16 %v275
        %v1157 = vunpack.c.h.b16 %v275
        %v1158 = vunpack.c.l.b16 %v276
        %v1159 = vunpack.c.h.b16 %v276
        %v1160 = vunpack.c.l.b16 %v277
        %v1161 = vunpack.c.h.b16 %v277
        %v1162 = vunpack.c.l.b16 %v278
        %v1163 = vunpack.c.h.b16 %v278
        %v1164 = vunpack.c.l.b16 %v279
        %v1165 = vunpack.c.h.b16 %v279
        %v1166 = vunpack.c.l.b16 %v280
        %v1167 = vunpack.c.h.b16 %v280
        %v1168 = vunpack.c.l.b16 %v281
        %v1169 = vunpack.c.h.b16 %v281
        %v1170 = vunpack.c.l.b16 %v282
        %v1171 = vunpack.c.h.b16 %v282
        %v1172 = vunpack.c.l.b16 %v283
        %v1173 = vunpack.c.h.b16 %v283
        %v1174 = vunpack.c.l.b16 %v284
        %v1175 = vunpack.c.h.b16 %v284
        %v1176 = vunpack.c.l.b16 %v285
        %v1177 = vunpack.c.h.b16 %v285
        %v1178 = vunpack.c.l.b16 %v286
        %v1179 = vunpack.c.h.b16 %v286
        %v1180 = vunpack.c.l.b16 %v287
        %v1181 = vunpack.c.h.b16 %v287
        %v1182 = vunpack.c.l.b16 %v288
        %v1183 = vunpack.c.h.b16 %v288
        %v1184 = vunpack.c.l.b16 %v289
        %v1185 = vunpack.c.h.b16 %v289
        %v1186 = vunpack.c.l.b16 %v290
        %v1187 = vunpack.c.h.b16 %v290
        %v1188 = vunpack.c.l.b16 %v291
        %v1189 = vunpack.c.h.b16 %v291
        %v1190 = vunpack.c.l.b16 %v292
        %v1191 = vunpack.c.h.b16 %v292
        %v1192 = vunpack.c.l.b16 %v293
        %v1193 = vunpack.c.h.b16 %v293
        %v1194 = vunpack.c.l.b16 %v294
        %v1195 = vunpack.c.h.b16 %v294
        %v1196 = vunpack.c.l.b16 %v295
        %v1197 = vunpack.c.h.b16 %v295
        %v1198 = vunpack.c.l.b16 %v296
        %v1199 = vunpack.c.h.b16 %v296
        %v1200 = vunpack.c.l.b16 %v297
        %v1201 = vunpack.c.h.b16 %v297
        %v1202 = vunpack.c.l.b16 %v298
        %v1203 = vunpack.c.h.b16 %v298
        %v1204 = vunpack.c.l.b16 %v299
        %v1205 = vunpack.c.h.b16 %v299
        %v1206 = vunpack.c.l.b16 %v300
        %v1207 = vunpack.c.h.b16 %v300
        %v1208 = vunpack.c.l.b16 %v301
        %v1209 = vunpack.c.h.b16 %v301
        %v1210 = vunpack.c.l.b16 %v302
        %v1211 = vunpack.c.h.b16 %v302
        %v1212 = vunpack.c.l.b16 %v303
        %v1213 = vunpack.c.h.b16 %v303
        %v1214 = vunpack.c.l.b16 %v304
        %v1215 = vunpack.c.h.b16 %v304
        %v1216 = vunpack.c.l.b16 %v305
        %v1217 = vunpack.c.h.b16 %v305
        %v1218 = vunpack.c.l.b16 %v306
        %v1219 = vunpack.c.h.b16 %v306
        %v1220 = vunpack.c.l.b16 %v307
        %v1221 = vunpack.c.h.b16 %v307
        %v1222 = vunpack.c.l.b16 %v308
        %v1223 = vunpack.c.h.b16 %v308
        %v1224 = vunpack.c.l.b16 %v309
        %v1225 = vunpack.c.h.b16 %v309
        %v1226 = vunpack.c.l.b16 %v310
        %v1227 = vunpack.c.h.b16 %v310
        %v1228 = vunpack.c.l.b16 %v311
        %v1229 = vunpack.c.h.b16 %v311
        %v1230 = vunpack.c.l.b16 %v312
        %v1231 = vunpack.c.h.b16 %v312
        %v1232 = vunpack.c.l.b16 %v313
        %v1233 = vunpack.c.h.b16 %v313
        %v1234 = vunpack.c.l.b16 %v314
        %v1235 = vunpack.c.h.b16 %v314
        %v1236 = vunpack.c.l.b16 %v315
        %v1237 = vunpack.c.h.b16 %v315
        %v1238 = vunpack.c.l.b16 %v316
        %v1239 = vunpack.c.h.b16 %v316
        %v1240 = vunpack.c.l.b16 %v317
        %v1241 = vunpack.c.h.b16 %v317
        %v1242 = vunpack.c.l.b16 %v318
        %v1243 = vunpack.c.h.b16 %v318
        %v1244 = vunpack.c.l.b16 %v319
        %v1245 = vunpack.c.h.b16 %v319
        %v1246 = vunpack.c.l.b16 %v320
        %v1247 = vunpack.c.h.b16 %v320
        %v1248 = vunpack.c.l.b16 %v321
        %v1249 = vunpack.c.h.b16 %v321
        %v1250 = vunpack.c.l.b16 %v322
        %v1251 = vunpack.c.h.b16 %v322
        %v1252 = vunpack.c.l.b16 %v323
        %v1253 = vunpack.c.h.b16 %v323
        %v1254 = vunpack.c.l.b16 %v324
        %v1255 = vunpack.c.h.b16 %v324
        %v1256 = vunpack.c.l.b16 %v325
        %v1257 = vunpack.c.h.b16 %v325
        %v1258 = vunpack.c.l.b16 %v326
        %v1259 = vunpack.c.h.b16 %v326
        %v1260 = vunpack.c.l.b16 %v327
        %v1261 = vunpack.c.h.b16 %v327
        %v1262 = vunpack.c.l.b16 %v328
        %v1263 = vunpack.c.h.b16 %v328
        %v1264 = vunpack.c.l.b16 %v329
        %v1265 = vunpack.c.h.b16 %v329
        %v1266 = vunpack.c.l.b16 %v330
        %v1267 = vunpack.c.h.b16 %v330
        %v1268 = vunpack.c.l.b16 %v331
        %v1269 = vunpack.c.h.b16 %v331
        %v1270 = vunpack.c.l.b16 %v332
        %v1271 = vunpack.c.h.b16 %v332
        %v1272 = vunpack.c.l.b16 %v333
        %v1273 = vunpack.c.h.b16 %v333
        %v1274 = vunpack.c.l.b16 %v334
        %v1275 = vunpack.c.h.b16 %v334
        %v1276 = vunpack.c.l.b16 %v335
        %v1277 = vunpack.c.h.b16 %v335
        %v1278 = vunpack.c.l.b16 %v336
        %v1279 = vunpack.c.h.b16 %v336
        %v1280 = vunpack.c.l.b16 %v337
        %v1281 = vunpack.c.h.b16 %v337
        %v1282 = vunpack.c.l.b16 %v338
        %v1283 = vunpack.c.h.b16 %v338
        %v1284 = vunpack.c.l.b16 %v339
        %v1285 = vunpack.c.h.b16 %v339
        %v1286 = vunpack.c.l.b16 %v340
        %v1287 = vunpack.c.h.b16 %v340
        %v1288 = vunpack.c.l.b16 %v341
        %v1289 = vunpack.c.h.b16 %v341
        %v1290 = vunpack.c.l.b16 %v342
        %v1291 = vunpack.c.h.b16 %v342
        %v1292 = vunpack.c.l.b16 %v343
        %v1293 = vunpack.c.h.b16 %v343
        %v1294 = vunpack.c.l.b16 %v344
        %v1295 = vunpack.c.h.b16 %v344
        %v1296 = vunpack.c.l.b16 %v345
        %v1297 = vunpack.c.h.b16 %v345
        %v1298 = vunpack.c.l.b16 %v346
        %v1299 = vunpack.c.h.b16 %v346
        %v1300 = vunpack.c.l.b16 %v347
        %v1301 = vunpack.c.h.b16 %v347
        %v1302 = vunpack.c.l.b16 %v348
        %v1303 = vunpack.c.h.b16 %v348
        %v1304 = vunpack.c.l.b16 %v349
        %v1305 = vunpack.c.h.b16 %v349
        %v1306 = vunpack.c.l.b16 %v350
        %v1307 = vunpack.c.h.b16 %v350
        %v1308 = vunpack.c.l.b16 %v351
        %v1309 = vunpack.c.h.b16 %v351
        %v1310 = vunpack.c.l.b16 %v352
        %v1311 = vunpack.c.h.b16 %v352
        %v1312 = vunpack.c.l.b16 %v353
        %v1313 = vunpack.c.h.b16 %v353
        %v1314 = vunpack.c.l.b16 %v354
        %v1315 = vunpack.c.h.b16 %v354
        %v1316 = vunpack.c.l.b16 %v355
        %v1317 = vunpack.c.h.b16 %v355
        %v1318 = vunpack.c.l.b16 %v356
        %v1319 = vunpack.c.h.b16 %v356
        %v1320 = vunpack.c.l.b16 %v357
        %v1321 = vunpack.c.h.b16 %v357
        %v1322 = vunpack.c.l.b16 %v358
        %v1323 = vunpack.c.h.b16 %v358
        %v1324 = vunpack.c.l.b16 %v359
        %v1325 = vunpack.c.h.b16 %v359
        %v1326 = vunpack.c.l.b16 %v360
        %v1327 = vunpack.c.h.b16 %v360
        %v1328 = vunpack.c.l.b16 %v361
        %v1329 = vunpack.c.h.b16 %v361
        %v1330 = vunpack.c.l.b16 %v362
        %v1331 = vunpack.c.h.b16 %v362
        %v1332 = vunpack.c.l.b16 %v363
        %v1333 = vunpack.c.h.b16 %v363
        %v1334 = vunpack.c.l.b16 %v364
        %v1335 = vunpack.c.h.b16 %v364
        %v1336 = vunpack.c.l.b16 %v365
        %v1337 = vunpack.c.h.b16 %v365
        %v1338 = vunpack.c.l.b16 %v366
        %v1339 = vunpack.c.h.b16 %v366
        %v1340 = vunpack.c.l.b16 %v367
        %v1341 = vunpack.c.h.b16 %v367
        %v1342 = vunpack.c.l.b16 %v368
        %v1343 = vunpack.c.h.b16 %v368
        %v1344 = vunpack.c.l.b16 %v369
        %v1345 = vunpack.c.h.b16 %v369
        %v1346 = vunpack.c.l.b16 %v370
        %v1347 = vunpack.c.h.b16 %v370
        %v1348 = vunpack.c.l.b16 %v371
        %v1349 = vunpack.c.h.b16 %v371
        %v1350 = vunpack.c.l.b16 %v372
        %v1351 = vunpack.c.h.b16 %v372
        %v1352 = vunpack.c.l.b16 %v373
        %v1353 = vunpack.c.h.b16 %v373
        %v1354 = vunpack.c.l.b16 %v374
        %v1355 = vunpack.c.h.b16 %v374
        %v1356 = vunpack.c.l.b16 %v375
        %v1357 = vunpack.c.h.b16 %v375
        %v1358 = vunpack.c.l.b16 %v376
        %v1359 = vunpack.c.h.b16 %v376
        %v1360 = vunpack.c.l.b16 %v377
        %v1361 = vunpack.c.h.b16 %v377
        %v1362 = vunpack.c.l.b16 %v378
        %v1363 = vunpack.c.h.b16 %v378
        %v1364 = vunpack.c.l.b16 %v379
        %v1365 = vunpack.c.h.b16 %v379
        %v1366 = vunpack.c.l.b16 %v380
        %v1367 = vunpack.c.h.b16 %v380
        %v1368 = vunpack.c.l.b16 %v381
        %v1369 = vunpack.c.h.b16 %v381
        %v1370 = vunpack.c.l.b16 %v382
        %v1371 = vunpack.c.h.b16 %v382
        %v1372 = vunpack.c.l.b16 %v383
        %v1373 = vunpack.c.h.b16 %v383
        %v1374 = vunpack.c.l.b16 %v384
        %v1375 = vunpack.c.h.b16 %v384
        %v1376 = vunpack.c.l.b16 %v385
        %v1377 = vunpack.c.h.b16 %v385
        %v1378 = vunpack.c.l.b16 %v386
        %v1379 = vunpack.c.h.b16 %v386
        %v1380 = vunpack.c.l.b16 %v387
        %v1381 = vunpack.c.h.b16 %v387
        %v1382 = vunpack.c.l.b16 %v388
        %v1383 = vunpack.c.h.b16 %v388
        %v1384 = vunpack.c.l.b16 %v389
        %v1385 = vunpack.c.h.b16 %v389
        %v1386 = vunpack.c.l.b16 %v390
        %v1387 = vunpack.c.h.b16 %v390
        %v1388 = vunpack.c.l.b16 %v391
        %v1389 = vunpack.c.h.b16 %v391
        %v1390 = vunpack.c.l.b16 %v392
        %v1391 = vunpack.c.h.b16 %v392
        %v1392 = vunpack.c.l.b16 %v393
        %v1393 = vunpack.c.h.b16 %v393
        %v1394 = vunpack.c.l.b16 %v394
        %v1395 = vunpack.c.h.b16 %v394
        %v1396 = vunpack.c.l.b16 %v395
        %v1397 = vunpack.c.h.b16 %v395
        %v1398 = vunpack.c.l.b16 %v396
        %v1399 = vunpack.c.h.b16 %v396
        %v1400 = vunpack.c.l.b16 %v397
        %v1401 = vunpack.c.h.b16 %v397
        %v1402 = vunpack.c.l.b16 %v398
        %v1403 = vunpack.c.h.b16 %v398
        %v1404 = vunpack.c.l.b16 %v399
        %v1405 = vunpack.c.h.b16 %v399
        %v1406 = vunpack.c.l.b16 %v400
        %v1407 = vunpack.c.h.b16 %v400
        %v1408 = vunpack.c.l.b16 %v401
        %v1409 = vunpack.c.h.b16 %v401
        %v1410 = vunpack.c.l.b16 %v402
        %v1411 = vunpack.c.h.b16 %v402
        %v1412 = vunpack.c.l.b16 %v403
        %v1413 = vunpack.c.h.b16 %v403
        %v1414 = vunpack.c.l.b16 %v404
        %v1415 = vunpack.c.h.b16 %v404
        %v1416 = vunpack.c.l.b16 %v405
        %v1417 = vunpack.c.h.b16 %v405
        %v1418 = vunpack.c.l.b16 %v406
        %v1419 = vunpack.c.h.b16 %v406
        %v1420 = vunpack.c.l.b16 %v407
        %v1421 = vunpack.c.h.b16 %v407
        %v1422 = vunpack.c.l.b16 %v408
        %v1423 = vunpack.c.h.b16 %v408
        %v1424 = vunpack.c.l.b16 %v409
        %v1425 = vunpack.c.h.b16 %v409
        %v1426 = vunpack.c.l.b16 %v410
        %v1427 = vunpack.c.h.b16 %v410
        %v1428 = vunpack.c.l.b16 %v411
        %v1429 = vunpack.c.h.b16 %v411
        %v1430 = vunpack.c.l.b16 %v412
        %v1431 = vunpack.c.h.b16 %v412
        %v1432 = vunpack.c.l.b16 %v413
        %v1433 = vunpack.c.h.b16 %v413
        %v1434 = vunpack.c.l.b16 %v414
        %v1435 = vunpack.c.h.b16 %v414
        %v1436 = vunpack.c.l.b16 %v415
        %v1437 = vunpack.c.h.b16 %v415
        %v1438 = vunpack.c.l.b16 %v416
        %v1439 = vunpack.c.h.b16 %v416
        %v1440 = vunpack.c.l.b16 %v417
        %v1441 = vunpack.c.h.b16 %v417
        %v1442 = vunpack.c.l.b16 %v418
        %v1443 = vunpack.c.h.b16 %v418
        %v1444 = vunpack.c.l.b16 %v419
        %v1445 = vunpack.c.h.b16 %v419
        %v1446 = vunpack.c.l.b16 %v420
        %v1447 = vunpack.c.h.b16 %v420
        %v1448 = vunpack.c.l.b16 %v421
        %v1449 = vunpack.c.h.b16 %v421
        %v1450 = vunpack.c.l.b16 %v422
        %v1451 = vunpack.c.h.b16 %v422
        %v1452 = vunpack.c.l.b16 %v423
        %v1453 = vunpack.c.h.b16 %v423
        %v1454 = vunpack.c.l.b16 %v424
        %v1455 = vunpack.c.h.b16 %v424
        %v1456 = vunpack.c.l.b16 %v425
        %v1457 = vunpack.c.h.b16 %v425
        %v1458 = vunpack.c.l.b16 %v426
        %v1459 = vunpack.c.h.b16 %v426
        %v1460 = vunpack.c.l.b16 %v427
        %v1461 = vunpack.c.h.b16 %v427
        %v1462 = vunpack.c.l.b16 %v428
        %v1463 = vunpack.c.h.b16 %v428
        %v1464 = vunpack.c.l.b16 %v429
        %v1465 = vunpack.c.h.b16 %v429
        %v1466 = vunpack.c.l.b16 %v430
        %v1467 = vunpack.c.h.b16 %v430
        %v1468 = vunpack.c.l.b16 %v431
        %v1469 = vunpack.c.h.b16 %v431
        %v1470 = vunpack.c.l.b16 %v432
        %v1471 = vunpack.c.h.b16 %v432
        %v1472 = vunpack.c.l.b16 %v433
        %v1473 = vunpack.c.h.b16 %v433
        %v1474 = vunpack.c.l.b16 %v434
        %v1475 = vunpack.c.h.b16 %v434
        %v1476 = vunpack.c.l.b16 %v435
        %v1477 = vunpack.c.h.b16 %v435
        %v1478 = vunpack.c.l.b16 %v436
        %v1479 = vunpack.c.h.b16 %v436
        %v1480 = vunpack.c.l.b16 %v437
        %v1481 = vunpack.c.h.b16 %v437
        %v1482 = vunpack.c.l.b16 %v438
        %v1483 = vunpack.c.h.b16 %v438
        %v1484 = vunpack.c.l.b16 %v439
        %v1485 = vunpack.c.h.b16 %v439
        %v1486 = vunpack.c.l.b16 %v440
        %v1487 = vunpack.c.h.b16 %v440
        %v1488 = vunpack.c.l.b16 %v441
        %v1489 = vunpack.c.h.b16 %v441
        %v1490 = vunpack.c.l.b16 %v442
        %v1491 = vunpack.c.h.b16 %v442
        %v1492 = vunpack.c.l.b16 %v443
        %v1493 = vunpack.c.h.b16 %v443
        %v1494 = vunpack.c.l.b16 %v444
        %v1495 = vunpack.c.h.b16 %v444
        %v1496 = vunpack.c.l.b16 %v445
        %v1497 = vunpack.c.h.b16 %v445
        %v1498 = vunpack.c.l.b16 %v446
        %v1499 = vunpack.c.h.b16 %v446
        %v1500 = vunpack.c.l.b16 %v447
        %v1501 = vunpack.c.h.b16 %v447
        %v1502 = vunpack.c.l.b16 %v448
        %v1503 = vunpack.c.h.b16 %v448
        %v1504 = vunpack.c.l.b16 %v449
        %v1505 = vunpack.c.h.b16 %v449
        %v1506 = vunpack.c.l.b16 %v450
        %v1507 = vunpack.c.h.b16 %v450
        %v1508 = vunpack.c.l.b16 %v451
        %v1509 = vunpack.c.h.b16 %v451
        %v1510 = vunpack.c.l.b16 %v452
        %v1511 = vunpack.c.h.b16 %v452
        %v1512 = vunpack.c.l.b16 %v453
        %v1513 = vunpack.c.h.b16 %v453
        %v1514 = vunpack.c.l.b16 %v454
        %v1515 = vunpack.c.h.b16 %v454
        %v1516 = vunpack.c.l.b16 %v455
        %v1517 = vunpack.c.h.b16 %v455
        %v1518 = vunpack.c.l.b16 %v456
        %v1519 = vunpack.c.h.b16 %v456
        %v1520 = vunpack.c.l.b16 %v457
        %v1521 = vunpack.c.h.b16 %v457
        %v1522 = vunpack.c.l.b16 %v458
        %v1523 = vunpack.c.h.b16 %v458
        %v1524 = vunpack.c.l.b16 %v459
        %v1525 = vunpack.c.h.b16 %v459
        %v1526 = vunpack.c.l.b16 %v460
        %v1527 = vunpack.c.h.b16 %v460
        %v1528 = vunpack.c.l.b16 %v461
        %v1529 = vunpack.c.h.b16 %v461
        %v1530 = vunpack.c.l.b16 %v462
        %v1531 = vunpack.c.h.b16 %v462
        %v1532 = vunpack.c.l.b16 %v463
        %v1533 = vunpack.c.h.b16 %v463
        %v1534 = vunpack.c.l.b16 %v464
        %v1535 = vunpack.c.h.b16 %v464
        %v1536 = vunpack.c.l.b16 %v465
        %v1537 = vunpack.c.h.b16 %v465
        %v1538 = vunpack.c.l.b16 %v466
        %v1539 = vunpack.c.h.b16 %v466
        %v1540 = vunpack.c.l.b16 %v467
        %v1541 = vunpack.c.h.b16 %v467
        %v1542 = vunpack.c.l.b16 %v468
        %v1543 = vunpack.c.h.b16 %v468
        %v1544 = vunpack.c.l.b16 %v469
        %v1545 = vunpack.c.h.b16 %v469
        %v1546 = vunpack.c.l.b16 %v470
        %v1547 = vunpack.c.h.b16 %v470
        %v1548 = vunpack.c.l.b16 %v471
        %v1549 = vunpack.c.h.b16 %v471
        %v1550 = vunpack.c.l.b16 %v472
        %v1551 = vunpack.c.h.b16 %v472
        %v1552 = vunpack.c.l.b16 %v473
        %v1553 = vunpack.c.h.b16 %v473
        %v1554 = vunpack.c.l.b16 %v474
        %v1555 = vunpack.c.h.b16 %v474
        %v1556 = vunpack.c.l.b16 %v475
        %v1557 = vunpack.c.h.b16 %v475
        %v1558 = vunpack.c.l.b16 %v476
        %v1559 = vunpack.c.h.b16 %v476
        %v1560 = vunpack.c.l.b16 %v477
        %v1561 = vunpack.c.h.b16 %v477
        %v1562 = vunpack.c.l.b16 %v478
        %v1563 = vunpack.c.h.b16 %v478
        %v1564 = vunpack.c.l.b16 %v479
        %v1565 = vunpack.c.h.b16 %v479
        %v1566 = vunpack.c.l.b16 %v480
        %v1567 = vunpack.c.h.b16 %v480
        %v1568 = vunpack.c.l.b16 %v481
        %v1569 = vunpack.c.h.b16 %v481
        %v1570 = vunpack.c.l.b16 %v482
        %v1571 = vunpack.c.h.b16 %v482
        %v1572 = vunpack.c.l.b16 %v483
        %v1573 = vunpack.c.h.b16 %v483
        %v1574 = vunpack.c.l.b16 %v484
        %v1575 = vunpack.c.h.b16 %v484
        %v1576 = vunpack.c.l.b16 %v485
        %v1577 = vunpack.c.h.b16 %v485
        %v1578 = vunpack.c.l.b16 %v486
        %v1579 = vunpack.c.h.b16 %v486
        %v1580 = vunpack.c.l.b16 %v487
        %v1581 = vunpack.c.h.b16 %v487
        %v1582 = vunpack.c.l.b16 %v488
        %v1583 = vunpack.c.h.b16 %v488
        %v1584 = vunpack.c.l.b16 %v489
        %v1585 = vunpack.c.h.b16 %v489
        %v1586 = vunpack.c.l.b16 %v490
        %v1587 = vunpack.c.h.b16 %v490
        %v1588 = vunpack.c.l.b16 %v491
        %v1589 = vunpack.c.h.b16 %v491
        %v1590 = vunpack.c.l.b16 %v492
        %v1591 = vunpack.c.h.b16 %v492
        %v1592 = vunpack.c.l.b16 %v493
        %v1593 = vunpack.c.h.b16 %v493
        %v1594 = vunpack.c.l.b16 %v494
        %v1595 = vunpack.c.h.b16 %v494
        %v1596 = vunpack.c.l.b16 %v495
        %v1597 = vunpack.c.h.b16 %v495
        %v1598 = vunpack.c.l.b16 %v496
        %v1599 = vunpack.c.h.b16 %v496
        %v1600 = vunpack.c.l.b16 %v497
        %v1601 = vunpack.c.h.b16 %v497
        %v1602 = vunpack.c.l.b16 %v498
        %v1603 = vunpack.c.h.b16 %v498
        %v1604 = vunpack.c.l.b16 %v499
        %v1605 = vunpack.c.h.b16 %v499
        %v1606 = vunpack.c.l.b16 %v500
        %v1607 = vunpack.c.h.b16 %v500
        %v1608 = vunpack.c.l.b16 %v501
        %v1609 = vunpack.c.h.b16 %v501
        %v1610 = vunpack.c.l.b16 %v502
        %v1611 = vunpack.c.h.b16 %v502
        %v1612 = vunpack.c.l.b16 %v503
        %v1613 = vunpack.c.h.b16 %v503
        %v1614 = vunpack.c.l.b16 %v504
        %v1615 = vunpack.c.h.b16 %v504
        %v1616 = vunpack.c.l.b16 %v505
        %v1617 = vunpack.c.h.b16 %v505
        %v1618 = vunpack.c.l.b16 %v506
        %v1619 = vunpack.c.h.b16 %v506
        %v1620 = vunpack.c.l.b16 %v507
        %v1621 = vunpack.c.h.b16 %v507
        %v1622 = vunpack.c.l.b16 %v508
        %v1623 = vunpack.c.h.b16 %v508
        %v1624 = vunpack.c.l.b16 %v509
        %v1625 = vunpack.c.h.b16 %v509
        %v1626 = vunpack.c.l.b16 %v510
        %v1627 = vunpack.c.h.b16 %v510
        %v1628 = vunpack.c.l.b16 %v511
        %v1629 = vunpack.c.h.b16 %v511
        %v1630 = vunpack.c.l.b16 %v512
        %v1631 = vunpack.c.h.b16 %v512
        %v1632 = vunpack.c.l.b16 %v513
        %v1633 = vunpack.c.h.b16 %v513
        %v1634 = vunpack.c.l.b16 %v514
        %v1635 = vunpack.c.h.b16 %v514
        %v1636 = vunpack.c.l.b16 %v515
        %v1637 = vunpack.c.h.b16 %v515
        %v1638 = vunpack.c.l.b16 %v516
        %v1639 = vunpack.c.h.b16 %v516
        %v1640 = vunpack.c.l.b16 %v517
        %v1641 = vunpack.c.h.b16 %v517
        %v1642 = vunpack.c.l.b16 %v518
        %v1643 = vunpack.c.h.b16 %v518
        %v1644 = vunpack.c.l.b16 %v519
        %v1645 = vunpack.c.h.b16 %v519
        %v1646 = vunpack.c.l.b16 %v520
        %v1647 = vunpack.c.h.b16 %v520
        %v1648 = vunpack.c.l.b16 %v521
        %v1649 = vunpack.c.h.b16 %v521
        %v1650 = vunpack.c.l.b16 %v522
        %v1651 = vunpack.c.h.b16 %v522
        %v1652 = vunpack.c.l.b16 %v523
        %v1653 = vunpack.c.h.b16 %v523
        %v1654 = vunpack.c.l.b16 %v524
        %v1655 = vunpack.c.h.b16 %v524
        %v1656 = vunpack.c.l.b16 %v525
        %v1657 = vunpack.c.h.b16 %v525
        %v1658 = vunpack.c.l.b16 %v526
        %v1659 = vunpack.c.h.b16 %v526
        %v1660 = vunpack.c.l.b16 %v527
        %v1661 = vunpack.c.h.b16 %v527
        %v1662 = vunpack.c.l.b16 %v528
        %v1663 = vunpack.c.h.b16 %v528
        %v1664 = vunpack.c.l.b16 %v529
        %v1665 = vunpack.c.h.b16 %v529
        %v1666 = vunpack.c.l.b16 %v530
        %v1667 = vunpack.c.h.b16 %v530
        %v1668 = vunpack.c.l.b16 %v531
        %v1669 = vunpack.c.h.b16 %v531
        %v1670 = vunpack.c.l.b16 %v532
        %v1671 = vunpack.c.h.b16 %v532
        %v1672 = vunpack.c.l.b16 %v533
        %v1673 = vunpack.c.h.b16 %v533
        %v1674 = vunpack.c.l.b16 %v534
        %v1675 = vunpack.c.h.b16 %v534
        %v1676 = vunpack.c.l.b16 %v535
        %v1677 = vunpack.c.h.b16 %v535
        %v1678 = vunpack.c.l.b16 %v536
        %v1679 = vunpack.c.h.b16 %v536
        %v1680 = vunpack.c.l.b16 %v537
        %v1681 = vunpack.c.h.b16 %v537
        %v1682 = vunpack.c.l.b16 %v538
        %v1683 = vunpack.c.h.b16 %v538
        %v1684 = vunpack.c.l.b16 %v539
        %v1685 = vunpack.c.h.b16 %v539
        %v1686 = vunpack.c.l.b16 %v540
        %v1687 = vunpack.c.h.b16 %v540
        %v1688 = vunpack.c.l.b16 %v541
        %v1689 = vunpack.c.h.b16 %v541
        %v1690 = vunpack.c.l.b16 %v542
        %v1691 = vunpack.c.h.b16 %v542
        %v1692 = vunpack.c.l.b16 %v543
        %v1693 = vunpack.c.h.b16 %v543
        %v1694 = vunpack.c.l.b16 %v544
        %v1695 = vunpack.c.h.b16 %v544
        %v1696 = vunpack.c.l.b16 %v545
        %v1697 = vunpack.c.h.b16 %v545
        %v1698 = vunpack.c.l.b16 %v546
        %v1699 = vunpack.c.h.b16 %v546
        %v1700 = vunpack.c.l.b16 %v547
        %v1701 = vunpack.c.h.b16 %v547
        %v1702 = vunpack.c.l.b16 %v548
        %v1703 = vunpack.c.h.b16 %v548
        %v1704 = vunpack.c.l.b16 %v549
        %v1705 = vunpack.c.h.b16 %v549
        %v1706 = vunpack.c.l.b16 %v550
        %v1707 = vunpack.c.h.b16 %v550
        %v1708 = vunpack.c.l.b16 %v551
        %v1709 = vunpack.c.h.b16 %v551
        %v1710 = vunpack.c.l.b16 %v552
        %v1711 = vunpack.c.h.b16 %v552
        %v1712 = vpack.c.b16 %v1154, %v1136
        %v1713 = vpack.c.b16 %v1155, %v1137
        %v1714 = vpack.c.b16 %v1156, %v1138
        %v1715 = vpack.c.b16 %v1157, %v1139
        %v1716 = vpack.c.b16 %v1158, %v1140
        %v1717 = vpack.c.b16 %v1159, %v1141
        %v1718 = vpack.c.b16 %v1160, %v1142
        %v1719 = vpack.c.b16 %v1161, %v1143
        %v1720 = vpack.c.b16 %v1162, %v1144
        %v1721 = vpack.c.b16 %v1163, %v1145
        %v1722 = vpack.c.b16 %v1164, %v1146
        %v1723 = vpack.c.b16 %v1165, %v1147
        %v1724 = vpack.c.b16 %v1166, %v1148
        %v1725 = vpack.c.b16 %v1167, %v1149
        %v1726 = vpack.c.b16 %v1168, %v1150
        %v1727 = vpack.c.b16 %v1169, %v1151
        %v1728 = vpack.c.b16 %v1170, %v1152
        %v1729 = vpack.c.b16 %v1171, %v1153
        %v1730 = vpack.c.b16 %v1190, %v1172
        %v1731 = vpack.c.b16 %v1191, %v1173
        %v1732 = vpack.c.b16 %v1192, %v1174
        %v1733 = vpack.c.b16 %v1193, %v1175
        %v1734 = vpack.c.b16 %v1194, %v1176
        %v1735 = vpack.c.b16 %v1195, %v1177
        %v1736 = vpack.c.b16 %v1196, %v1178
        %v1737 = vpack.c.b16 %v1197, %v1179
        %v1738 = vpack.c.b16 %v1198, %v1180
        %v1739 = vpack.c.b16 %v1199, %v1181
        %v1740 = vpack.c.b16 %v1200, %v1182
        %v1741 = vpack.c.b16 %v1201, %v1183
        %v1742 = vpack.c.b16 %v1202, %v1184
        %v1743 = vpack.c.b16 %v1203, %v1185
        %v1744 = vpack.c.b16 %v1204, %v1186
        %v1745 = vpack.c.b16 %v1205, %v1187
        %v1746 = vpack.c.b16 %v1206, %v1188
        %v1747 = vpack.c.b16 %v1207, %v1189
        %v1748 = vpack.c.b16 %v1226, %v1208
        %v1749 = vpack.c.b16 %v1227, %v1209
        %v1750 = vpack.c.b16 %v1228, %v1210
        %v1751 = vpack.c.b16 %v1229, %v1211
        %v1752 = vpack.c.b16 %v1230, %v1212
        %v1753 = vpack.c.b16 %v1231, %v1213
        %v1754 = vpack.c.b16 %v1232, %v1214
        %v1755 = vpack.c.b16 %v1233, %v1215
        %v1756 = vpack.c.b16 %v1234, %v1216
        %v1757 = vpack.c.b16 %v1235, %v1217
        %v1758 = vpack.c.b16 %v1236, %v1218
        %v1759 = vpack.c.b16 %v1237, %v1219
        %v1760 = vpack.c.b16 %v1238, %v1220
        %v1761 = vpack.c.b16 %v1239, %v1221
        %v1762 = vpack.c.b16 %v1240, %v1222
        %v1763 = vpack.c.b16 %v1241, %v1223
        %v1764 = vpack.c.b16 %v1242, %v1224
        %v1765 = vpack.c.b16 %v1243, %v1225
        %v1766 = vpack.c.b16 %v1262, %v1244
        %v1767 = vpack.c.b16 %v1263, %v1245
        %v1768 = vpack.c.b16 %v1264, %v1246
        %v1769 = vpack.c.b16 %v1265, %v1247
        %v1770 = vpack.c.b16 %v1266, %v1248
        %v1771 = vpack.c.b16 %v1267, %v1249
        %v1772 = vpack.c.b16 %v1268, %v1250
        %v1773 = vpack.c.b16 %v1269, %v1251
        %v1774 = vpack.c.b16 %v1270, %v1252
        %v1775 = vpack.c.b16 %v1271, %v1253
        %v1776 = vpack.c.b16 %v1272, %v1254
        %v1777 = vpack.c.b16 %v1273, %v1255
        %v1778 = vpack.c.b16 %v1274, %v1256
        %v1779 = vpack.c.b16 %v1275, %v1257
        %v1780 = vpack.c.b16 %v1276, %v1258
        %v1781 = vpack.c.b16 %v1277, %v1259
        %v1782 = vpack.c.b16 %v1278, %v1260
        %v1783 = vpack.c.b16 %v1279, %v1261
        %v1784 = vpack.c.b16 %v1298, %v1280
        %v1785 = vpack.c.b16 %v1299, %v1281
        %v1786 = vpack.c.b16 %v1300, %v1282
        %v1787 = vpack.c.b16 %v1301, %v1283
        %v1788 = vpack.c.b16 %v1302, %v1284
        %v1789 = vpack.c.b16 %v1303, %v1285
        %v1790 = vpack.c.b16 %v1304, %v1286
        %v1791 = vpack.c.b16 %v1305, %v1287
        %v1792 = vpack.c.b16 %v1306, %v1288
        %v1793 = vpack.c.b16 %v1307, %v1289
        %v1794 = vpack.c.b16 %v1308, %v1290
        %v1795 = vpack.c.b16 %v1309, %v1291
        %v1796 = vpack.c.b16 %v1310, %v1292
        %v1797 = vpack.c.b16 %v1311, %v1293
        %v1798 = vpack.c.b16 %v1312, %v1294
        %v1799 = vpack.c.b16 %v1313, %v1295
        %v1800 = vpack.c.b16 %v1314, %v1296
        %v1801 = vpack.c.b16 %v1315, %v1297
        %v1802 = vpack.c.b16 %v1334, %v1316
        %v1803 = vpack.c.b16 %v1335, %v1317
        %v1804 = vpack.c.b16 %v1336, %v1318
        %v1805 = vpack.c.b16 %v1337, %v1319
        %v1806 = vpack.c.b16 %v1338, %v1320
        %v1807 = vpack.c.b16 %v1339, %v1321
        %v1808 = vpack.c.b16 %v1340, %v1322
        %v1809 = vpack.c.b16 %v1341, %v1323
        %v1810 = vpack.c.b16 %v1342, %v1324
        %v1811 = vpack.c.b16 %v1343, %v1325
        %v1812 = vpack.c.b16 %v1344, %v1326
        %v1813 = vpack.c.b16 %v1345, %v1327
        %v1814 = vpack.c.b16 %v1346, %v1328
        %v1815 = vpack.c.b16 %v1347, %v1329
        %v1816 = vpack.c.b16 %v1348, %v1330
        %v1817 = vpack.c.b16 %v1349, %v1331
        %v1818 = vpack.c.b16 %v1350, %v1332
        %v1819 = vpack.c.b16 %v1351, %v1333
        %v1820 = vpack.c.b16 %v1370, %v1352
        %v1821 = vpack.c.b16 %v1371, %v1353
        %v1822 = vpack.c.b16 %v1372, %v1354
        %v1823 = vpack.c.b16 %v1373, %v1355
        %v1824 = vpack.c.b16 %v1374, %v1356
        %v1825 = vpack.c.b16 %v1375, %v1357
        %v1826 = vpack.c.b16 %v1376, %v1358
        %v1827 = vpack.c.b16 %v1377, %v1359
        %v1828 = vpack.c.b16 %v1378, %v1360
        %v1829 = vpack.c.b16 %v1379, %v1361
        %v1830 = vpack.c.b16 %v1380, %v1362
        %v1831 = vpack.c.b16 %v1381, %v1363
        %v1832 = vpack.c.b16 %v1382, %v1364
        %v1833 = vpack.c.b16 %v1383, %v1365
        %v1834 = vpack.c.b16 %v1384, %v1366
        %v1835 = vpack.c.b16 %v1385, %v1367
        %v1836 = vpack.c.b16 %v1386, %v1368
        %v1837 = vpack.c.b16 %v1387, %v1369
        %v1838 = vpack.c.b16 %v1406, %v1388
        %v1839 = vpack.c.b16 %v1407, %v1389
        %v1840 = vpack.c.b16 %v1408, %v1390
        %v1841 = vpack.c.b16 %v1409, %v1391
        %v1842 = vpack.c.b16 %v1410, %v1392
        %v1843 = vpack.c.b16 %v1411, %v1393
        %v1844 = vpack.c.b16 %v1412, %v1394
        %v1845 = vpack.c.b16 %v1413, %v1395
        %v1846 = vpack.c.b16 %v1414, %v1396
        %v1847 = vpack.c.b16 %v1415, %v1397
        %v1848 = vpack.c.b16 %v1416, %v1398
        %v1849 = vpack.c.b16 %v1417, %v1399
        %v1850 = vpack.c.b16 %v1418, %v1400
        %v1851 = vpack.c.b16 %v1419, %v1401
        %v1852 = vpack.c.b16 %v1420, %v1402
        %v1853 = vpack.c.b16 %v1421, %v1403
        %v1854 = vpack.c.b16 %v1422, %v1404
        %v1855 = vpack.c.b16 %v1423, %v1405
        %v1856 = vpack.c.b16 %v1442, %v1424
        %v1857 = vpack.c.b16 %v1443, %v1425
        %v1858 = vpack.c.b16 %v1444, %v1426
        %v1859 = vpack.c.b16 %v1445, %v1427
        %v1860 = vpack.c.b16 %v1446, %v1428
        %v1861 = vpack.c.b16 %v1447, %v1429
        %v1862 = vpack.c.b16 %v1448, %v1430
        %v1863 = vpack.c.b16 %v1449, %v1431
        %v1864 = vpack.c.b16 %v1450, %v1432
        %v1865 = vpack.c.b16 %v1451, %v1433
        %v1866 = vpack.c.b16 %v1452, %v1434
        %v1867 = vpack.c.b16 %v1453, %v1435
        %v1868 = vpack.c.b16 %v1454, %v1436
        %v1869 = vpack.c.b16 %v1455, %v1437
        %v1870 = vpack.c.b16 %v1456, %v1438
        %v1871 = vpack.c.b16 %v1457, %v1439
        %v1872 = vpack.c.b16 %v1458, %v1440
        %v1873 = vpack.c.b16 %v1459, %v1441
        %v1874 = vpack.c.b16 %v1478, %v1460
        %v1875 = vpack.c.b16 %v1479, %v1461
        %v1876 = vpack.c.b16 %v1480, %v1462
        %v1877 = vpack.c.b16 %v1481, %v1463
        %v1878 = vpack.c.b16 %v1482, %v1464
        %v1879 = vpack.c.b16 %v1483, %v1465
        %v1880 = vpack.c.b16 %v1484, %v1466
        %v1881 = vpack.c.b16 %v1485, %v1467
        %v1882 = vpack.c.b16 %v1486, %v1468
        %v1883 = vpack.c.b16 %v1487, %v1469
        %v1884 = vpack.c.b16 %v1488, %v1470
        %v1885 = vpack.c.b16 %v1489, %v1471
        %v1886 = vpack.c.b16 %v1490, %v1472
        %v1887 = vpack.c.b16 %v1491, %v1473
        %v1888 = vpack.c.b16 %v1492, %v1474
        %v1889 = vpack.c.b16 %v1493, %v1475
        %v1890 = vpack.c.b16 %v1494, %v1476
        %v1891 = vpack.c.b16 %v1495, %v1477
        %v1892 = vpack.c.b16 %v1514, %v1496
        %v1893 = vpack.c.b16 %v1515, %v1497
        %v1894 = vpack.c.b16 %v1516, %v1498
        %v1895 = vpack.c.b16 %v1517, %v1499
        %v1896 = vpack.c.b16 %v1518, %v1500
        %v1897 = vpack.c.b16 %v1519, %v1501
        %v1898 = vpack.c.b16 %v1520, %v1502
        %v1899 = vpack.c.b16 %v1521, %v1503
        %v1900 = vpack.c.b16 %v1522, %v1504
        %v1901 = vpack.c.b16 %v1523, %v1505
        %v1902 = vpack.c.b16 %v1524, %v1506
        %v1903 = vpack.c.b16 %v1525, %v1507
        %v1904 = vpack.c.b16 %v1526, %v1508
        %v1905 = vpack.c.b16 %v1527, %v1509
        %v1906 = vpack.c.b16 %v1528, %v1510
        %v1907 = vpack.c.b16 %v1529, %v1511
        %v1908 = vpack.c.b16 %v1530, %v1512
        %v1909 = vpack.c.b16 %v1531, %v1513
        %v1910 = vpack.c.b16 %v1550, %v1532
        %v1911 = vpack.c.b16 %v1551, %v1533
        %v1912 = vpack.c.b16 %v1552, %v1534
        %v1913 = vpack.c.b16 %v1553, %v1535
        %v1914 = vpack.c.b16 %v1554, %v1536
        %v1915 = vpack.c.b16 %v1555, %v1537
        %v1916 = vpack.c.b16 %v1556, %v1538
        %v1917 = vpack.c.b16 %v1557, %v1539
        %v1918 = vpack.c.b16 %v1558, %v1540
        %v1919 = vpack.c.b16 %v1559, %v1541
        %v1920 = vpack.c.b16 %v1560, %v1542
        %v1921 = vpack.c.b16 %v1561, %v1543
        %v1922 = vpack.c.b16 %v1562, %v1544
        %v1923 = vpack.c.b16 %v1563, %v1545
        %v1924 = vpack.c.b16 %v1564, %v1546
        %v1925 = vpack.c.b16 %v1565, %v1547
        %v1926 = vpack.c.b16 %v1566, %v1548
        %v1927 = vpack.c.b16 %v1567, %v1549
        %v1928 = vpack.c.b16 %v1586, %v1568
        %v1929 = vpack.c.b16 %v1587, %v1569
        %v1930 = vpack.c.b16 %v1588, %v1570
        %v1931 = vpack.c.b16 %v1589, %v1571
        %v1932 = vpack.c.b16 %v1590, %v1572
        %v1933 = vpack.c.b16 %v1591, %v1573
        %v1934 = vpack.c.b16 %v1592, %v1574
        %v1935 = vpack.c.b16 %v1593, %v1575
        %v1936 = vpack.c.b16 %v1594, %v1576
        %v1937 = vpack.c.b16 %v1595, %v1577
        %v1938 = vpack.c.b16 %v1596, %v1578
        %v1939 = vpack.c.b16 %v1597, %v1579
        %v1940 = vpack.c.b16 %v1598, %v1580
        %v1941 = vpack.c.b16 %v1599, %v1581
        %v1942 = vpack.c.b16 %v1600, %v1582
        %v1943 = vpack.c.b16 %v1601, %v1583
        %v1944 = vpack.c.b16 %v1602, %v1584
        %v1945 = vpack.c.b16 %v1603, %v1585
        %v1946 = vpack.c.b16 %v1622, %v1604
        %v1947 = vpack.c.b16 %v1623, %v1605
        %v1948 = vpack.c.b16 %v1624, %v1606
        %v1949 = vpack.c.b16 %v1625, %v1607
        %v1950 = vpack.c.b16 %v1626, %v1608
        %v1951 = vpack.c.b16 %v1627, %v1609
        %v1952 = vpack.c.b16 %v1628, %v1610
        %v1953 = vpack.c.b16 %v1629, %v1611
        %v1954 = vpack.c.b16 %v1630, %v1612
        %v1955 = vpack.c.b16 %v1631, %v1613
        %v1956 = vpack.c.b16 %v1632, %v1614
        %v1957 = vpack.c.b16 %v1633, %v1615
        %v1958 = vpack.c.b16 %v1634, %v1616
        %v1959 = vpack.c.b16 %v1635, %v1617
        %v1960 = vpack.c.b16 %v1636, %v1618
        %v1961 = vpack.c.b16 %v1637, %v1619
        %v1962 = vpack.c.b16 %v1638, %v1620
        %v1963 = vpack.c.b16 %v1639, %v1621
        %v1964 = vpack.c.b16 %v1658, %v1640
        %v1965 = vpack.c.b16 %v1659, %v1641
        %v1966 = vpack.c.b16 %v1660, %v1642
        %v1967 = vpack.c.b16 %v1661, %v1643
        %v1968 = vpack.c.b16 %v1662, %v1644
        %v1969 = vpack.c.b16 %v1663, %v1645
        %v1970 = vpack.c.b16 %v1664, %v1646
        %v1971 = vpack.c.b16 %v1665, %v1647
        %v1972 = vpack.c.b16 %v1666, %v1648
        %v1973 = vpack.c.b16 %v1667, %v1649
        %v1974 = vpack.c.b16 %v1668, %v1650
        %v1975 = vpack.c.b16 %v1669, %v1651
        %v1976 = vpack.c.b16 %v1670, %v1652
        %v1977 = vpack.c.b16 %v1671, %v1653
        %v1978 = vpack.c.b16 %v1672, %v1654
        %v1979 = vpack.c.b16 %v1673, %v1655
        %v1980 = vpack.c.b16 %v1674, %v1656
        %v1981 = vpack.c.b16 %v1675, %v1657
        %v1982 = vpack.c.b16 %v1694, %v1676
        %v1983 = vpack.c.b16 %v1695, %v1677
        %v1984 = vpack.c.b16 %v1696, %v1678
        %v1985 = vpack.c.b16 %v1697, %v1679
        %v1986 = vpack.c.b16 %v1698, %v1680
        %v1987 = vpack.c.b16 %v1699, %v1681
        %v1988 = vpack.c.b16 %v1700, %v1682
        %v1989 = vpack.c.b16 %v1701, %v1683
        %v1990 = vpack.c.b16 %v1702, %v1684
        %v1991 = vpack.c.b16 %v1703, %v1685
        %v1992 = vpack.c.b16 %v1704, %v1686
        %v1993 = vpack.c.b16 %v1705, %v1687
        %v1994 = vpack.c.b16 %v1706, %v1688
        %v1995 = vpack.c.b16 %v1707, %v1689
        %v1996 = vpack.c.b16 %v1708, %v1690
        %v1997 = vpack.c.b16 %v1709, %v1691
        %v1998 = vpack.c.b16 %v1710, %v1692
        %v1999 = vpack.c.b16 %v1711, %v1693
        %v2576 = vunpack.c.l.b16 %v553
        %v2577 = vunpack.c.l.b16 %v554
        %v2578 = vunpack.c.l.b16 %v555
        %v2579 = vunpack.c.l.b16 %v556
        %v2580 = vunpack.c.l.b16 %v557
        %v2581 = vunpack.c.l.b16 %v558
        %v2582 = vunpack.c.l.b16 %v559
        %v2583 = vunpack.c.l.b16 %v560
        %v2584 = vunpack.c.l.b16 %v561
        %v2585 = vunpack.c.l.b16 %v562
        %v2586 = vunpack.c.l.b16 %v563
        %v2587 = vunpack.c.l.b16 %v564
        %v2588 = vunpack.c.l.b16 %v565
        %v2589 = vunpack.c.l.b16 %v566
        %v2590 = vunpack.c.l.b16 %v567
        %v2591 = vunpack.c.l.b16 %v568
        %v2592 = vunpack.c.l.b16 %v569
        %v2593 = vunpack.c.l.b16 %v570
        %v2594 = vunpack.c.l.b16 %v571
        %v2595 = vunpack.c.l.b16 %v572
        %v2596 = vunpack.c.l.b16 %v573
        %v2597 = vunpack.c.l.b16 %v574
        %v2598 = vunpack.c.l.b16 %v575
        %v2599 = vunpack.c.l.b16 %v576
        %v2600 = vunpack.c.l.b16 %v577
        %v2601 = vunpack.c.l.b16 %v578
        %v2602 = vunpack.c.l.b16 %v579
        %v2603 = vunpack.c.l.b16 %v580
        %v2604 = vunpack.c.l.b16 %v581
        %v2605 = vunpack.c.l.b16 %v582
        %v2606 = vunpack.c.l.b16 %v583
        %v2607 = vunpack.c.l.b16 %v584
        %v2608 = vunpack.c.l.b16 %v585
        %v2609 = vunpack.c.l.b16 %v586
        %v2610 = vunpack.c.l.b16 %v587
        %v2611 = vunpack.c.l.b16 %v588
        %v2612 = vunpack.c.l.b16 %v589
        %v2613 = vunpack.c.l.b16 %v590
        %v2614 = vunpack.c.l.b16 %v591
        %v2615 = vunpack.c.l.b16 %v592
        %v2616 = vunpack.c.l.b16 %v593
        %v2617 = vunpack.c.l.b16 %v594
        %v2618 = vunpack.c.l.b16 %v595
        %v2619 = vunpack.c.l.b16 %v596
        %v2620 = vunpack.c.l.b16 %v597
        %v2621 = vunpack.c.l.b16 %v598
        %v2622 = vunpack.c.l.b16 %v599
        %v2623 = vunpack.c.l.b16 %v600
        %v2624 = vunpack.c.l.b16 %v601
        %v2625 = vunpack.c.l.b16 %v602
        %v2626 = vunpack.c.l.b16 %v603
        %v2627 = vunpack.c.l.b16 %v604
        %v2628 = vunpack.c.l.b16 %v605
        %v2629 = vunpack.c.l.b16 %v606
        %v2630 = vunpack.c.l.b16 %v607
        %v2631 = vunpack.c.l.b16 %v608
        %v2632 = vunpack.c.l.b16 %v609
        %v2633 = vunpack.c.l.b16 %v610
        %v2634 = vunpack.c.l.b16 %v611
        %v2635 = vunpack.c.l.b16 %v612
        %v2636 = vunpack.c.l.b16 %v613
        %v2637 = vunpack.c.l.b16 %v614
        %v2638 = vunpack.c.l.b16 %v615
        %v2639 = vunpack.c.l.b16 %v616
        %v2640 = vunpack.c.l.b16 %v617
        %v2641 = vunpack.c.l.b16 %v618
        %v2642 = vunpack.c.l.b16 %v619
        %v2643 = vunpack.c.l.b16 %v620
        %v2644 = vunpack.c.l.b16 %v621
        %v2645 = vunpack.c.l.b16 %v622
        %v2646 = vunpack.c.l.b16 %v623
        %v2647 = vunpack.c.l.b16 %v624
        %v2648 = vunpack.c.l.b16 %v625
        %v2649 = vunpack.c.l.b16 %v626
        %v2650 = vunpack.c.l.b16 %v627
        %v2651 = vunpack.c.l.b16 %v628
        %v2652 = vunpack.c.l.b16 %v629
        %v2653 = vunpack.c.l.b16 %v630
        %v2654 = vunpack.c.l.b16 %v631
        %v2655 = vunpack.c.l.b16 %v632
        %v2656 = vunpack.c.l.b16 %v633
        %v2657 = vunpack.c.l.b16 %v634
        %v2658 = vunpack.c.l.b16 %v635
        %v2659 = vunpack.c.l.b16 %v636
        %v2660 = vunpack.c.l.b16 %v637
        %v2661 = vunpack.c.l.b16 %v638
        %v2662 = vunpack.c.l.b16 %v639
        %v2663 = vunpack.c.l.b16 %v640
        %v2664 = vunpack.c.l.b16 %v641
        %v2665 = vunpack.c.l.b16 %v642
        %v2666 = vunpack.c.l.b16 %v643
        %v2667 = vunpack.c.l.b16 %v644
        %v2668 = vunpack.c.l.b16 %v645
        %v2669 = vunpack.c.l.b16 %v646
        %v2670 = vunpack.c.l.b16 %v647
        %v2671 = vunpack.c.l.b16 %v648
        %v2672 = vunpack.c.l.b16 %v649
        %v2673 = vunpack.c.l.b16 %v650
        %v2674 = vunpack.c.l.b16 %v651
        %v2675 = vunpack.c.l.b16 %v652
        %v2676 = vunpack.c.l.b16 %v653
        %v2677 = vunpack.c.l.b16 %v654
        %v2678 = vunpack.c.l.b16 %v655
        %v2679 = vunpack.c.l.b16 %v656
        %v2680 = vunpack.c.l.b16 %v657
        %v2681 = vunpack.c.l.b16 %v658
        %v2682 = vunpack.c.l.b16 %v659
        %v2683 = vunpack.c.l.b16 %v660
        %v2684 = vunpack.c.l.b16 %v661
        %v2685 = vunpack.c.l.b16 %v662
        %v2686 = vunpack.c.l.b16 %v663
        %v2687 = vunpack.c.l.b16 %v664
        %v2688 = vunpack.c.l.b16 %v665
        %v2689 = vunpack.c.l.b16 %v666
        %v2690 = vunpack.c.l.b16 %v667
        %v2691 = vunpack.c.l.b16 %v668
        %v2692 = vunpack.c.l.b16 %v669
        %v2693 = vunpack.c.l.b16 %v670
        %v2694 = vunpack.c.l.b16 %v671
        %v2695 = vunpack.c.l.b16 %v672
        %v2696 = vunpack.c.l.b16 %v673
        %v2697 = vunpack.c.l.b16 %v674
        %v2698 = vunpack.c.l.b16 %v675
        %v2699 = vunpack.c.l.b16 %v676
        %v2700 = vunpack.c.l.b16 %v677
        %v2701 = vunpack.c.l.b16 %v678
        %v2702 = vunpack.c.l.b16 %v679
        %v2703 = vunpack.c.l.b16 %v680
        %v2704 = vunpack.c.l.b16 %v681
        %v2705 = vunpack.c.l.b16 %v682
        %v2706 = vunpack.c.l.b16 %v683
        %v2707 = vunpack.c.l.b16 %v684
        %v2708 = vunpack.c.l.b16 %v685
        %v2709 = vunpack.c.l.b16 %v686
        %v2710 = vunpack.c.l.b16 %v687
        %v2711 = vunpack.c.l.b16 %v688
        %v2712 = vunpack.c.l.b16 %v689
        %v2713 = vunpack.c.l.b16 %v690
        %v2714 = vunpack.c.l.b16 %v691
        %v2715 = vunpack.c.l.b16 %v692
        %v2716 = vunpack.c.l.b16 %v693
        %v2717 = vunpack.c.l.b16 %v694
        %v2718 = vunpack.c.l.b16 %v695
        %v2719 = vunpack.c.l.b16 %v696
        %v2720 = vunpack.c.l.b16 %v697
        %v2721 = vunpack.c.l.b16 %v698
        %v2722 = vunpack.c.l.b16 %v699
        %v2723 = vunpack.c.l.b16 %v700
        %v2724 = vunpack.c.l.b16 %v701
        %v2725 = vunpack.c.l.b16 %v702
        %v2726 = vunpack.c.l.b16 %v703
        %v2727 = vunpack.c.l.b16 %v704
        %v2728 = vunpack.c.l.b16 %v705
        %v2729 = vunpack.c.l.b16 %v706
        %v2730 = vunpack.c.l.b16 %v707
        %v2731 = vunpack.c.l.b16 %v708
        %v2732 = vunpack.c.l.b16 %v709
        %v2733 = vunpack.c.l.b16 %v710
        %v2734 = vunpack.c.l.b16 %v711
        %v2735 = vunpack.c.l.b16 %v712
        %v2736 = vunpack.c.l.b16 %v713
        %v2737 = vunpack.c.l.b16 %v714
        %v2738 = vunpack.c.l.b16 %v715
        %v2739 = vunpack.c.l.b16 %v716
        %v2740 = vunpack.c.l.b16 %v717
        %v2741 = vunpack.c.l.b16 %v718
        %v2742 = vunpack.c.l.b16 %v719
        %v2743 = vunpack.c.l.b16 %v720
        %v2744 = vunpack.c.l.b16 %v721
        %v2745 = vunpack.c.l.b16 %v722
        %v2746 = vunpack.c.l.b16 %v723
        %v2747 = vunpack.c.l.b16 %v724
        %v2748 = vunpack.c.l.b16 %v725
        %v2749 = vunpack.c.l.b16 %v726
        %v2750 = vunpack.c.l.b16 %v727
        %v2751 = vunpack.c.l.b16 %v728
        %v2752 = vunpack.c.l.b16 %v729
        %v2753 = vunpack.c.l.b16 %v730
        %v2754 = vunpack.c.l.b16 %v731
        %v2755 = vunpack.c.l.b16 %v732
        %v2756 = vunpack.c.l.b16 %v733
        %v2757 = vunpack.c.l.b16 %v734
        %v2758 = vunpack.c.l.b16 %v735
        %v2759 = vunpack.c.l.b16 %v736
        %v2760 = vunpack.c.l.b16 %v737
        %v2761 = vunpack.c.l.b16 %v738
        %v2762 = vunpack.c.l.b16 %v739
        %v2763 = vunpack.c.l.b16 %v740
        %v2764 = vunpack.c.l.b16 %v741
        %v2765 = vunpack.c.l.b16 %v742
        %v2766 = vunpack.c.l.b16 %v743
        %v2767 = vunpack.c.l.b16 %v744
        %v2768 = vunpack.c.l.b16 %v745
        %v2769 = vunpack.c.l.b16 %v746
        %v2770 = vunpack.c.l.b16 %v747
        %v2771 = vunpack.c.l.b16 %v748
        %v2772 = vunpack.c.l.b16 %v749
        %v2773 = vunpack.c.l.b16 %v750
        %v2774 = vunpack.c.l.b16 %v751
        %v2775 = vunpack.c.l.b16 %v752
        %v2776 = vunpack.c.l.b16 %v753
        %v2777 = vunpack.c.l.b16 %v754
        %v2778 = vunpack.c.l.b16 %v755
        %v2779 = vunpack.c.l.b16 %v756
        %v2780 = vunpack.c.l.b16 %v757
        %v2781 = vunpack.c.l.b16 %v758
        %v2782 = vunpack.c.l.b16 %v759
        %v2783 = vunpack.c.l.b16 %v760
        %v2784 = vunpack.c.l.b16 %v761
        %v2785 = vunpack.c.l.b16 %v762
        %v2786 = vunpack.c.l.b16 %v763
        %v2787 = vunpack.c.l.b16 %v764
        %v2788 = vunpack.c.l.b16 %v765
        %v2789 = vunpack.c.l.b16 %v766
        %v2790 = vunpack.c.l.b16 %v767
        %v2791 = vunpack.c.l.b16 %v768
        %v2792 = vunpack.c.l.b16 %v769
        %v2793 = vunpack.c.l.b16 %v770
        %v2794 = vunpack.c.l.b16 %v771
        %v2795 = vunpack.c.l.b16 %v772
        %v2796 = vunpack.c.l.b16 %v773
        %v2797 = vunpack.c.l.b16 %v774
        %v2798 = vunpack.c.l.b16 %v775
        %v2799 = vunpack.c.l.b16 %v776
        %v2800 = vunpack.c.l.b16 %v777
        %v2801 = vunpack.c.l.b16 %v778
        %v2802 = vunpack.c.l.b16 %v779
        %v2803 = vunpack.c.l.b16 %v780
        %v2804 = vunpack.c.l.b16 %v781
        %v2805 = vunpack.c.l.b16 %v782
        %v2806 = vunpack.c.l.b16 %v783
        %v2807 = vunpack.c.l.b16 %v784
        %v2808 = vunpack.c.l.b16 %v785
        %v2809 = vunpack.c.l.b16 %v786
        %v2810 = vunpack.c.l.b16 %v787
        %v2811 = vunpack.c.l.b16 %v788
        %v2812 = vunpack.c.l.b16 %v789
        %v2813 = vunpack.c.l.b16 %v790
        %v2814 = vunpack.c.l.b16 %v791
        %v2815 = vunpack.c.l.b16 %v792
        %v2816 = vunpack.c.l.b16 %v793
        %v2817 = vunpack.c.l.b16 %v794
        %v2818 = vunpack.c.l.b16 %v795
        %v2819 = vunpack.c.l.b16 %v796
        %v2820 = vunpack.c.l.b16 %v797
        %v2821 = vunpack.c.l.b16 %v798
        %v2822 = vunpack.c.l.b16 %v799
        %v2823 = vunpack.c.l.b16 %v800
        %v2824 = vunpack.c.l.b16 %v801
        %v2825 = vunpack.c.l.b16 %v802
        %v2826 = vunpack.c.l.b16 %v803
        %v2827 = vunpack.c.l.b16 %v804
        %v2828 = vunpack.c.l.b16 %v805
        %v2829 = vunpack.c.l.b16 %v806
        %v2830 = vunpack.c.l.b16 %v807
        %v2831 = vunpack.c.l.b16 %v808
        %v2832 = vunpack.c.l.b16 %v809
        %v2833 = vunpack.c.l.b16 %v810
        %v2834 = vunpack.c.l.b16 %v811
        %v2835 = vunpack.c.l.b16 %v812
        %v2836 = vunpack.c.l.b16 %v813
        %v2837 = vunpack.c.l.b16 %v814
        %v2838 = vunpack.c.l.b16 %v815
        %v2839 = vunpack.c.l.b16 %v816
        %v2840 = vunpack.c.l.b16 %v817
        %v2841 = vunpack.c.l.b16 %v818
        %v2842 = vunpack.c.l.b16 %v819
        %v2843 = vunpack.c.l.b16 %v820
        %v2844 = vunpack.c.l.b16 %v821
        %v2845 = vunpack.c.l.b16 %v822
        %v2846 = vunpack.c.l.b16 %v823
        %v2847 = vunpack.c.l.b16 %v824
        %v2848 = vunpack.c.l.b16 %v825
        %v2849 = vunpack.c.l.b16 %v826
        %v2850 = vunpack.c.l.b16 %v827
        %v2851 = vunpack.c.l.b16 %v828
        %v2852 = vunpack.c.l.b16 %v829
        %v2853 = vunpack.c.l.b16 %v830
        %v2854 = vunpack.c.l.b16 %v831
        %v2855 = vunpack.c.l.b16 %v832
        %v2856 = vunpack.c.l.b16 %v833
        %v2857 = vunpack.c.l.b16 %v834
        %v2858 = vunpack.c.l.b16 %v835
        %v2859 = vunpack.c.l.b16 %v836
        %v2860 = vunpack.c.l.b16 %v837
        %v2861 = vunpack.c.l.b16 %v838
        %v2862 = vunpack.c.l.b16 %v839
        %v2863 = vunpack.c.l.b16 %v840
        %v2864 = vpack.c.b16 %v2577, %v2576
        %v2865 = vpack.c.b16 %v2579, %v2578
        %v2866 = vpack.c.b16 %v2581, %v2580
        %v2867 = vpack.c.b16 %v2583, %v2582
        %v2868 = vpack.c.b16 %v2585, %v2584
        %v2869 = vpack.c.b16 %v2587, %v2586
        %v2870 = vpack.c.b16 %v2589, %v2588
        %v2871 = vpack.c.b16 %v2591, %v2590
        %v2872 = vpack.c.b16 %v2593, %v2592
        %v2873 = vpack.c.b16 %v2595, %v2594
        %v2874 = vpack.c.b16 %v2597, %v2596
        %v2875 = vpack.c.b16 %v2599, %v2598
        %v2876 = vpack.c.b16 %v2601, %v2600
        %v2877 = vpack.c.b16 %v2603, %v2602
        %v2878 = vpack.c.b16 %v2605, %v2604
        %v2879 = vpack.c.b16 %v2607, %v2606
        %v2880 = vpack.c.b16 %v2609, %v2608
        %v2881 = vpack.c.b16 %v2611, %v2610
        %v2882 = vpack.c.b16 %v2613, %v2612
        %v2883 = vpack.c.b16 %v2615, %v2614
        %v2884 = vpack.c.b16 %v2617, %v2616
        %v2885 = vpack.c.b16 %v2619, %v2618
        %v2886 = vpack.c.b16 %v2621, %v2620
        %v2887 = vpack.c.b16 %v2623, %v2622
        %v2888 = vpack.c.b16 %v2625, %v2624
        %v2889 = vpack.c.b16 %v2627, %v2626
        %v2890 = vpack.c.b16 %v2629, %v2628
        %v2891 = vpack.c.b16 %v2631, %v2630
        %v2892 = vpack.c.b16 %v2633, %v2632
        %v2893 = vpack.c.b16 %v2635, %v2634
        %v2894 = vpack.c.b16 %v2637, %v2636
        %v2895 = vpack.c.b16 %v2639, %v2638
        %v2896 = vpack.c.b16 %v2641, %v2640
        %v2897 = vpack.c.b16 %v2643, %v2642
        %v2898 = vpack.c.b16 %v2645, %v2644
        %v2899 = vpack.c.b16 %v2647, %v2646
        %v2900 = vpack.c.b16 %v2649, %v2648
        %v2901 = vpack.c.b16 %v2651, %v2650
        %v2902 = vpack.c.b16 %v2653, %v2652
        %v2903 = vpack.c.b16 %v2655, %v2654
        %v2904 = vpack.c.b16 %v2657, %v2656
        %v2905 = vpack.c.b16 %v2659, %v2658
        %v2906 = vpack.c.b16 %v2661, %v2660
        %v2907 = vpack.c.b16 %v2663, %v2662
        %v2908 = vpack.c.b16 %v2665, %v2664
        %v2909 = vpack.c.b16 %v2667, %v2666
        %v2910 = vpack.c.b16 %v2669, %v2668
        %v2911 = vpack.c.b16 %v2671, %v2670
        %v2912 = vpack.c.b16 %v2673, %v2672
        %v2913 = vpack.c.b16 %v2675, %v2674
        %v2914 = vpack.c.b16 %v2677, %v2676
        %v2915 = vpack.c.b16 %v2679, %v2678
        %v2916 = vpack.c.b16 %v2681, %v2680
        %v2917 = vpack.c.b16 %v2683, %v2682
        %v2918 = vpack.c.b16 %v2685, %v2684
        %v2919 = vpack.c.b16 %v2687, %v2686
        %v2920 = vpack.c.b16 %v2689, %v2688
        %v2921 = vpack.c.b16 %v2691, %v2690
        %v2922 = vpack.c.b16 %v2693, %v2692
        %v2923 = vpack.c.b16 %v2695, %v2694
        %v2924 = vpack.c.b16 %v2697, %v2696
        %v2925 = vpack.c.b16 %v2699, %v2698
        %v2926 = vpack.c.b16 %v2701, %v2700
        %v2927 = vpack.c.b16 %v2703, %v2702
        %v2928 = vpack.c.b16 %v2705, %v2704
        %v2929 = vpack.c.b16 %v2707, %v2706
        %v2930 = vpack.c.b16 %v2709, %v2708
        %v2931 = vpack.c.b16 %v2711, %v2710
        %v2932 = vpack.c.b16 %v2713, %v2712
        %v2933 = vpack.c.b16 %v2715, %v2714
        %v2934 = vpack.c.b16 %v2717, %v2716
        %v2935 = vpack.c.b16 %v2719, %v2718
        %v2936 = vpack.c.b16 %v2721, %v2720
        %v2937 = vpack.c.b16 %v2723, %v2722
        %v2938 = vpack.c.b16 %v2725, %v2724
        %v2939 = vpack.c.b16 %v2727, %v2726
        %v2940 = vpack.c.b16 %v2729, %v2728
        %v2941 = vpack.c.b16 %v2731, %v2730
        %v2942 = vpack.c.b16 %v2733, %v2732
        %v2943 = vpack.c.b16 %v2735, %v2734
        %v2944 = vpack.c.b16 %v2737, %v2736
        %v2945 = vpack.c.b16 %v2739, %v2738
        %v2946 = vpack.c.b16 %v2741, %v2740
        %v2947 = vpack.c.b16 %v2743, %v2742
        %v2948 = vpack.c.b16 %v2745, %v2744
        %v2949 = vpack.c.b16 %v2747, %v2746
        %v2950 = vpack.c.b16 %v2749, %v2748
        %v2951 = vpack.c.b16 %v2751, %v2750
        %v2952 = vpack.c.b16 %v2753, %v2752
        %v2953 = vpack.c.b16 %v2755, %v2754
        %v2954 = vpack.c.b16 %v2757, %v2756
        %v2955 = vpack.c.b16 %v2759, %v2758
        %v2956 = vpack.c.b16 %v2761, %v2760
        %v2957 = vpack.c.b16 %v2763, %v2762
        %v2958 = vpack.c.b16 %v2765, %v2764
        %v2959 = vpack.c.b16 %v2767, %v2766
        %v2960 = vpack.c.b16 %v2769, %v2768
        %v2961 = vpack.c.b16 %v2771, %v2770
        %v2962 = vpack.c.b16 %v2773, %v2772
        %v2963 = vpack.c.b16 %v2775, %v2774
        %v2964 = vpack.c.b16 %v2777, %v2776
        %v2965 = vpack.c.b16 %v2779, %v2778
        %v2966 = vpack.c.b16 %v2781, %v2780
        %v2967 = vpack.c.b16 %v2783, %v2782
        %v2968 = vpack.c.b16 %v2785, %v2784
        %v2969 = vpack.c.b16 %v2787, %v2786
        %v2970 = vpack.c.b16 %v2789, %v2788
        %v2971 = vpack.c.b16 %v2791, %v2790
        %v2972 = vpack.c.b16 %v2793, %v2792
        %v2973 = vpack.c.b16 %v2795, %v2794
        %v2974 = vpack.c.b16 %v2797, %v2796
        %v2975 = vpack.c.b16 %v2799, %v2798
        %v2976 = vpack.c.b16 %v2801, %v2800
        %v2977 = vpack.c.b16 %v2803, %v2802
        %v2978 = vpack.c.b16 %v2805, %v2804
        %v2979 = vpack.c.b16 %v2807, %v2806
        %v2980 = vpack.c.b16 %v2809, %v2808
        %v2981 = vpack.c.b16 %v2811, %v2810
        %v2982 = vpack.c.b16 %v2813, %v2812
        %v2983 = vpack.c.b16 %v2815, %v2814
        %v2984 = vpack.c.b16 %v2817, %v2816
        %v2985 = vpack.c.b16 %v2819, %v2818
        %v2986 = vpack.c.b16 %v2821, %v2820
        %v2987 = vpack.c.b16 %v2823, %v2822
        %v2988 = vpack.c.b16 %v2825, %v2824
        %v2989 = vpack.c.b16 %v2827, %v2826
        %v2990 = vpack.c.b16 %v2829, %v2828
        %v2991 = vpack.c.b16 %v2831, %v2830
        %v2992 = vpack.c.b16 %v2833, %v2832
        %v2993 = vpack.c.b16 %v2835, %v2834
        %v2994 = vpack.c.b16 %v2837, %v2836
        %v2995 = vpack.c.b16 %v2839, %v2838
        %v2996 = vpack.c.b16 %v2841, %v2840
        %v2997 = vpack.c.b16 %v2843, %v2842
        %v2998 = vpack.c.b16 %v2845, %v2844
        %v2999 = vpack.c.b16 %v2847, %v2846
        %v3000 = vpack.c.b16 %v2849, %v2848
        %v3001 = vpack.c.b16 %v2851, %v2850
        %v3002 = vpack.c.b16 %v2853, %v2852
        %v3003 = vpack.c.b16 %v2855, %v2854
        %v3004 = vpack.c.b16 %v2857, %v2856
        %v3005 = vpack.c.b16 %v2859, %v2858
        %v3006 = vpack.c.b16 %v2861, %v2860
        %v3007 = vpack.c.b16 %v2863, %v2862
        %3152 = vmatprep.subr.bf16.mxu0 0
        %3153 = vmatpush1.bf16.msra.mxu0 %v2864
        %3154 = vmatprep.subr.bf16.mxu0 0
        %3155 = vmatpush1.bf16.msra.mxu0 %v2865
        %3156 = vmatprep.subr.bf16.mxu0 0
        %3157 = vmatpush1.bf16.msra.mxu0 %v2866
        %3158 = vmatprep.subr.bf16.mxu0 0
        %3159 = vmatpush1.bf16.msra.mxu0 %v2867
        %3160 = vmatprep.subr.bf16.mxu0 0
        %3161 = vmatpush1.bf16.msra.mxu0 %v2868
        %3162 = vmatprep.subr.bf16.mxu0 0
        %3163 = vmatpush1.bf16.msra.mxu0 %v2869
        %3164 = vmatprep.subr.bf16.mxu0 0
        %3165 = vmatpush1.bf16.msra.mxu0 %v2870
        %3166 = vmatprep.subr.bf16.mxu0 0
        %3167 = vmatpush1.bf16.msra.mxu0 %v2871
        %3168 = vmatprep.subr.bf16.mxu0 0
        %3169 = vmatpush1.bf16.msra.mxu0 %v2872
        %3170 = vmatprep.subr.bf16.mxu0 0
        %3171 = vmatpush1.bf16.msra.mxu0 %v2873
        %3172 = vmatprep.subr.bf16.mxu0 0
        %3173 = vmatpush1.bf16.msra.mxu0 %v2874
        %3174 = vmatprep.subr.bf16.mxu0 0
        %3175 = vmatpush1.bf16.msra.mxu0 %v2875
        %3176 = vmatprep.subr.bf16.mxu0 0
        %3177 = vmatpush1.bf16.msra.mxu0 %v2876
        %3178 = vmatprep.subr.bf16.mxu0 0
        %3179 = vmatpush1.bf16.msra.mxu0 %v2877
        %3180 = vmatprep.subr.bf16.mxu0 0
        %3181 = vmatpush1.bf16.msra.mxu0 %v2878
        %3182 = vmatprep.subr.bf16.mxu0 0
        %3183 = vmatpush1.bf16.msra.mxu0 %v2879
        %3184 = vmatprep.mubr.bf16.mxu0 %v1713
        %3185 = vmatmul.mubr.bf16.gmra.mrb[0].mxu0 %v1712
        %v3186 = vpop.f32.mrb[0].mxu0
        %v3187 = vadd.f32 %v846, %v3186
        %v3188 = vpop.f32.mrb[0].mxu0
        %v3189 = vpop.f32.mrb[0].mxu0
        %v3190 = vadd.f32 %v846, %v3189
        %v3191 = vpop.f32.mrb[0].mxu0
        %3192 = vmatprep.mubr.bf16.mxu0 %v1731
        %3193 = vmatmul.mubr.bf16.gmra.mrb[0].mxu0 %v1730
        %v3194 = vpop.f32.mrb[0].mxu0
        %v3195 = vadd.f32 %v846, %v3194
        %v3196 = vpop.f32.mrb[0].mxu0
        %v3197 = vpop.f32.mrb[0].mxu0
        %v3198 = vadd.f32 %v846, %v3197
        %v3199 = vpop.f32.mrb[0].mxu0
        %3200 = vmatprep.mubr.bf16.mxu0 %v1749
        %3201 = vmatmul.mubr.bf16.gmra.mrb[0].mxu0 %v1748
        %v3202 = vpop.f32.mrb[0].mxu0
        %v3203 = vadd.f32 %v846, %v3202
        %v3204 = vpop.f32.mrb[0].mxu0
        %v3205 = vpop.f32.mrb[0].mxu0
        %v3206 = vadd.f32 %v846, %v3205
        %v3207 = vpop.f32.mrb[0].mxu0
        %3208 = vmatprep.mubr.bf16.mxu0 %v1767
        %3209 = vmatmul.mubr.bf16.gmra.mrb[0].mxu0 %v1766
        %v3210 = vpop.f32.mrb[0].mxu0
        %v3211 = vadd.f32 %v846, %v3210
        %v3212 = vpop.f32.mrb[0].mxu0
        %v3213 = vpop.f32.mrb[0].mxu0
        %v3214 = vadd.f32 %v846, %v3213
        %v3215 = vpop.f32.mrb[0].mxu0
        %3216 = vmatprep.mubr.bf16.mxu0 %v1785
        %3217 = vmatmul.mubr.bf16.gmra.mrb[0].mxu0 %v1784
        %v3218 = vpop.f32.mrb[0].mxu0
        %v3219 = vadd.f32 %v846, %v3218
        %v3220 = vpop.f32.mrb[0].mxu0
        %v3221 = vpop.f32.mrb[0].mxu0
        %v3222 = vadd.f32 %v846, %v3221
        %v3223 = vpop.f32.mrb[0].mxu0
        %3224 = vmatprep.mubr.bf16.mxu0 %v1803
        %3225 = vmatmul.mubr.bf16.gmra.mrb[0].mxu0 %v1802
        %v3226 = vpop.f32.mrb[0].mxu0
        %v3227 = vadd.f32 %v846, %v3226
        %v3228 = vpop.f32.mrb[0].mxu0
        %v3229 = vpop.f32.mrb[0].mxu0
        %v3230 = vadd.f32 %v846, %v3229
        %v3231 = vpop.f32.mrb[0].mxu0
        %3232 = vmatprep.mubr.bf16.mxu0 %v1821
        %3233 = vmatmul.mubr.bf16.gmra.mrb[0].mxu0 %v1820
        %v3234 = vpop.f32.mrb[0].mxu0
        %v3235 = vadd.f32 %v846, %v3234
        %v3236 = vpop.f32.mrb[0].mxu0
        %v3237 = vpop.f32.mrb[0].mxu0
        %v3238 = vadd.f32 %v846, %v3237
        %v3239 = vpop.f32.mrb[0].mxu0
        %3240 = vmatprep.mubr.bf16.mxu0 %v1839
        %3241 = vmatmul.mubr.bf16.gmra.mrb[0].mxu0 %v1838
        %v3242 = vpop.f32.mrb[0].mxu0
        %v3243 = vadd.f32 %v846, %v3242
        %v3244 = vpop.f32.mrb[0].mxu0
        %v3245 = vpop.f32.mrb[0].mxu0
        %v3246 = vadd.f32 %v846, %v3245
        %v3247 = vpop.f32.mrb[0].mxu0
        %3248 = vmatprep.mubr.bf16.mxu0 %v1857
        %3249 = vmatmul.mubr.bf16.gmra.mrb[0].mxu0 %v1856
        %v3250 = vpop.f32.mrb[0].mxu0
        %v3251 = vadd.f32 %v846, %v3250
        %v3252 = vpop.f32.mrb[0].mxu0
        %v3253 = vpop.f32.mrb[0].mxu0
        %v3254 = vadd.f32 %v846, %v3253
        %v3255 = vpop.f32.mrb[0].mxu0
        %3256 = vmatprep.mubr.bf16.mxu0 %v1875
        %3257 = vmatmul.mubr.bf16.gmra.mrb[0].mxu0 %v1874
        %v3258 = vpop.f32.mrb[0].mxu0
        %v3259 = vadd.f32 %v846, %v3258
        %v3260 = vpop.f32.mrb[0].mxu0
        %v3261 = vpop.f32.mrb[0].mxu0
        %v3262 = vadd.f32 %v846, %v3261
        %v3263 = vpop.f32.mrb[0].mxu0
        %3264 = vmatprep.mubr.bf16.mxu0 %v1893
        %3265 = vmatmul.mubr.bf16.gmra.mrb[0].mxu0 %v1892
        %v3266 = vpop.f32.mrb[0].mxu0
        %v3267 = vadd.f32 %v846, %v3266
        %v3268 = vpop.f32.mrb[0].mxu0
        %v3269 = vpop.f32.mrb[0].mxu0
        %v3270 = vadd.f32 %v846, %v3269
        %v3271 = vpop.f32.mrb[0].mxu0
        %3272 = vmatprep.mubr.bf16.mxu0 %v1911
        %3273 = vmatmul.mubr.bf16.gmra.mrb[0].mxu0 %v1910
        %v3274 = vpop.f32.mrb[0].mxu0
        %v3275 = vadd.f32 %v846, %v3274
        %v3276 = vpop.f32.mrb[0].mxu0
        %v3277 = vpop.f32.mrb[0].mxu0
        %v3278 = vadd.f32 %v846, %v3277
        %v3279 = vpop.f32.mrb[0].mxu0
        %3280 = vmatprep.mubr.bf16.mxu0 %v1929
        %3281 = vmatmul.mubr.bf16.gmra.mrb[0].mxu0 %v1928
        %v3282 = vpop.f32.mrb[0].mxu0
        %v3283 = vadd.f32 %v846, %v3282
        %v3284 = vpop.f32.mrb[0].mxu0
        %v3285 = vpop.f32.mrb[0].mxu0
        %v3286 = vadd.f32 %v846, %v3285
        %v3287 = vpop.f32.mrb[0].mxu0
        %3288 = vmatprep.mubr.bf16.mxu0 %v1947
        %3289 = vmatmul.mubr.bf16.gmra.mrb[0].mxu0 %v1946
        %v3290 = vpop.f32.mrb[0].mxu0
        %v3291 = vadd.f32 %v846, %v3290
        %v3292 = vpop.f32.mrb[0].mxu0
        %v3293 = vpop.f32.mrb[0].mxu0
        %v3294 = vadd.f32 %v846, %v3293
        %v3295 = vpop.f32.mrb[0].mxu0
        %3296 = vmatprep.mubr.bf16.mxu0 %v1965
        %3297 = vmatmul.mubr.bf16.gmra.mrb[0].mxu0 %v1964
        %v3298 = vpop.f32.mrb[0].mxu0
        %v3299 = vadd.f32 %v846, %v3298
        %v3300 = vpop.f32.mrb[0].mxu0
        %v3301 = vpop.f32.mrb[0].mxu0
        %v3302 = vadd.f32 %v846, %v3301
        %v3303 = vpop.f32.mrb[0].mxu0
        %3304 = vmatprep.mubr.bf16.mxu0 %v1983
        %3305 = vmatmul.mubr.bf16.gmra.mrb[0].mxu0 %v1982
        %v3306 = vpop.f32.mrb[0].mxu0
        %v3307 = vadd.f32 %v846, %v3306
        %v3308 = vpop.f32.mrb[0].mxu0
        %v3309 = vpop.f32.mrb[0].mxu0
        %v3310 = vadd.f32 %v846, %v3309
        %v3311 = vpop.f32.mrb[0].mxu0
        %3312 = vdwg.mxu0
        %3313 = vmatprep.subr.bf16.mxu0 0
        %3314 = vmatpush1.bf16.msra.mxu0 %v2880
        %3315 = vmatprep.subr.bf16.mxu0 0
        %3316 = vmatpush1.bf16.msra.mxu0 %v2881
        %3317 = vmatprep.subr.bf16.mxu0 0
        %3318 = vmatpush1.bf16.msra.mxu0 %v2882
        %3319 = vmatprep.subr.bf16.mxu0 0
        %3320 = vmatpush1.bf16.msra.mxu0 %v2883
        %3321 = vmatprep.subr.bf16.mxu0 0
        %3322 = vmatpush1.bf16.msra.mxu0 %v2884
        %3323 = vmatprep.subr.bf16.mxu0 0
        %3324 = vmatpush1.bf16.msra.mxu0 %v2885
        %3325 = vmatprep.subr.bf16.mxu0 0
        %3326 = vmatpush1.bf16.msra.mxu0 %v2886
        %3327 = vmatprep.subr.bf16.mxu0 0
        %3328 = vmatpush1.bf16.msra.mxu0 %v2887
        %3329 = vmatprep.subr.bf16.mxu0 0
        %3330 = vmatpush1.bf16.msra.mxu0 %v2888
        %3331 = vmatprep.subr.bf16.mxu0 0
        %3332 = vmatpush1.bf16.msra.mxu0 %v2889
        %3333 = vmatprep.subr.bf16.mxu0 0
        %3334 = vmatpush1.bf16.msra.mxu0 %v2890
        %3335 = vmatprep.subr.bf16.mxu0 0
        %3336 = vmatpush1.bf16.msra.mxu0 %v2891
        %3337 = vmatprep.subr.bf16.mxu0 0
        %3338 = vmatpush1.bf16.msra.mxu0 %v2892
        %3339 = vmatprep.subr.bf16.mxu0 0
        %3340 = vmatpush1.bf16.msra.mxu0 %v2893
        %3341 = vmatprep.subr.bf16.mxu0 0
        %3342 = vmatpush1.bf16.msra.mxu0 %v2894
        %3343 = vmatprep.subr.bf16.mxu0 0
        %3344 = vmatpush1.bf16.msra.mxu0 %v2895
        %3345 = vmatprep.mubr.bf16.mxu0 %v1715
        %3346 = vmatmul.mubr.bf16.gmra.mrb[0].mxu0 %v1714
        %v3347 = vpop.f32.mrb[0].mxu0
        %v3348 = vadd.f32 %v3187, %v3347
        %v3349 = vpop.f32.mrb[0].mxu0
        %v3350 = vpop.f32.mrb[0].mxu0
        %v3351 = vadd.f32 %v3190, %v3350
        %v3352 = vpop.f32.mrb[0].mxu0
        %3353 = vmatprep.mubr.bf16.mxu0 %v1733
        %3354 = vmatmul.mubr.bf16.gmra.mrb[0].mxu0 %v1732
        %v3355 = vpop.f32.mrb[0].mxu0
        %v3356 = vadd.f32 %v3195, %v3355
        %v3357 = vpop.f32.mrb[0].mxu0
        %v3358 = vpop.f32.mrb[0].mxu0
        %v3359 = vadd.f32 %v3198, %v3358
        %v3360 = vpop.f32.mrb[0].mxu0
        %3361 = vmatprep.mubr.bf16.mxu0 %v1751
        %3362 = vmatmul.mubr.bf16.gmra.mrb[0].mxu0 %v1750
        %v3363 = vpop.f32.mrb[0].mxu0
        %v3364 = vadd.f32 %v3203, %v3363
        %v3365 = vpop.f32.mrb[0].mxu0
        %v3366 = vpop.f32.mrb[0].mxu0
        %v3367 = vadd.f32 %v3206, %v3366
        %v3368 = vpop.f32.mrb[0].mxu0
        %3369 = vmatprep.mubr.bf16.mxu0 %v1769
        %3370 = vmatmul.mubr.bf16.gmra.mrb[0].mxu0 %v1768
        %v3371 = vpop.f32.mrb[0].mxu0
        %v3372 = vadd.f32 %v3211, %v3371
        %v3373 = vpop.f32.mrb[0].mxu0
        %v3374 = vpop.f32.mrb[0].mxu0
        %v3375 = vadd.f32 %v3214, %v3374
        %v3376 = vpop.f32.mrb[0].mxu0
        %3377 = vmatprep.mubr.bf16.mxu0 %v1787
        %3378 = vmatmul.mubr.bf16.gmra.mrb[0].mxu0 %v1786
        %v3379 = vpop.f32.mrb[0].mxu0
        %v3380 = vadd.f32 %v3219, %v3379
        %v3381 = vpop.f32.mrb[0].mxu0
        %v3382 = vpop.f32.mrb[0].mxu0
        %v3383 = vadd.f32 %v3222, %v3382
        %v3384 = vpop.f32.mrb[0].mxu0
        %3385 = vmatprep.mubr.bf16.mxu0 %v1805
        %3386 = vmatmul.mubr.bf16.gmra.mrb[0].mxu0 %v1804
        %v3387 = vpop.f32.mrb[0].mxu0
        %v3388 = vadd.f32 %v3227, %v3387
        %v3389 = vpop.f32.mrb[0].mxu0
        %v3390 = vpop.f32.mrb[0].mxu0
        %v3391 = vadd.f32 %v3230, %v3390
        %v3392 = vpop.f32.mrb[0].mxu0
        %3393 = vmatprep.mubr.bf16.mxu0 %v1823
        %3394 = vmatmul.mubr.bf16.gmra.mrb[0].mxu0 %v1822
        %v3395 = vpop.f32.mrb[0].mxu0
        %v3396 = vadd.f32 %v3235, %v3395
        %v3397 = vpop.f32.mrb[0].mxu0
        %v3398 = vpop.f32.mrb[0].mxu0
        %v3399 = vadd.f32 %v3238, %v3398
        %v3400 = vpop.f32.mrb[0].mxu0
        %3401 = vmatprep.mubr.bf16.mxu0 %v1841
        %3402 = vmatmul.mubr.bf16.gmra.mrb[0].mxu0 %v1840
        %v3403 = vpop.f32.mrb[0].mxu0
        %v3404 = vadd.f32 %v3243, %v3403
        %v3405 = vpop.f32.mrb[0].mxu0
        %v3406 = vpop.f32.mrb[0].mxu0
        %v3407 = vadd.f32 %v3246, %v3406
        %v3408 = vpop.f32.mrb[0].mxu0
        %3409 = vmatprep.mubr.bf16.mxu0 %v1859
        %3410 = vmatmul.mubr.bf16.gmra.mrb[0].mxu0 %v1858
        %v3411 = vpop.f32.mrb[0].mxu0
        %v3412 = vadd.f32 %v3251, %v3411
        %v3413 = vpop.f32.mrb[0].mxu0
        %v3414 = vpop.f32.mrb[0].mxu0
        %v3415 = vadd.f32 %v3254, %v3414
        %v3416 = vpop.f32.mrb[0].mxu0
        %3417 = vmatprep.mubr.bf16.mxu0 %v1877
        %3418 = vmatmul.mubr.bf16.gmra.mrb[0].mxu0 %v1876
        %v3419 = vpop.f32.mrb[0].mxu0
        %v3420 = vadd.f32 %v3259, %v3419
        %v3421 = vpop.f32.mrb[0].mxu0
        %v3422 = vpop.f32.mrb[0].mxu0
        %v3423 = vadd.f32 %v3262, %v3422
        %v3424 = vpop.f32.mrb[0].mxu0
        %3425 = vmatprep.mubr.bf16.mxu0 %v1895
        %3426 = vmatmul.mubr.bf16.gmra.mrb[0].mxu0 %v1894
        %v3427 = vpop.f32.mrb[0].mxu0
        %v3428 = vadd.f32 %v3267, %v3427
        %v3429 = vpop.f32.mrb[0].mxu0
        %v3430 = vpop.f32.mrb[0].mxu0
        %v3431 = vadd.f32 %v3270, %v3430
        %v3432 = vpop.f32.mrb[0].mxu0
        %3433 = vmatprep.mubr.bf16.mxu0 %v1913
        %3434 = vmatmul.mubr.bf16.gmra.mrb[0].mxu0 %v1912
        %v3435 = vpop.f32.mrb[0].mxu0
        %v3436 = vadd.f32 %v3275, %v3435
        %v3437 = vpop.f32.mrb[0].mxu0
        %v3438 = vpop.f32.mrb[0].mxu0
        %v3439 = vadd.f32 %v3278, %v3438
        %v3440 = vpop.f32.mrb[0].mxu0
        %3441 = vmatprep.mubr.bf16.mxu0 %v1931
        %3442 = vmatmul.mubr.bf16.gmra.mrb[0].mxu0 %v1930
        %v3443 = vpop.f32.mrb[0].mxu0
        %v3444 = vadd.f32 %v3283, %v3443
        %v3445 = vpop.f32.mrb[0].mxu0
        %v3446 = vpop.f32.mrb[0].mxu0
        %v3447 = vadd.f32 %v3286, %v3446
        %v3448 = vpop.f32.mrb[0].mxu0
        %3449 = vmatprep.mubr.bf16.mxu0 %v1949
        %3450 = vmatmul.mubr.bf16.gmra.mrb[0].mxu0 %v1948
        %v3451 = vpop.f32.mrb[0].mxu0
        %v3452 = vadd.f32 %v3291, %v3451
        %v3453 = vpop.f32.mrb[0].mxu0
        %v3454 = vpop.f32.mrb[0].mxu0
        %v3455 = vadd.f32 %v3294, %v3454
        %v3456 = vpop.f32.mrb[0].mxu0
        %3457 = vmatprep.mubr.bf16.mxu0 %v1967
        %3458 = vmatmul.mubr.bf16.gmra.mrb[0].mxu0 %v1966
        %v3459 = vpop.f32.mrb[0].mxu0
        %v3460 = vadd.f32 %v3299, %v3459
        %v3461 = vpop.f32.mrb[0].mxu0
        %v3462 = vpop.f32.mrb[0].mxu0
        %v3463 = vadd.f32 %v3302, %v3462
        %v3464 = vpop.f32.mrb[0].mxu0
        %3465 = vmatprep.mubr.bf16.mxu0 %v1985
        %3466 = vmatmul.mubr.bf16.gmra.mrb[0].mxu0 %v1984
        %v3467 = vpop.f32.mrb[0].mxu0
        %v3468 = vadd.f32 %v3307, %v3467
        %v3469 = vpop.f32.mrb[0].mxu0
        %v3470 = vpop.f32.mrb[0].mxu0
        %v3471 = vadd.f32 %v3310, %v3470
        %v3472 = vpop.f32.mrb[0].mxu0
        %3473 = vdwg.mxu0
        %3474 = vmatprep.subr.bf16.mxu0 0
        %3475 = vmatpush1.bf16.msra.mxu0 %v2896
        %3476 = vmatprep.subr.bf16.mxu0 0
        %3477 = vmatpush1.bf16.msra.mxu0 %v2897
        %3478 = vmatprep.subr.bf16.mxu0 0
        %3479 = vmatpush1.bf16.msra.mxu0 %v2898
        %3480 = vmatprep.subr.bf16.mxu0 0
        %3481 = vmatpush1.bf16.msra.mxu0 %v2899
        %3482 = vmatprep.subr.bf16.mxu0 0
        %3483 = vmatpush1.bf16.msra.mxu0 %v2900
        %3484 = vmatprep.subr.bf16.mxu0 0
        %3485 = vmatpush1.bf16.msra.mxu0 %v2901
        %3486 = vmatprep.subr.bf16.mxu0 0
        %3487 = vmatpush1.bf16.msra.mxu0 %v2902
        %3488 = vmatprep.subr.bf16.mxu0 0
        %3489 = vmatpush1.bf16.msra.mxu0 %v2903
        %3490 = vmatprep.subr.bf16.mxu0 0
        %3491 = vmatpush1.bf16.msra.mxu0 %v2904
        %3492 = vmatprep.subr.bf16.mxu0 0
        %3493 = vmatpush1.bf16.msra.mxu0 %v2905
        %3494 = vmatprep.subr.bf16.mxu0 0
        %3495 = vmatpush1.bf16.msra.mxu0 %v2906
        %3496 = vmatprep.subr.bf16.mxu0 0
        %3497 = vmatpush1.bf16.msra.mxu0 %v2907
        %3498 = vmatprep.subr.bf16.mxu0 0
        %3499 = vmatpush1.bf16.msra.mxu0 %v2908
        %3500 = vmatprep.subr.bf16.mxu0 0
        %3501 = vmatpush1.bf16.msra.mxu0 %v2909
        %3502 = vmatprep.subr.bf16.mxu0 0
        %3503 = vmatpush1.bf16.msra.mxu0 %v2910
        %3504 = vmatprep.subr.bf16.mxu0 0
        %3505 = vmatpush1.bf16.msra.mxu0 %v2911
        %3506 = vmatprep.mubr.bf16.mxu0 %v1717
        %3507 = vmatmul.mubr.bf16.gmra.mrb[0].mxu0 %v1716
        %v3508 = vpop.f32.mrb[0].mxu0
        %v3509 = vadd.f32 %v3348, %v3508
        %v3510 = vpop.f32.mrb[0].mxu0
        %v3511 = vpop.f32.mrb[0].mxu0
        %v3512 = vadd.f32 %v3351, %v3511
        %v3513 = vpop.f32.mrb[0].mxu0
        %3514 = vmatprep.mubr.bf16.mxu0 %v1735
        %3515 = vmatmul.mubr.bf16.gmra.mrb[0].mxu0 %v1734
        %v3516 = vpop.f32.mrb[0].mxu0
        %v3517 = vadd.f32 %v3356, %v3516
        %v3518 = vpop.f32.mrb[0].mxu0
        %v3519 = vpop.f32.mrb[0].mxu0
        %v3520 = vadd.f32 %v3359, %v3519
        %v3521 = vpop.f32.mrb[0].mxu0
        %3522 = vmatprep.mubr.bf16.mxu0 %v1753
        %3523 = vmatmul.mubr.bf16.gmra.mrb[0].mxu0 %v1752
        %v3524 = vpop.f32.mrb[0].mxu0
        %v3525 = vadd.f32 %v3364, %v3524
        %v3526 = vpop.f32.mrb[0].mxu0
        %v3527 = vpop.f32.mrb[0].mxu0
        %v3528 = vadd.f32 %v3367, %v3527
        %v3529 = vpop.f32.mrb[0].mxu0
        %3530 = vmatprep.mubr.bf16.mxu0 %v1771
        %3531 = vmatmul.mubr.bf16.gmra.mrb[0].mxu0 %v1770
        %v3532 = vpop.f32.mrb[0].mxu0
        %v3533 = vadd.f32 %v3372, %v3532
        %v3534 = vpop.f32.mrb[0].mxu0
        %v3535 = vpop.f32.mrb[0].mxu0
        %v3536 = vadd.f32 %v3375, %v3535
        %v3537 = vpop.f32.mrb[0].mxu0
        %3538 = vmatprep.mubr.bf16.mxu0 %v1789
        %3539 = vmatmul.mubr.bf16.gmra.mrb[0].mxu0 %v1788
        %v3540 = vpop.f32.mrb[0].mxu0
        %v3541 = vadd.f32 %v3380, %v3540
        %v3542 = vpop.f32.mrb[0].mxu0
        %v3543 = vpop.f32.mrb[0].mxu0
        %v3544 = vadd.f32 %v3383, %v3543
        %v3545 = vpop.f32.mrb[0].mxu0
        %3546 = vmatprep.mubr.bf16.mxu0 %v1807
        %3547 = vmatmul.mubr.bf16.gmra.mrb[0].mxu0 %v1806
        %v3548 = vpop.f32.mrb[0].mxu0
        %v3549 = vadd.f32 %v3388, %v3548
        %v3550 = vpop.f32.mrb[0].mxu0
        %v3551 = vpop.f32.mrb[0].mxu0
        %v3552 = vadd.f32 %v3391, %v3551
        %v3553 = vpop.f32.mrb[0].mxu0
        %3554 = vmatprep.mubr.bf16.mxu0 %v1825
        %3555 = vmatmul.mubr.bf16.gmra.mrb[0].mxu0 %v1824
        %v3556 = vpop.f32.mrb[0].mxu0
        %v3557 = vadd.f32 %v3396, %v3556
        %v3558 = vpop.f32.mrb[0].mxu0
        %v3559 = vpop.f32.mrb[0].mxu0
        %v3560 = vadd.f32 %v3399, %v3559
        %v3561 = vpop.f32.mrb[0].mxu0
        %3562 = vmatprep.mubr.bf16.mxu0 %v1843
        %3563 = vmatmul.mubr.bf16.gmra.mrb[0].mxu0 %v1842
        %v3564 = vpop.f32.mrb[0].mxu0
        %v3565 = vadd.f32 %v3404, %v3564
        %v3566 = vpop.f32.mrb[0].mxu0
        %v3567 = vpop.f32.mrb[0].mxu0
        %v3568 = vadd.f32 %v3407, %v3567
        %v3569 = vpop.f32.mrb[0].mxu0
        %3570 = vmatprep.mubr.bf16.mxu0 %v1861
        %3571 = vmatmul.mubr.bf16.gmra.mrb[0].mxu0 %v1860
        %v3572 = vpop.f32.mrb[0].mxu0
        %v3573 = vadd.f32 %v3412, %v3572
        %v3574 = vpop.f32.mrb[0].mxu0
        %v3575 = vpop.f32.mrb[0].mxu0
        %v3576 = vadd.f32 %v3415, %v3575
        %v3577 = vpop.f32.mrb[0].mxu0
        %3578 = vmatprep.mubr.bf16.mxu0 %v1879
        %3579 = vmatmul.mubr.bf16.gmra.mrb[0].mxu0 %v1878
        %v3580 = vpop.f32.mrb[0].mxu0
        %v3581 = vadd.f32 %v3420, %v3580
        %v3582 = vpop.f32.mrb[0].mxu0
        %v3583 = vpop.f32.mrb[0].mxu0
        %v3584 = vadd.f32 %v3423, %v3583
        %v3585 = vpop.f32.mrb[0].mxu0
        %3586 = vmatprep.mubr.bf16.mxu0 %v1897
        %3587 = vmatmul.mubr.bf16.gmra.mrb[0].mxu0 %v1896
        %v3588 = vpop.f32.mrb[0].mxu0
        %v3589 = vadd.f32 %v3428, %v3588
        %v3590 = vpop.f32.mrb[0].mxu0
        %v3591 = vpop.f32.mrb[0].mxu0
        %v3592 = vadd.f32 %v3431, %v3591
        %v3593 = vpop.f32.mrb[0].mxu0
        %3594 = vmatprep.mubr.bf16.mxu0 %v1915
        %3595 = vmatmul.mubr.bf16.gmra.mrb[0].mxu0 %v1914
        %v3596 = vpop.f32.mrb[0].mxu0
        %v3597 = vadd.f32 %v3436, %v3596
        %v3598 = vpop.f32.mrb[0].mxu0
        %v3599 = vpop.f32.mrb[0].mxu0
        %v3600 = vadd.f32 %v3439, %v3599
        %v3601 = vpop.f32.mrb[0].mxu0
        %3602 = vmatprep.mubr.bf16.mxu0 %v1933
        %3603 = vmatmul.mubr.bf16.gmra.mrb[0].mxu0 %v1932
        %v3604 = vpop.f32.mrb[0].mxu0
        %v3605 = vadd.f32 %v3444, %v3604
        %v3606 = vpop.f32.mrb[0].mxu0
        %v3607 = vpop.f32.mrb[0].mxu0
        %v3608 = vadd.f32 %v3447, %v3607
        %v3609 = vpop.f32.mrb[0].mxu0
        %3610 = vmatprep.mubr.bf16.mxu0 %v1951
        %3611 = vmatmul.mubr.bf16.gmra.mrb[0].mxu0 %v1950
        %v3612 = vpop.f32.mrb[0].mxu0
        %v3613 = vadd.f32 %v3452, %v3612
        %v3614 = vpop.f32.mrb[0].mxu0
        %v3615 = vpop.f32.mrb[0].mxu0
        %v3616 = vadd.f32 %v3455, %v3615
        %v3617 = vpop.f32.mrb[0].mxu0
        %3618 = vmatprep.mubr.bf16.mxu0 %v1969
        %3619 = vmatmul.mubr.bf16.gmra.mrb[0].mxu0 %v1968
        %v3620 = vpop.f32.mrb[0].mxu0
        %v3621 = vadd.f32 %v3460, %v3620
        %v3622 = vpop.f32.mrb[0].mxu0
        %v3623 = vpop.f32.mrb[0].mxu0
        %v3624 = vadd.f32 %v3463, %v3623
        %v3625 = vpop.f32.mrb[0].mxu0
        %3626 = vmatprep.mubr.bf16.mxu0 %v1987
        %3627 = vmatmul.mubr.bf16.gmra.mrb[0].mxu0 %v1986
        %v3628 = vpop.f32.mrb[0].mxu0
        %v3629 = vadd.f32 %v3468, %v3628
        %v3630 = vpop.f32.mrb[0].mxu0
        %v3631 = vpop.f32.mrb[0].mxu0
        %v3632 = vadd.f32 %v3471, %v3631
        %v3633 = vpop.f32.mrb[0].mxu0
        %3634 = vdwg.mxu0
        %3635 = vmatprep.subr.bf16.mxu0 0
        %3636 = vmatpush1.bf16.msra.mxu0 %v2912
        %3637 = vmatprep.subr.bf16.mxu0 0
        %3638 = vmatpush1.bf16.msra.mxu0 %v2913
        %3639 = vmatprep.subr.bf16.mxu0 0
        %3640 = vmatpush1.bf16.msra.mxu0 %v2914
        %3641 = vmatprep.subr.bf16.mxu0 0
        %3642 = vmatpush1.bf16.msra.mxu0 %v2915
        %3643 = vmatprep.subr.bf16.mxu0 0
        %3644 = vmatpush1.bf16.msra.mxu0 %v2916
        %3645 = vmatprep.subr.bf16.mxu0 0
        %3646 = vmatpush1.bf16.msra.mxu0 %v2917
        %3647 = vmatprep.subr.bf16.mxu0 0
        %3648 = vmatpush1.bf16.msra.mxu0 %v2918
        %3649 = vmatprep.subr.bf16.mxu0 0
        %3650 = vmatpush1.bf16.msra.mxu0 %v2919
        %3651 = vmatprep.subr.bf16.mxu0 0
        %3652 = vmatpush1.bf16.msra.mxu0 %v2920
        %3653 = vmatprep.subr.bf16.mxu0 0
        %3654 = vmatpush1.bf16.msra.mxu0 %v2921
        %3655 = vmatprep.subr.bf16.mxu0 0
        %3656 = vmatpush1.bf16.msra.mxu0 %v2922
        %3657 = vmatprep.subr.bf16.mxu0 0
        %3658 = vmatpush1.bf16.msra.mxu0 %v2923
        %3659 = vmatprep.subr.bf16.mxu0 0
        %3660 = vmatpush1.bf16.msra.mxu0 %v2924
        %3661 = vmatprep.subr.bf16.mxu0 0
        %3662 = vmatpush1.bf16.msra.mxu0 %v2925
        %3663 = vmatprep.subr.bf16.mxu0 0
        %3664 = vmatpush1.bf16.msra.mxu0 %v2926
        %3665 = vmatprep.subr.bf16.mxu0 0
        %3666 = vmatpush1.bf16.msra.mxu0 %v2927
        %3667 = vmatprep.mubr.bf16.mxu0 %v1719
        %3668 = vmatmul.mubr.bf16.gmra.mrb[0].mxu0 %v1718
        %v3669 = vpop.f32.mrb[0].mxu0
        %v3670 = vadd.f32 %v3509, %v3669
        %v3671 = vpop.f32.mrb[0].mxu0
        %v3672 = vpop.f32.mrb[0].mxu0
        %v3673 = vadd.f32 %v3512, %v3672
        %v3674 = vpop.f32.mrb[0].mxu0
        %3675 = vmatprep.mubr.bf16.mxu0 %v1737
        %3676 = vmatmul.mubr.bf16.gmra.mrb[0].mxu0 %v1736
        %v3677 = vpop.f32.mrb[0].mxu0
        %v3678 = vadd.f32 %v3517, %v3677
        %v3679 = vpop.f32.mrb[0].mxu0
        %v3680 = vpop.f32.mrb[0].mxu0
        %v3681 = vadd.f32 %v3520, %v3680
        %v3682 = vpop.f32.mrb[0].mxu0
        %3683 = vmatprep.mubr.bf16.mxu0 %v1755
        %3684 = vmatmul.mubr.bf16.gmra.mrb[0].mxu0 %v1754
        %v3685 = vpop.f32.mrb[0].mxu0
        %v3686 = vadd.f32 %v3525, %v3685
        %v3687 = vpop.f32.mrb[0].mxu0
        %v3688 = vpop.f32.mrb[0].mxu0
        %v3689 = vadd.f32 %v3528, %v3688
        %v3690 = vpop.f32.mrb[0].mxu0
        %3691 = vmatprep.mubr.bf16.mxu0 %v1773
        %3692 = vmatmul.mubr.bf16.gmra.mrb[0].mxu0 %v1772
        %v3693 = vpop.f32.mrb[0].mxu0
        %v3694 = vadd.f32 %v3533, %v3693
        %v3695 = vpop.f32.mrb[0].mxu0
        %v3696 = vpop.f32.mrb[0].mxu0
        %v3697 = vadd.f32 %v3536, %v3696
        %v3698 = vpop.f32.mrb[0].mxu0
        %3699 = vmatprep.mubr.bf16.mxu0 %v1791
        %3700 = vmatmul.mubr.bf16.gmra.mrb[0].mxu0 %v1790
        %v3701 = vpop.f32.mrb[0].mxu0
        %v3702 = vadd.f32 %v3541, %v3701
        %v3703 = vpop.f32.mrb[0].mxu0
        %v3704 = vpop.f32.mrb[0].mxu0
        %v3705 = vadd.f32 %v3544, %v3704
        %v3706 = vpop.f32.mrb[0].mxu0
        %3707 = vmatprep.mubr.bf16.mxu0 %v1809
        %3708 = vmatmul.mubr.bf16.gmra.mrb[0].mxu0 %v1808
        %v3709 = vpop.f32.mrb[0].mxu0
        %v3710 = vadd.f32 %v3549, %v3709
        %v3711 = vpop.f32.mrb[0].mxu0
        %v3712 = vpop.f32.mrb[0].mxu0
        %v3713 = vadd.f32 %v3552, %v3712
        %v3714 = vpop.f32.mrb[0].mxu0
        %3715 = vmatprep.mubr.bf16.mxu0 %v1827
        %3716 = vmatmul.mubr.bf16.gmra.mrb[0].mxu0 %v1826
        %v3717 = vpop.f32.mrb[0].mxu0
        %v3718 = vadd.f32 %v3557, %v3717
        %v3719 = vpop.f32.mrb[0].mxu0
        %v3720 = vpop.f32.mrb[0].mxu0
        %v3721 = vadd.f32 %v3560, %v3720
        %v3722 = vpop.f32.mrb[0].mxu0
        %3723 = vmatprep.mubr.bf16.mxu0 %v1845
        %3724 = vmatmul.mubr.bf16.gmra.mrb[0].mxu0 %v1844
        %v3725 = vpop.f32.mrb[0].mxu0
        %v3726 = vadd.f32 %v3565, %v3725
        %v3727 = vpop.f32.mrb[0].mxu0
        %v3728 = vpop.f32.mrb[0].mxu0
        %v3729 = vadd.f32 %v3568, %v3728
        %v3730 = vpop.f32.mrb[0].mxu0
        %3731 = vmatprep.mubr.bf16.mxu0 %v1863
        %3732 = vmatmul.mubr.bf16.gmra.mrb[0].mxu0 %v1862
        %v3733 = vpop.f32.mrb[0].mxu0
        %v3734 = vadd.f32 %v3573, %v3733
        %v3735 = vpop.f32.mrb[0].mxu0
        %v3736 = vpop.f32.mrb[0].mxu0
        %v3737 = vadd.f32 %v3576, %v3736
        %v3738 = vpop.f32.mrb[0].mxu0
        %3739 = vmatprep.mubr.bf16.mxu0 %v1881
        %3740 = vmatmul.mubr.bf16.gmra.mrb[0].mxu0 %v1880
        %v3741 = vpop.f32.mrb[0].mxu0
        %v3742 = vadd.f32 %v3581, %v3741
        %v3743 = vpop.f32.mrb[0].mxu0
        %v3744 = vpop.f32.mrb[0].mxu0
        %v3745 = vadd.f32 %v3584, %v3744
        %v3746 = vpop.f32.mrb[0].mxu0
        %3747 = vmatprep.mubr.bf16.mxu0 %v1899
        %3748 = vmatmul.mubr.bf16.gmra.mrb[0].mxu0 %v1898
        %v3749 = vpop.f32.mrb[0].mxu0
        %v3750 = vadd.f32 %v3589, %v3749
        %v3751 = vpop.f32.mrb[0].mxu0
        %v3752 = vpop.f32.mrb[0].mxu0
        %v3753 = vadd.f32 %v3592, %v3752
        %v3754 = vpop.f32.mrb[0].mxu0
        %3755 = vmatprep.mubr.bf16.mxu0 %v1917
        %3756 = vmatmul.mubr.bf16.gmra.mrb[0].mxu0 %v1916
        %v3757 = vpop.f32.mrb[0].mxu0
        %v3758 = vadd.f32 %v3597, %v3757
        %v3759 = vpop.f32.mrb[0].mxu0
        %v3760 = vpop.f32.mrb[0].mxu0
        %v3761 = vadd.f32 %v3600, %v3760
        %v3762 = vpop.f32.mrb[0].mxu0
        %3763 = vmatprep.mubr.bf16.mxu0 %v1935
        %3764 = vmatmul.mubr.bf16.gmra.mrb[0].mxu0 %v1934
        %v3765 = vpop.f32.mrb[0].mxu0
        %v3766 = vadd.f32 %v3605, %v3765
        %v3767 = vpop.f32.mrb[0].mxu0
        %v3768 = vpop.f32.mrb[0].mxu0
        %v3769 = vadd.f32 %v3608, %v3768
        %v3770 = vpop.f32.mrb[0].mxu0
        %3771 = vmatprep.mubr.bf16.mxu0 %v1953
        %3772 = vmatmul.mubr.bf16.gmra.mrb[0].mxu0 %v1952
        %v3773 = vpop.f32.mrb[0].mxu0
        %v3774 = vadd.f32 %v3613, %v3773
        %v3775 = vpop.f32.mrb[0].mxu0
        %v3776 = vpop.f32.mrb[0].mxu0
        %v3777 = vadd.f32 %v3616, %v3776
        %v3778 = vpop.f32.mrb[0].mxu0
        %3779 = vmatprep.mubr.bf16.mxu0 %v1971
        %3780 = vmatmul.mubr.bf16.gmra.mrb[0].mxu0 %v1970
        %v3781 = vpop.f32.mrb[0].mxu0
        %v3782 = vadd.f32 %v3621, %v3781
        %v3783 = vpop.f32.mrb[0].mxu0
        %v3784 = vpop.f32.mrb[0].mxu0
        %v3785 = vadd.f32 %v3624, %v3784
        %v3786 = vpop.f32.mrb[0].mxu0
        %3787 = vmatprep.mubr.bf16.mxu0 %v1989
        %3788 = vmatmul.mubr.bf16.gmra.mrb[0].mxu0 %v1988
        %v3789 = vpop.f32.mrb[0].mxu0
        %v3790 = vadd.f32 %v3629, %v3789
        %v3791 = vpop.f32.mrb[0].mxu0
        %v3792 = vpop.f32.mrb[0].mxu0
        %v3793 = vadd.f32 %v3632, %v3792
        %v3794 = vpop.f32.mrb[0].mxu0
        %3795 = vdwg.mxu0
        %3796 = vmatprep.subr.bf16.mxu0 0
        %3797 = vmatpush1.bf16.msra.mxu0 %v2928
        %3798 = vmatprep.subr.bf16.mxu0 0
        %3799 = vmatpush1.bf16.msra.mxu0 %v2929
        %3800 = vmatprep.subr.bf16.mxu0 0
        %3801 = vmatpush1.bf16.msra.mxu0 %v2930
        %3802 = vmatprep.subr.bf16.mxu0 0
        %3803 = vmatpush1.bf16.msra.mxu0 %v2931
        %3804 = vmatprep.subr.bf16.mxu0 0
        %3805 = vmatpush1.bf16.msra.mxu0 %v2932
        %3806 = vmatprep.subr.bf16.mxu0 0
        %3807 = vmatpush1.bf16.msra.mxu0 %v2933
        %3808 = vmatprep.subr.bf16.mxu0 0
        %3809 = vmatpush1.bf16.msra.mxu0 %v2934
        %3810 = vmatprep.subr.bf16.mxu0 0
        %3811 = vmatpush1.bf16.msra.mxu0 %v2935
        %3812 = vmatprep.subr.bf16.mxu0 0
        %3813 = vmatpush1.bf16.msra.mxu0 %v2936
        %3814 = vmatprep.subr.bf16.mxu0 0
        %3815 = vmatpush1.bf16.msra.mxu0 %v2937
        %3816 = vmatprep.subr.bf16.mxu0 0
        %3817 = vmatpush1.bf16.msra.mxu0 %v2938
        %3818 = vmatprep.subr.bf16.mxu0 0
        %3819 = vmatpush1.bf16.msra.mxu0 %v2939
        %3820 = vmatprep.subr.bf16.mxu0 0
        %3821 = vmatpush1.bf16.msra.mxu0 %v2940
        %3822 = vmatprep.subr.bf16.mxu0 0
        %3823 = vmatpush1.bf16.msra.mxu0 %v2941
        %3824 = vmatprep.subr.bf16.mxu0 0
        %3825 = vmatpush1.bf16.msra.mxu0 %v2942
        %3826 = vmatprep.subr.bf16.mxu0 0
        %3827 = vmatpush1.bf16.msra.mxu0 %v2943
        %3828 = vmatprep.mubr.bf16.mxu0 %v1721
        %3829 = vmatmul.mubr.bf16.gmra.mrb[0].mxu0 %v1720
        %v3830 = vpop.f32.mrb[0].mxu0
        %v3831 = vadd.f32 %v3670, %v3830
        %v3832 = vpop.f32.mrb[0].mxu0
        %v3833 = vpop.f32.mrb[0].mxu0
        %v3834 = vadd.f32 %v3673, %v3833
        %v3835 = vpop.f32.mrb[0].mxu0
        %3836 = vmatprep.mubr.bf16.mxu0 %v1739
        %3837 = vmatmul.mubr.bf16.gmra.mrb[0].mxu0 %v1738
        %v3838 = vpop.f32.mrb[0].mxu0
        %v3839 = vadd.f32 %v3678, %v3838
        %v3840 = vpop.f32.mrb[0].mxu0
        %v3841 = vpop.f32.mrb[0].mxu0
        %v3842 = vadd.f32 %v3681, %v3841
        %v3843 = vpop.f32.mrb[0].mxu0
        %3844 = vmatprep.mubr.bf16.mxu0 %v1757
        %3845 = vmatmul.mubr.bf16.gmra.mrb[0].mxu0 %v1756
        %v3846 = vpop.f32.mrb[0].mxu0
        %v3847 = vadd.f32 %v3686, %v3846
        %v3848 = vpop.f32.mrb[0].mxu0
        %v3849 = vpop.f32.mrb[0].mxu0
        %v3850 = vadd.f32 %v3689, %v3849
        %v3851 = vpop.f32.mrb[0].mxu0
        %3852 = vmatprep.mubr.bf16.mxu0 %v1775
        %3853 = vmatmul.mubr.bf16.gmra.mrb[0].mxu0 %v1774
        %v3854 = vpop.f32.mrb[0].mxu0
        %v3855 = vadd.f32 %v3694, %v3854
        %v3856 = vpop.f32.mrb[0].mxu0
        %v3857 = vpop.f32.mrb[0].mxu0
        %v3858 = vadd.f32 %v3697, %v3857
        %v3859 = vpop.f32.mrb[0].mxu0
        %3860 = vmatprep.mubr.bf16.mxu0 %v1793
        %3861 = vmatmul.mubr.bf16.gmra.mrb[0].mxu0 %v1792
        %v3862 = vpop.f32.mrb[0].mxu0
        %v3863 = vadd.f32 %v3702, %v3862
        %v3864 = vpop.f32.mrb[0].mxu0
        %v3865 = vpop.f32.mrb[0].mxu0
        %v3866 = vadd.f32 %v3705, %v3865
        %v3867 = vpop.f32.mrb[0].mxu0
        %3868 = vmatprep.mubr.bf16.mxu0 %v1811
        %3869 = vmatmul.mubr.bf16.gmra.mrb[0].mxu0 %v1810
        %v3870 = vpop.f32.mrb[0].mxu0
        %v3871 = vadd.f32 %v3710, %v3870
        %v3872 = vpop.f32.mrb[0].mxu0
        %v3873 = vpop.f32.mrb[0].mxu0
        %v3874 = vadd.f32 %v3713, %v3873
        %v3875 = vpop.f32.mrb[0].mxu0
        %3876 = vmatprep.mubr.bf16.mxu0 %v1829
        %3877 = vmatmul.mubr.bf16.gmra.mrb[0].mxu0 %v1828
        %v3878 = vpop.f32.mrb[0].mxu0
        %v3879 = vadd.f32 %v3718, %v3878
        %v3880 = vpop.f32.mrb[0].mxu0
        %v3881 = vpop.f32.mrb[0].mxu0
        %v3882 = vadd.f32 %v3721, %v3881
        %v3883 = vpop.f32.mrb[0].mxu0
        %3884 = vmatprep.mubr.bf16.mxu0 %v1847
        %3885 = vmatmul.mubr.bf16.gmra.mrb[0].mxu0 %v1846
        %v3886 = vpop.f32.mrb[0].mxu0
        %v3887 = vadd.f32 %v3726, %v3886
        %v3888 = vpop.f32.mrb[0].mxu0
        %v3889 = vpop.f32.mrb[0].mxu0
        %v3890 = vadd.f32 %v3729, %v3889
        %v3891 = vpop.f32.mrb[0].mxu0
        %3892 = vmatprep.mubr.bf16.mxu0 %v1865
        %3893 = vmatmul.mubr.bf16.gmra.mrb[0].mxu0 %v1864
        %v3894 = vpop.f32.mrb[0].mxu0
        %v3895 = vadd.f32 %v3734, %v3894
        %v3896 = vpop.f32.mrb[0].mxu0
        %v3897 = vpop.f32.mrb[0].mxu0
        %v3898 = vadd.f32 %v3737, %v3897
        %v3899 = vpop.f32.mrb[0].mxu0
        %3900 = vmatprep.mubr.bf16.mxu0 %v1883
        %3901 = vmatmul.mubr.bf16.gmra.mrb[0].mxu0 %v1882
        %v3902 = vpop.f32.mrb[0].mxu0
        %v3903 = vadd.f32 %v3742, %v3902
        %v3904 = vpop.f32.mrb[0].mxu0
        %v3905 = vpop.f32.mrb[0].mxu0
        %v3906 = vadd.f32 %v3745, %v3905
        %v3907 = vpop.f32.mrb[0].mxu0
        %3908 = vmatprep.mubr.bf16.mxu0 %v1901
        %3909 = vmatmul.mubr.bf16.gmra.mrb[0].mxu0 %v1900
        %v3910 = vpop.f32.mrb[0].mxu0
        %v3911 = vadd.f32 %v3750, %v3910
        %v3912 = vpop.f32.mrb[0].mxu0
        %v3913 = vpop.f32.mrb[0].mxu0
        %v3914 = vadd.f32 %v3753, %v3913
        %v3915 = vpop.f32.mrb[0].mxu0
        %3916 = vmatprep.mubr.bf16.mxu0 %v1919
        %3917 = vmatmul.mubr.bf16.gmra.mrb[0].mxu0 %v1918
        %v3918 = vpop.f32.mrb[0].mxu0
        %v3919 = vadd.f32 %v3758, %v3918
        %v3920 = vpop.f32.mrb[0].mxu0
        %v3921 = vpop.f32.mrb[0].mxu0
        %v3922 = vadd.f32 %v3761, %v3921
        %v3923 = vpop.f32.mrb[0].mxu0
        %3924 = vmatprep.mubr.bf16.mxu0 %v1937
        %3925 = vmatmul.mubr.bf16.gmra.mrb[0].mxu0 %v1936
        %v3926 = vpop.f32.mrb[0].mxu0
        %v3927 = vadd.f32 %v3766, %v3926
        %v3928 = vpop.f32.mrb[0].mxu0
        %v3929 = vpop.f32.mrb[0].mxu0
        %v3930 = vadd.f32 %v3769, %v3929
        %v3931 = vpop.f32.mrb[0].mxu0
        %3932 = vmatprep.mubr.bf16.mxu0 %v1955
        %3933 = vmatmul.mubr.bf16.gmra.mrb[0].mxu0 %v1954
        %v3934 = vpop.f32.mrb[0].mxu0
        %v3935 = vadd.f32 %v3774, %v3934
        %v3936 = vpop.f32.mrb[0].mxu0
        %v3937 = vpop.f32.mrb[0].mxu0
        %v3938 = vadd.f32 %v3777, %v3937
        %v3939 = vpop.f32.mrb[0].mxu0
        %3940 = vmatprep.mubr.bf16.mxu0 %v1973
        %3941 = vmatmul.mubr.bf16.gmra.mrb[0].mxu0 %v1972
        %v3942 = vpop.f32.mrb[0].mxu0
        %v3943 = vadd.f32 %v3782, %v3942
        %v3944 = vpop.f32.mrb[0].mxu0
        %v3945 = vpop.f32.mrb[0].mxu0
        %v3946 = vadd.f32 %v3785, %v3945
        %v3947 = vpop.f32.mrb[0].mxu0
        %3948 = vmatprep.mubr.bf16.mxu0 %v1991
        %3949 = vmatmul.mubr.bf16.gmra.mrb[0].mxu0 %v1990
        %v3950 = vpop.f32.mrb[0].mxu0
        %v3951 = vadd.f32 %v3790, %v3950
        %v3952 = vpop.f32.mrb[0].mxu0
        %v3953 = vpop.f32.mrb[0].mxu0
        %v3954 = vadd.f32 %v3793, %v3953
        %v3955 = vpop.f32.mrb[0].mxu0
        %3956 = vdwg.mxu0
        %3957 = vmatprep.subr.bf16.mxu0 0
        %3958 = vmatpush1.bf16.msra.mxu0 %v2944
        %3959 = vmatprep.subr.bf16.mxu0 0
        %3960 = vmatpush1.bf16.msra.mxu0 %v2945
        %3961 = vmatprep.subr.bf16.mxu0 0
        %3962 = vmatpush1.bf16.msra.mxu0 %v2946
        %3963 = vmatprep.subr.bf16.mxu0 0
        %3964 = vmatpush1.bf16.msra.mxu0 %v2947
        %3965 = vmatprep.subr.bf16.mxu0 0
        %3966 = vmatpush1.bf16.msra.mxu0 %v2948
        %3967 = vmatprep.subr.bf16.mxu0 0
        %3968 = vmatpush1.bf16.msra.mxu0 %v2949
        %3969 = vmatprep.subr.bf16.mxu0 0
        %3970 = vmatpush1.bf16.msra.mxu0 %v2950
        %3971 = vmatprep.subr.bf16.mxu0 0
        %3972 = vmatpush1.bf16.msra.mxu0 %v2951
        %3973 = vmatprep.subr.bf16.mxu0 0
        %3974 = vmatpush1.bf16.msra.mxu0 %v2952
        %3975 = vmatprep.subr.bf16.mxu0 0
        %3976 = vmatpush1.bf16.msra.mxu0 %v2953
        %3977 = vmatprep.subr.bf16.mxu0 0
        %3978 = vmatpush1.bf16.msra.mxu0 %v2954
        %3979 = vmatprep.subr.bf16.mxu0 0
        %3980 = vmatpush1.bf16.msra.mxu0 %v2955
        %3981 = vmatprep.subr.bf16.mxu0 0
        %3982 = vmatpush1.bf16.msra.mxu0 %v2956
        %3983 = vmatprep.subr.bf16.mxu0 0
        %3984 = vmatpush1.bf16.msra.mxu0 %v2957
        %3985 = vmatprep.subr.bf16.mxu0 0
        %3986 = vmatpush1.bf16.msra.mxu0 %v2958
        %3987 = vmatprep.subr.bf16.mxu0 0
        %3988 = vmatpush1.bf16.msra.mxu0 %v2959
        %3989 = vmatprep.mubr.bf16.mxu0 %v1723
        %3990 = vmatmul.mubr.bf16.gmra.mrb[0].mxu0 %v1722
        %v3991 = vpop.f32.mrb[0].mxu0
        %v3992 = vadd.f32 %v3831, %v3991
        %v3993 = vpop.f32.mrb[0].mxu0
        %v3994 = vpop.f32.mrb[0].mxu0
        %v3995 = vadd.f32 %v3834, %v3994
        %v3996 = vpop.f32.mrb[0].mxu0
        %3997 = vmatprep.mubr.bf16.mxu0 %v1741
        %3998 = vmatmul.mubr.bf16.gmra.mrb[0].mxu0 %v1740
        %v3999 = vpop.f32.mrb[0].mxu0
        %v4000 = vadd.f32 %v3839, %v3999
        %v4001 = vpop.f32.mrb[0].mxu0
        %v4002 = vpop.f32.mrb[0].mxu0
        %v4003 = vadd.f32 %v3842, %v4002
        %v4004 = vpop.f32.mrb[0].mxu0
        %4005 = vmatprep.mubr.bf16.mxu0 %v1759
        %4006 = vmatmul.mubr.bf16.gmra.mrb[0].mxu0 %v1758
        %v4007 = vpop.f32.mrb[0].mxu0
        %v4008 = vadd.f32 %v3847, %v4007
        %v4009 = vpop.f32.mrb[0].mxu0
        %v4010 = vpop.f32.mrb[0].mxu0
        %v4011 = vadd.f32 %v3850, %v4010
        %v4012 = vpop.f32.mrb[0].mxu0
        %4013 = vmatprep.mubr.bf16.mxu0 %v1777
        %4014 = vmatmul.mubr.bf16.gmra.mrb[0].mxu0 %v1776
        %v4015 = vpop.f32.mrb[0].mxu0
        %v4016 = vadd.f32 %v3855, %v4015
        %v4017 = vpop.f32.mrb[0].mxu0
        %v4018 = vpop.f32.mrb[0].mxu0
        %v4019 = vadd.f32 %v3858, %v4018
        %v4020 = vpop.f32.mrb[0].mxu0
        %4021 = vmatprep.mubr.bf16.mxu0 %v1795
        %4022 = vmatmul.mubr.bf16.gmra.mrb[0].mxu0 %v1794
        %v4023 = vpop.f32.mrb[0].mxu0
        %v4024 = vadd.f32 %v3863, %v4023
        %v4025 = vpop.f32.mrb[0].mxu0
        %v4026 = vpop.f32.mrb[0].mxu0
        %v4027 = vadd.f32 %v3866, %v4026
        %v4028 = vpop.f32.mrb[0].mxu0
        %4029 = vmatprep.mubr.bf16.mxu0 %v1813
        %4030 = vmatmul.mubr.bf16.gmra.mrb[0].mxu0 %v1812
        %v4031 = vpop.f32.mrb[0].mxu0
        %v4032 = vadd.f32 %v3871, %v4031
        %v4033 = vpop.f32.mrb[0].mxu0
        %v4034 = vpop.f32.mrb[0].mxu0
        %v4035 = vadd.f32 %v3874, %v4034
        %v4036 = vpop.f32.mrb[0].mxu0
        %4037 = vmatprep.mubr.bf16.mxu0 %v1831
        %4038 = vmatmul.mubr.bf16.gmra.mrb[0].mxu0 %v1830
        %v4039 = vpop.f32.mrb[0].mxu0
        %v4040 = vadd.f32 %v3879, %v4039
        %v4041 = vpop.f32.mrb[0].mxu0
        %v4042 = vpop.f32.mrb[0].mxu0
        %v4043 = vadd.f32 %v3882, %v4042
        %v4044 = vpop.f32.mrb[0].mxu0
        %4045 = vmatprep.mubr.bf16.mxu0 %v1849
        %4046 = vmatmul.mubr.bf16.gmra.mrb[0].mxu0 %v1848
        %v4047 = vpop.f32.mrb[0].mxu0
        %v4048 = vadd.f32 %v3887, %v4047
        %v4049 = vpop.f32.mrb[0].mxu0
        %v4050 = vpop.f32.mrb[0].mxu0
        %v4051 = vadd.f32 %v3890, %v4050
        %v4052 = vpop.f32.mrb[0].mxu0
        %4053 = vmatprep.mubr.bf16.mxu0 %v1867
        %4054 = vmatmul.mubr.bf16.gmra.mrb[0].mxu0 %v1866
        %v4055 = vpop.f32.mrb[0].mxu0
        %v4056 = vadd.f32 %v3895, %v4055
        %v4057 = vpop.f32.mrb[0].mxu0
        %v4058 = vpop.f32.mrb[0].mxu0
        %v4059 = vadd.f32 %v3898, %v4058
        %v4060 = vpop.f32.mrb[0].mxu0
        %4061 = vmatprep.mubr.bf16.mxu0 %v1885
        %4062 = vmatmul.mubr.bf16.gmra.mrb[0].mxu0 %v1884
        %v4063 = vpop.f32.mrb[0].mxu0
        %v4064 = vadd.f32 %v3903, %v4063
        %v4065 = vpop.f32.mrb[0].mxu0
        %v4066 = vpop.f32.mrb[0].mxu0
        %v4067 = vadd.f32 %v3906, %v4066
        %v4068 = vpop.f32.mrb[0].mxu0
        %4069 = vmatprep.mubr.bf16.mxu0 %v1903
        %4070 = vmatmul.mubr.bf16.gmra.mrb[0].mxu0 %v1902
        %v4071 = vpop.f32.mrb[0].mxu0
        %v4072 = vadd.f32 %v3911, %v4071
        %v4073 = vpop.f32.mrb[0].mxu0
        %v4074 = vpop.f32.mrb[0].mxu0
        %v4075 = vadd.f32 %v3914, %v4074
        %v4076 = vpop.f32.mrb[0].mxu0
        %4077 = vmatprep.mubr.bf16.mxu0 %v1921
        %4078 = vmatmul.mubr.bf16.gmra.mrb[0].mxu0 %v1920
        %v4079 = vpop.f32.mrb[0].mxu0
        %v4080 = vadd.f32 %v3919, %v4079
        %v4081 = vpop.f32.mrb[0].mxu0
        %v4082 = vpop.f32.mrb[0].mxu0
        %v4083 = vadd.f32 %v3922, %v4082
        %v4084 = vpop.f32.mrb[0].mxu0
        %4085 = vmatprep.mubr.bf16.mxu0 %v1939
        %4086 = vmatmul.mubr.bf16.gmra.mrb[0].mxu0 %v1938
        %v4087 = vpop.f32.mrb[0].mxu0
        %v4088 = vadd.f32 %v3927, %v4087
        %v4089 = vpop.f32.mrb[0].mxu0
        %v4090 = vpop.f32.mrb[0].mxu0
        %v4091 = vadd.f32 %v3930, %v4090
        %v4092 = vpop.f32.mrb[0].mxu0
        %4093 = vmatprep.mubr.bf16.mxu0 %v1957
        %4094 = vmatmul.mubr.bf16.gmra.mrb[0].mxu0 %v1956
        %v4095 = vpop.f32.mrb[0].mxu0
        %v4096 = vadd.f32 %v3935, %v4095
        %v4097 = vpop.f32.mrb[0].mxu0
        %v4098 = vpop.f32.mrb[0].mxu0
        %v4099 = vadd.f32 %v3938, %v4098
        %v4100 = vpop.f32.mrb[0].mxu0
        %4101 = vmatprep.mubr.bf16.mxu0 %v1975
        %4102 = vmatmul.mubr.bf16.gmra.mrb[0].mxu0 %v1974
        %v4103 = vpop.f32.mrb[0].mxu0
        %v4104 = vadd.f32 %v3943, %v4103
        %v4105 = vpop.f32.mrb[0].mxu0
        %v4106 = vpop.f32.mrb[0].mxu0
        %v4107 = vadd.f32 %v3946, %v4106
        %v4108 = vpop.f32.mrb[0].mxu0
        %4109 = vmatprep.mubr.bf16.mxu0 %v1993
        %4110 = vmatmul.mubr.bf16.gmra.mrb[0].mxu0 %v1992
        %v4111 = vpop.f32.mrb[0].mxu0
        %v4112 = vadd.f32 %v3951, %v4111
        %v4113 = vpop.f32.mrb[0].mxu0
        %v4114 = vpop.f32.mrb[0].mxu0
        %v4115 = vadd.f32 %v3954, %v4114
        %v4116 = vpop.f32.mrb[0].mxu0
        %4117 = vdwg.mxu0
        %4118 = vmatprep.subr.bf16.mxu0 0
        %4119 = vmatpush1.bf16.msra.mxu0 %v2960
        %4120 = vmatprep.subr.bf16.mxu0 0
        %4121 = vmatpush1.bf16.msra.mxu0 %v2961
        %4122 = vmatprep.subr.bf16.mxu0 0
        %4123 = vmatpush1.bf16.msra.mxu0 %v2962
        %4124 = vmatprep.subr.bf16.mxu0 0
        %4125 = vmatpush1.bf16.msra.mxu0 %v2963
        %4126 = vmatprep.subr.bf16.mxu0 0
        %4127 = vmatpush1.bf16.msra.mxu0 %v2964
        %4128 = vmatprep.subr.bf16.mxu0 0
        %4129 = vmatpush1.bf16.msra.mxu0 %v2965
        %4130 = vmatprep.subr.bf16.mxu0 0
        %4131 = vmatpush1.bf16.msra.mxu0 %v2966
        %4132 = vmatprep.subr.bf16.mxu0 0
        %4133 = vmatpush1.bf16.msra.mxu0 %v2967
        %4134 = vmatprep.subr.bf16.mxu0 0
        %4135 = vmatpush1.bf16.msra.mxu0 %v2968
        %4136 = vmatprep.subr.bf16.mxu0 0
        %4137 = vmatpush1.bf16.msra.mxu0 %v2969
        %4138 = vmatprep.subr.bf16.mxu0 0
        %4139 = vmatpush1.bf16.msra.mxu0 %v2970
        %4140 = vmatprep.subr.bf16.mxu0 0
        %4141 = vmatpush1.bf16.msra.mxu0 %v2971
        %4142 = vmatprep.subr.bf16.mxu0 0
        %4143 = vmatpush1.bf16.msra.mxu0 %v2972
        %4144 = vmatprep.subr.bf16.mxu0 0
        %4145 = vmatpush1.bf16.msra.mxu0 %v2973
        %4146 = vmatprep.subr.bf16.mxu0 0
        %4147 = vmatpush1.bf16.msra.mxu0 %v2974
        %4148 = vmatprep.subr.bf16.mxu0 0
        %4149 = vmatpush1.bf16.msra.mxu0 %v2975
        %4150 = vmatprep.mubr.bf16.mxu0 %v1725
        %4151 = vmatmul.mubr.bf16.gmra.mrb[0].mxu0 %v1724
        %v4152 = vpop.f32.mrb[0].mxu0
        %v4153 = vadd.f32 %v3992, %v4152
        %v4154 = vpop.f32.mrb[0].mxu0
        %v4155 = vpop.f32.mrb[0].mxu0
        %v4156 = vadd.f32 %v3995, %v4155
        %v4157 = vpop.f32.mrb[0].mxu0
        %4158 = vmatprep.mubr.bf16.mxu0 %v1743
        %4159 = vmatmul.mubr.bf16.gmra.mrb[0].mxu0 %v1742
        %v4160 = vpop.f32.mrb[0].mxu0
        %v4161 = vadd.f32 %v4000, %v4160
        %v4162 = vpop.f32.mrb[0].mxu0
        %v4163 = vpop.f32.mrb[0].mxu0
        %v4164 = vadd.f32 %v4003, %v4163
        %v4165 = vpop.f32.mrb[0].mxu0
        %4166 = vmatprep.mubr.bf16.mxu0 %v1761
        %4167 = vmatmul.mubr.bf16.gmra.mrb[0].mxu0 %v1760
        %v4168 = vpop.f32.mrb[0].mxu0
        %v4169 = vadd.f32 %v4008, %v4168
        %v4170 = vpop.f32.mrb[0].mxu0
        %v4171 = vpop.f32.mrb[0].mxu0
        %v4172 = vadd.f32 %v4011, %v4171
        %v4173 = vpop.f32.mrb[0].mxu0
        %4174 = vmatprep.mubr.bf16.mxu0 %v1779
        %4175 = vmatmul.mubr.bf16.gmra.mrb[0].mxu0 %v1778
        %v4176 = vpop.f32.mrb[0].mxu0
        %v4177 = vadd.f32 %v4016, %v4176
        %v4178 = vpop.f32.mrb[0].mxu0
        %v4179 = vpop.f32.mrb[0].mxu0
        %v4180 = vadd.f32 %v4019, %v4179
        %v4181 = vpop.f32.mrb[0].mxu0
        %4182 = vmatprep.mubr.bf16.mxu0 %v1797
        %4183 = vmatmul.mubr.bf16.gmra.mrb[0].mxu0 %v1796
        %v4184 = vpop.f32.mrb[0].mxu0
        %v4185 = vadd.f32 %v4024, %v4184
        %v4186 = vpop.f32.mrb[0].mxu0
        %v4187 = vpop.f32.mrb[0].mxu0
        %v4188 = vadd.f32 %v4027, %v4187
        %v4189 = vpop.f32.mrb[0].mxu0
        %4190 = vmatprep.mubr.bf16.mxu0 %v1815
        %4191 = vmatmul.mubr.bf16.gmra.mrb[0].mxu0 %v1814
        %v4192 = vpop.f32.mrb[0].mxu0
        %v4193 = vadd.f32 %v4032, %v4192
        %v4194 = vpop.f32.mrb[0].mxu0
        %v4195 = vpop.f32.mrb[0].mxu0
        %v4196 = vadd.f32 %v4035, %v4195
        %v4197 = vpop.f32.mrb[0].mxu0
        %4198 = vmatprep.mubr.bf16.mxu0 %v1833
        %4199 = vmatmul.mubr.bf16.gmra.mrb[0].mxu0 %v1832
        %v4200 = vpop.f32.mrb[0].mxu0
        %v4201 = vadd.f32 %v4040, %v4200
        %v4202 = vpop.f32.mrb[0].mxu0
        %v4203 = vpop.f32.mrb[0].mxu0
        %v4204 = vadd.f32 %v4043, %v4203
        %v4205 = vpop.f32.mrb[0].mxu0
        %4206 = vmatprep.mubr.bf16.mxu0 %v1851
        %4207 = vmatmul.mubr.bf16.gmra.mrb[0].mxu0 %v1850
        %v4208 = vpop.f32.mrb[0].mxu0
        %v4209 = vadd.f32 %v4048, %v4208
        %v4210 = vpop.f32.mrb[0].mxu0
        %v4211 = vpop.f32.mrb[0].mxu0
        %v4212 = vadd.f32 %v4051, %v4211
        %v4213 = vpop.f32.mrb[0].mxu0
        %4214 = vmatprep.mubr.bf16.mxu0 %v1869
        %4215 = vmatmul.mubr.bf16.gmra.mrb[0].mxu0 %v1868
        %v4216 = vpop.f32.mrb[0].mxu0
        %v4217 = vadd.f32 %v4056, %v4216
        %v4218 = vpop.f32.mrb[0].mxu0
        %v4219 = vpop.f32.mrb[0].mxu0
        %v4220 = vadd.f32 %v4059, %v4219
        %v4221 = vpop.f32.mrb[0].mxu0
        %4222 = vmatprep.mubr.bf16.mxu0 %v1887
        %4223 = vmatmul.mubr.bf16.gmra.mrb[0].mxu0 %v1886
        %v4224 = vpop.f32.mrb[0].mxu0
        %v4225 = vadd.f32 %v4064, %v4224
        %v4226 = vpop.f32.mrb[0].mxu0
        %v4227 = vpop.f32.mrb[0].mxu0
        %v4228 = vadd.f32 %v4067, %v4227
        %v4229 = vpop.f32.mrb[0].mxu0
        %4230 = vmatprep.mubr.bf16.mxu0 %v1905
        %4231 = vmatmul.mubr.bf16.gmra.mrb[0].mxu0 %v1904
        %v4232 = vpop.f32.mrb[0].mxu0
        %v4233 = vadd.f32 %v4072, %v4232
        %v4234 = vpop.f32.mrb[0].mxu0
        %v4235 = vpop.f32.mrb[0].mxu0
        %v4236 = vadd.f32 %v4075, %v4235
        %v4237 = vpop.f32.mrb[0].mxu0
        %4238 = vmatprep.mubr.bf16.mxu0 %v1923
        %4239 = vmatmul.mubr.bf16.gmra.mrb[0].mxu0 %v1922
        %v4240 = vpop.f32.mrb[0].mxu0
        %v4241 = vadd.f32 %v4080, %v4240
        %v4242 = vpop.f32.mrb[0].mxu0
        %v4243 = vpop.f32.mrb[0].mxu0
        %v4244 = vadd.f32 %v4083, %v4243
        %v4245 = vpop.f32.mrb[0].mxu0
        %4246 = vmatprep.mubr.bf16.mxu0 %v1941
        %4247 = vmatmul.mubr.bf16.gmra.mrb[0].mxu0 %v1940
        %v4248 = vpop.f32.mrb[0].mxu0
        %v4249 = vadd.f32 %v4088, %v4248
        %v4250 = vpop.f32.mrb[0].mxu0
        %v4251 = vpop.f32.mrb[0].mxu0
        %v4252 = vadd.f32 %v4091, %v4251
        %v4253 = vpop.f32.mrb[0].mxu0
        %4254 = vmatprep.mubr.bf16.mxu0 %v1959
        %4255 = vmatmul.mubr.bf16.gmra.mrb[0].mxu0 %v1958
        %v4256 = vpop.f32.mrb[0].mxu0
        %v4257 = vadd.f32 %v4096, %v4256
        %v4258 = vpop.f32.mrb[0].mxu0
        %v4259 = vpop.f32.mrb[0].mxu0
        %v4260 = vadd.f32 %v4099, %v4259
        %v4261 = vpop.f32.mrb[0].mxu0
        %4262 = vmatprep.mubr.bf16.mxu0 %v1977
        %4263 = vmatmul.mubr.bf16.gmra.mrb[0].mxu0 %v1976
        %v4264 = vpop.f32.mrb[0].mxu0
        %v4265 = vadd.f32 %v4104, %v4264
        %v4266 = vpop.f32.mrb[0].mxu0
        %v4267 = vpop.f32.mrb[0].mxu0
        %v4268 = vadd.f32 %v4107, %v4267
        %v4269 = vpop.f32.mrb[0].mxu0
        %4270 = vmatprep.mubr.bf16.mxu0 %v1995
        %4271 = vmatmul.mubr.bf16.gmra.mrb[0].mxu0 %v1994
        %v4272 = vpop.f32.mrb[0].mxu0
        %v4273 = vadd.f32 %v4112, %v4272
        %v4274 = vpop.f32.mrb[0].mxu0
        %v4275 = vpop.f32.mrb[0].mxu0
        %v4276 = vadd.f32 %v4115, %v4275
        %v4277 = vpop.f32.mrb[0].mxu0
        %4278 = vdwg.mxu0
        %4279 = vmatprep.subr.bf16.mxu0 0
        %4280 = vmatpush1.bf16.msra.mxu0 %v2976
        %4281 = vmatprep.subr.bf16.mxu0 0
        %4282 = vmatpush1.bf16.msra.mxu0 %v2977
        %4283 = vmatprep.subr.bf16.mxu0 0
        %4284 = vmatpush1.bf16.msra.mxu0 %v2978
        %4285 = vmatprep.subr.bf16.mxu0 0
        %4286 = vmatpush1.bf16.msra.mxu0 %v2979
        %4287 = vmatprep.subr.bf16.mxu0 0
        %4288 = vmatpush1.bf16.msra.mxu0 %v2980
        %4289 = vmatprep.subr.bf16.mxu0 0
        %4290 = vmatpush1.bf16.msra.mxu0 %v2981
        %4291 = vmatprep.subr.bf16.mxu0 0
        %4292 = vmatpush1.bf16.msra.mxu0 %v2982
        %4293 = vmatprep.subr.bf16.mxu0 0
        %4294 = vmatpush1.bf16.msra.mxu0 %v2983
        %4295 = vmatprep.subr.bf16.mxu0 0
        %4296 = vmatpush1.bf16.msra.mxu0 %v2984
        %4297 = vmatprep.subr.bf16.mxu0 0
        %4298 = vmatpush1.bf16.msra.mxu0 %v2985
        %4299 = vmatprep.subr.bf16.mxu0 0
        %4300 = vmatpush1.bf16.msra.mxu0 %v2986
        %4301 = vmatprep.subr.bf16.mxu0 0
        %4302 = vmatpush1.bf16.msra.mxu0 %v2987
        %4303 = vmatprep.subr.bf16.mxu0 0
        %4304 = vmatpush1.bf16.msra.mxu0 %v2988
        %4305 = vmatprep.subr.bf16.mxu0 0
        %4306 = vmatpush1.bf16.msra.mxu0 %v2989
        %4307 = vmatprep.subr.bf16.mxu0 0
        %4308 = vmatpush1.bf16.msra.mxu0 %v2990
        %4309 = vmatprep.subr.bf16.mxu0 0
        %4310 = vmatpush1.bf16.msra.mxu0 %v2991
        %4311 = vmatprep.mubr.bf16.mxu0 %v1727
        %4312 = vmatmul.mubr.bf16.gmra.mrb[0].mxu0 %v1726
        %v4313 = vpop.f32.mrb[0].mxu0
        %v4314 = vadd.f32 %v4153, %v4313
        %v4315 = vpop.f32.mrb[0].mxu0
        %v4316 = vpop.f32.mrb[0].mxu0
        %v4317 = vadd.f32 %v4156, %v4316
        %v4318 = vpop.f32.mrb[0].mxu0
        %4319 = vmatprep.mubr.bf16.mxu0 %v1745
        %4320 = vmatmul.mubr.bf16.gmra.mrb[0].mxu0 %v1744
        %v4321 = vpop.f32.mrb[0].mxu0
        %v4322 = vadd.f32 %v4161, %v4321
        %v4323 = vpop.f32.mrb[0].mxu0
        %v4324 = vpop.f32.mrb[0].mxu0
        %v4325 = vadd.f32 %v4164, %v4324
        %v4326 = vpop.f32.mrb[0].mxu0
        %4327 = vmatprep.mubr.bf16.mxu0 %v1763
        %4328 = vmatmul.mubr.bf16.gmra.mrb[0].mxu0 %v1762
        %v4329 = vpop.f32.mrb[0].mxu0
        %v4330 = vadd.f32 %v4169, %v4329
        %v4331 = vpop.f32.mrb[0].mxu0
        %v4332 = vpop.f32.mrb[0].mxu0
        %v4333 = vadd.f32 %v4172, %v4332
        %v4334 = vpop.f32.mrb[0].mxu0
        %4335 = vmatprep.mubr.bf16.mxu0 %v1781
        %4336 = vmatmul.mubr.bf16.gmra.mrb[0].mxu0 %v1780
        %v4337 = vpop.f32.mrb[0].mxu0
        %v4338 = vadd.f32 %v4177, %v4337
        %v4339 = vpop.f32.mrb[0].mxu0
        %v4340 = vpop.f32.mrb[0].mxu0
        %v4341 = vadd.f32 %v4180, %v4340
        %v4342 = vpop.f32.mrb[0].mxu0
        %4343 = vmatprep.mubr.bf16.mxu0 %v1799
        %4344 = vmatmul.mubr.bf16.gmra.mrb[0].mxu0 %v1798
        %v4345 = vpop.f32.mrb[0].mxu0
        %v4346 = vadd.f32 %v4185, %v4345
        %v4347 = vpop.f32.mrb[0].mxu0
        %v4348 = vpop.f32.mrb[0].mxu0
        %v4349 = vadd.f32 %v4188, %v4348
        %v4350 = vpop.f32.mrb[0].mxu0
        %4351 = vmatprep.mubr.bf16.mxu0 %v1817
        %4352 = vmatmul.mubr.bf16.gmra.mrb[0].mxu0 %v1816
        %v4353 = vpop.f32.mrb[0].mxu0
        %v4354 = vadd.f32 %v4193, %v4353
        %v4355 = vpop.f32.mrb[0].mxu0
        %v4356 = vpop.f32.mrb[0].mxu0
        %v4357 = vadd.f32 %v4196, %v4356
        %v4358 = vpop.f32.mrb[0].mxu0
        %4359 = vmatprep.mubr.bf16.mxu0 %v1835
        %4360 = vmatmul.mubr.bf16.gmra.mrb[0].mxu0 %v1834
        %v4361 = vpop.f32.mrb[0].mxu0
        %v4362 = vadd.f32 %v4201, %v4361
        %v4363 = vpop.f32.mrb[0].mxu0
        %v4364 = vpop.f32.mrb[0].mxu0
        %v4365 = vadd.f32 %v4204, %v4364
        %v4366 = vpop.f32.mrb[0].mxu0
        %4367 = vmatprep.mubr.bf16.mxu0 %v1853
        %4368 = vmatmul.mubr.bf16.gmra.mrb[0].mxu0 %v1852
        %v4369 = vpop.f32.mrb[0].mxu0
        %v4370 = vadd.f32 %v4209, %v4369
        %v4371 = vpop.f32.mrb[0].mxu0
        %v4372 = vpop.f32.mrb[0].mxu0
        %v4373 = vadd.f32 %v4212, %v4372
        %v4374 = vpop.f32.mrb[0].mxu0
        %4375 = vmatprep.mubr.bf16.mxu0 %v1871
        %4376 = vmatmul.mubr.bf16.gmra.mrb[0].mxu0 %v1870
        %v4377 = vpop.f32.mrb[0].mxu0
        %v4378 = vadd.f32 %v4217, %v4377
        %v4379 = vpop.f32.mrb[0].mxu0
        %v4380 = vpop.f32.mrb[0].mxu0
        %v4381 = vadd.f32 %v4220, %v4380
        %v4382 = vpop.f32.mrb[0].mxu0
        %4383 = vmatprep.mubr.bf16.mxu0 %v1889
        %4384 = vmatmul.mubr.bf16.gmra.mrb[0].mxu0 %v1888
        %v4385 = vpop.f32.mrb[0].mxu0
        %v4386 = vadd.f32 %v4225, %v4385
        %v4387 = vpop.f32.mrb[0].mxu0
        %v4388 = vpop.f32.mrb[0].mxu0
        %v4389 = vadd.f32 %v4228, %v4388
        %v4390 = vpop.f32.mrb[0].mxu0
        %4391 = vmatprep.mubr.bf16.mxu0 %v1907
        %4392 = vmatmul.mubr.bf16.gmra.mrb[0].mxu0 %v1906
        %v4393 = vpop.f32.mrb[0].mxu0
        %v4394 = vadd.f32 %v4233, %v4393
        %v4395 = vpop.f32.mrb[0].mxu0
        %v4396 = vpop.f32.mrb[0].mxu0
        %v4397 = vadd.f32 %v4236, %v4396
        %v4398 = vpop.f32.mrb[0].mxu0
        %4399 = vmatprep.mubr.bf16.mxu0 %v1925
        %4400 = vmatmul.mubr.bf16.gmra.mrb[0].mxu0 %v1924
        %v4401 = vpop.f32.mrb[0].mxu0
        %v4402 = vadd.f32 %v4241, %v4401
        %v4403 = vpop.f32.mrb[0].mxu0
        %v4404 = vpop.f32.mrb[0].mxu0
        %v4405 = vadd.f32 %v4244, %v4404
        %v4406 = vpop.f32.mrb[0].mxu0
        %4407 = vmatprep.mubr.bf16.mxu0 %v1943
        %4408 = vmatmul.mubr.bf16.gmra.mrb[0].mxu0 %v1942
        %v4409 = vpop.f32.mrb[0].mxu0
        %v4410 = vadd.f32 %v4249, %v4409
        %v4411 = vpop.f32.mrb[0].mxu0
        %v4412 = vpop.f32.mrb[0].mxu0
        %v4413 = vadd.f32 %v4252, %v4412
        %v4414 = vpop.f32.mrb[0].mxu0
        %4415 = vmatprep.mubr.bf16.mxu0 %v1961
        %4416 = vmatmul.mubr.bf16.gmra.mrb[0].mxu0 %v1960
        %v4417 = vpop.f32.mrb[0].mxu0
        %v4418 = vadd.f32 %v4257, %v4417
        %v4419 = vpop.f32.mrb[0].mxu0
        %v4420 = vpop.f32.mrb[0].mxu0
        %v4421 = vadd.f32 %v4260, %v4420
        %v4422 = vpop.f32.mrb[0].mxu0
        %4423 = vmatprep.mubr.bf16.mxu0 %v1979
        %4424 = vmatmul.mubr.bf16.gmra.mrb[0].mxu0 %v1978
        %v4425 = vpop.f32.mrb[0].mxu0
        %v4426 = vadd.f32 %v4265, %v4425
        %v4427 = vpop.f32.mrb[0].mxu0
        %v4428 = vpop.f32.mrb[0].mxu0
        %v4429 = vadd.f32 %v4268, %v4428
        %v4430 = vpop.f32.mrb[0].mxu0
        %4431 = vmatprep.mubr.bf16.mxu0 %v1997
        %4432 = vmatmul.mubr.bf16.gmra.mrb[0].mxu0 %v1996
        %v4433 = vpop.f32.mrb[0].mxu0
        %v4434 = vadd.f32 %v4273, %v4433
        %v4435 = vpop.f32.mrb[0].mxu0
        %v4436 = vpop.f32.mrb[0].mxu0
        %v4437 = vadd.f32 %v4276, %v4436
        %v4438 = vpop.f32.mrb[0].mxu0
        %4439 = vdwg.mxu0
        %4440 = vmatprep.subr.bf16.mxu0 0
        %4441 = vmatpush1.bf16.msra.mxu0 %v2992
        %4442 = vmatprep.subr.bf16.mxu0 0
        %4443 = vmatpush1.bf16.msra.mxu0 %v2993
        %4444 = vmatprep.subr.bf16.mxu0 0
        %4445 = vmatpush1.bf16.msra.mxu0 %v2994
        %4446 = vmatprep.subr.bf16.mxu0 0
        %4447 = vmatpush1.bf16.msra.mxu0 %v2995
        %4448 = vmatprep.subr.bf16.mxu0 0
        %4449 = vmatpush1.bf16.msra.mxu0 %v2996
        %4450 = vmatprep.subr.bf16.mxu0 0
        %4451 = vmatpush1.bf16.msra.mxu0 %v2997
        %4452 = vmatprep.subr.bf16.mxu0 0
        %4453 = vmatpush1.bf16.msra.mxu0 %v2998
        %4454 = vmatprep.subr.bf16.mxu0 0
        %4455 = vmatpush1.bf16.msra.mxu0 %v2999
        %4456 = vmatprep.subr.bf16.mxu0 0
        %4457 = vmatpush1.bf16.msra.mxu0 %v3000
        %4458 = vmatprep.subr.bf16.mxu0 0
        %4459 = vmatpush1.bf16.msra.mxu0 %v3001
        %4460 = vmatprep.subr.bf16.mxu0 0
        %4461 = vmatpush1.bf16.msra.mxu0 %v3002
        %4462 = vmatprep.subr.bf16.mxu0 0
        %4463 = vmatpush1.bf16.msra.mxu0 %v3003
        %4464 = vmatprep.subr.bf16.mxu0 0
        %4465 = vmatpush1.bf16.msra.mxu0 %v3004
        %4466 = vmatprep.subr.bf16.mxu0 0
        %4467 = vmatpush1.bf16.msra.mxu0 %v3005
        %4468 = vmatprep.subr.bf16.mxu0 0
        %4469 = vmatpush1.bf16.msra.mxu0 %v3006
        %4470 = vmatprep.subr.bf16.mxu0 0
        %4471 = vmatpush1.bf16.msra.mxu0 %v3007
        %4472 = vmatprep.mubr.bf16.mxu0 %v1729
        %4473 = vmatmul.mubr.bf16.gmra.mrb[0].mxu0 %v1728
        %v4474 = vpop.f32.mrb[0].mxu0
        %v4475 = vadd.f32 %v4314, %v4474
        %v4476 = vpop.f32.mrb[0].mxu0
        %v4477 = vpop.f32.mrb[0].mxu0
        %v4478 = vadd.f32 %v4317, %v4477
        %v4479 = vpop.f32.mrb[0].mxu0
        %4480 = vmatprep.mubr.bf16.mxu0 %v1747
        %4481 = vmatmul.mubr.bf16.gmra.mrb[0].mxu0 %v1746
        %v4482 = vpop.f32.mrb[0].mxu0
        %v4483 = vadd.f32 %v4322, %v4482
        %v4484 = vpop.f32.mrb[0].mxu0
        %v4485 = vpop.f32.mrb[0].mxu0
        %v4486 = vadd.f32 %v4325, %v4485
        %v4487 = vpop.f32.mrb[0].mxu0
        %4488 = vmatprep.mubr.bf16.mxu0 %v1765
        %4489 = vmatmul.mubr.bf16.gmra.mrb[0].mxu0 %v1764
        %v4490 = vpop.f32.mrb[0].mxu0
        %v4491 = vadd.f32 %v4330, %v4490
        %v4492 = vpop.f32.mrb[0].mxu0
        %v4493 = vpop.f32.mrb[0].mxu0
        %v4494 = vadd.f32 %v4333, %v4493
        %v4495 = vpop.f32.mrb[0].mxu0
        %4496 = vmatprep.mubr.bf16.mxu0 %v1783
        %4497 = vmatmul.mubr.bf16.gmra.mrb[0].mxu0 %v1782
        %v4498 = vpop.f32.mrb[0].mxu0
        %v4499 = vadd.f32 %v4338, %v4498
        %v4500 = vpop.f32.mrb[0].mxu0
        %v4501 = vpop.f32.mrb[0].mxu0
        %v4502 = vadd.f32 %v4341, %v4501
        %v4503 = vpop.f32.mrb[0].mxu0
        %4504 = vmatprep.mubr.bf16.mxu0 %v1801
        %4505 = vmatmul.mubr.bf16.gmra.mrb[0].mxu0 %v1800
        %v4506 = vpop.f32.mrb[0].mxu0
        %v4507 = vadd.f32 %v4346, %v4506
        %v4508 = vpop.f32.mrb[0].mxu0
        %v4509 = vpop.f32.mrb[0].mxu0
        %v4510 = vadd.f32 %v4349, %v4509
        %v4511 = vpop.f32.mrb[0].mxu0
        %4512 = vmatprep.mubr.bf16.mxu0 %v1819
        %4513 = vmatmul.mubr.bf16.gmra.mrb[0].mxu0 %v1818
        %v4514 = vpop.f32.mrb[0].mxu0
        %v4515 = vadd.f32 %v4354, %v4514
        %v4516 = vpop.f32.mrb[0].mxu0
        %v4517 = vpop.f32.mrb[0].mxu0
        %v4518 = vadd.f32 %v4357, %v4517
        %v4519 = vpop.f32.mrb[0].mxu0
        %4520 = vmatprep.mubr.bf16.mxu0 %v1837
        %4521 = vmatmul.mubr.bf16.gmra.mrb[0].mxu0 %v1836
        %v4522 = vpop.f32.mrb[0].mxu0
        %v4523 = vadd.f32 %v4362, %v4522
        %v4524 = vpop.f32.mrb[0].mxu0
        %v4525 = vpop.f32.mrb[0].mxu0
        %v4526 = vadd.f32 %v4365, %v4525
        %v4527 = vpop.f32.mrb[0].mxu0
        %4528 = vmatprep.mubr.bf16.mxu0 %v1855
        %4529 = vmatmul.mubr.bf16.gmra.mrb[0].mxu0 %v1854
        %v4530 = vpop.f32.mrb[0].mxu0
        %v4531 = vadd.f32 %v4370, %v4530
        %v4532 = vpop.f32.mrb[0].mxu0
        %v4533 = vpop.f32.mrb[0].mxu0
        %v4534 = vadd.f32 %v4373, %v4533
        %v4535 = vpop.f32.mrb[0].mxu0
        %4536 = vmatprep.mubr.bf16.mxu0 %v1873
        %4537 = vmatmul.mubr.bf16.gmra.mrb[0].mxu0 %v1872
        %v4538 = vpop.f32.mrb[0].mxu0
        %v4539 = vadd.f32 %v4378, %v4538
        %v4540 = vpop.f32.mrb[0].mxu0
        %v4541 = vpop.f32.mrb[0].mxu0
        %v4542 = vadd.f32 %v4381, %v4541
        %v4543 = vpop.f32.mrb[0].mxu0
        %4544 = vmatprep.mubr.bf16.mxu0 %v1891
        %4545 = vmatmul.mubr.bf16.gmra.mrb[0].mxu0 %v1890
        %v4546 = vpop.f32.mrb[0].mxu0
        %v4547 = vadd.f32 %v4386, %v4546
        %v4548 = vpop.f32.mrb[0].mxu0
        %v4549 = vpop.f32.mrb[0].mxu0
        %v4550 = vadd.f32 %v4389, %v4549
        %v4551 = vpop.f32.mrb[0].mxu0
        %4552 = vmatprep.mubr.bf16.mxu0 %v1909
        %4553 = vmatmul.mubr.bf16.gmra.mrb[0].mxu0 %v1908
        %v4554 = vpop.f32.mrb[0].mxu0
        %v4555 = vadd.f32 %v4394, %v4554
        %v4556 = vpop.f32.mrb[0].mxu0
        %v4557 = vpop.f32.mrb[0].mxu0
        %v4558 = vadd.f32 %v4397, %v4557
        %v4559 = vpop.f32.mrb[0].mxu0
        %4560 = vmatprep.mubr.bf16.mxu0 %v1927
        %4561 = vmatmul.mubr.bf16.gmra.mrb[0].mxu0 %v1926
        %v4562 = vpop.f32.mrb[0].mxu0
        %v4563 = vadd.f32 %v4402, %v4562
        %v4564 = vpop.f32.mrb[0].mxu0
        %v4565 = vpop.f32.mrb[0].mxu0
        %v4566 = vadd.f32 %v4405, %v4565
        %v4567 = vpop.f32.mrb[0].mxu0
        %4568 = vmatprep.mubr.bf16.mxu0 %v1945
        %4569 = vmatmul.mubr.bf16.gmra.mrb[0].mxu0 %v1944
        %v4570 = vpop.f32.mrb[0].mxu0
        %v4571 = vadd.f32 %v4410, %v4570
        %v4572 = vpop.f32.mrb[0].mxu0
        %v4573 = vpop.f32.mrb[0].mxu0
        %v4574 = vadd.f32 %v4413, %v4573
        %v4575 = vpop.f32.mrb[0].mxu0
        %4576 = vmatprep.mubr.bf16.mxu0 %v1963
        %4577 = vmatmul.mubr.bf16.gmra.mrb[0].mxu0 %v1962
        %v4578 = vpop.f32.mrb[0].mxu0
        %v4579 = vadd.f32 %v4418, %v4578
        %v4580 = vpop.f32.mrb[0].mxu0
        %v4581 = vpop.f32.mrb[0].mxu0
        %v4582 = vadd.f32 %v4421, %v4581
        %v4583 = vpop.f32.mrb[0].mxu0
        %4584 = vmatprep.mubr.bf16.mxu0 %v1981
        %4585 = vmatmul.mubr.bf16.gmra.mrb[0].mxu0 %v1980
        %v4586 = vpop.f32.mrb[0].mxu0
        %v4587 = vadd.f32 %v4426, %v4586
        %v4588 = vpop.f32.mrb[0].mxu0
        %v4589 = vpop.f32.mrb[0].mxu0
        %v4590 = vadd.f32 %v4429, %v4589
        %v4591 = vpop.f32.mrb[0].mxu0
        %4592 = vmatprep.mubr.bf16.mxu0 %v1999
        %4593 = vmatmul.mubr.bf16.gmra.mrb[0].mxu0 %v1998
        %v4594 = vpop.f32.mrb[0].mxu0
        %v4595 = vadd.f32 %v4434, %v4594
        %v4596 = vpop.f32.mrb[0].mxu0
        %v4597 = vpop.f32.mrb[0].mxu0
        %v4598 = vadd.f32 %v4437, %v4597
        %v4599 = vpop.f32.mrb[0].mxu0
        %4600 = vdwg.mxu0
        %4601 = vst [vmem:[%s259] sm:$0xff] %v4475
        %4602 = vst [vmem:[%s259 + $0x8] sm:$0xff] %v4478
        %4603 = vst [vmem:[%s259 + $0x10] sm:$0xff] %v4483
        %4604 = vst [vmem:[%s259 + $0x18] sm:$0xff] %v4486
        %4605 = vst [vmem:[%s259 + $0x20] sm:$0xff] %v4491
        %4606 = vst [vmem:[%s259 + $0x28] sm:$0xff] %v4494
        %4607 = vst [vmem:[%s259 + $0x30] sm:$0xff] %v4499
        %4608 = vst [vmem:[%s259 + $0x38] sm:$0xff] %v4502
        %4609 = vst [vmem:[%s259 + $0x40] sm:$0xff] %v4507
        %4610 = vst [vmem:[%s259 + $0x48] sm:$0xff] %v4510
        %4611 = vst [vmem:[%s259 + $0x50] sm:$0xff] %v4515
        %4612 = vst [vmem:[%s259 + $0x58] sm:$0xff] %v4518
        %4613 = vst [vmem:[%s259 + $0x60] sm:$0xff] %v4523
        %4614 = vst [vmem:[%s259 + $0x68] sm:$0xff] %v4526
        %4615 = vst [vmem:[%s259 + $0x70] sm:$0xff] %v4531
        %4616 = vst [vmem:[%s259 + $0x78] sm:$0xff] %v4534
        %4617 = vst [vmem:[%s259 + $0x80] sm:$0xff] %v4539
        %4618 = vst [vmem:[%s259 + $0x88] sm:$0xff] %v4542
        %4619 = vst [vmem:[%s259 + $0x90] sm:$0xff] %v4547
        %4620 = vst [vmem:[%s259 + $0x98] sm:$0xff] %v4550
        %4621 = vst [vmem:[%s259 + $0xa0] sm:$0xff] %v4555
        %4622 = vst [vmem:[%s259 + $0xa8] sm:$0xff] %v4558
        %4623 = vst [vmem:[%s259 + $0xb0] sm:$0xff] %v4563
        %4624 = vst [vmem:[%s259 + $0xb8] sm:$0xff] %v4566
        %4625 = vst [vmem:[%s259 + $0xc0] sm:$0xff] %v4571
        %4626 = vst [vmem:[%s259 + $0xc8] sm:$0xff] %v4574
        %4627 = vst [vmem:[%s259 + $0xd0] sm:$0xff] %v4579
        %4628 = vst [vmem:[%s259 + $0xd8] sm:$0xff] %v4582
        %4629 = vst [vmem:[%s259 + $0xe0] sm:$0xff] %v4587
        %4630 = vst [vmem:[%s259 + $0xe8] sm:$0xff] %v4590
        %4631 = vst [vmem:[%s259 + $0xf0] sm:$0xff] %v4595
        %4632 = vst [vmem:[%s259 + $0xf8] sm:$0xff] %v4598
        %s4633 = sand.u32 %s132, 1
        %s4634 = scalar_lea.sflag [#allocation4], %s4633
        %s4635 = sand.u32 %s132, 1
        %s4636 = smul.addr %s4635, 256
        %s4637 = scalar_lea.vmem [#allocation8], %s4636
        // Predicated region
        $region45: #{tpu_custom_call.1} parent=31 // pred_check
          %p4638 = pneg %p142
        $region46: #{tpu_custom_call.1} parent=31 // pred_check_branch
          %4640 = sbr.rel (%p4638) target = $region48
        $region47: #{tpu_custom_call.1} parent=31 // pred_region
          %s4641 = smul.u32 32, %s26
          %s4643 = ssub.s32 4096, 4096
          %4644 = vsyncadd %s4634, %s4643
          %s4645 = sadd.s32 %s27, %s4641
          %s4646 = smul.addr %s4645, 128
          %s4647 = scalar_lea.hbm %s3, %s4646
          %s4648 = sshll.u32 %s4637, 4
          %s4649 = int_to_ptr.vmem [resolvable:$true] %s4648
          %4654 = dma.vmem_to_hbm [thread:$0]  %s4649, 4096, %s4647, %s4634, 128, 128, 8
        $region48: #{tpu_custom_call.1} parent=31 // pred_fallthru
          _
      $region32: #{tpu_custom_call.1} parent=5 // pred_fallthru
        _
      %p4655 = scmp.le.s32.totalorder 2, %s16
      // Predicated region
      $region49: #{tpu_custom_call.1} parent=5 // pred_check
        %p4656 = pneg %p4655
      $region50: #{tpu_custom_call.1} parent=5 // pred_check_branch
        %4658 = sbr.rel (%p4656) target = $region52
      $region51: #{tpu_custom_call.1} parent=5 // pred_region
        %s4659 = ssub.s32 %s16, 2
        // Predicated region
        $region53: #{tpu_custom_call.1} parent=51 // pred_check
          %p4660 = pneg %p148
        $region54: #{tpu_custom_call.1} parent=51 // pred_check_branch
          %4662 = sbr.rel (%p4660) target = $region56
        $region55: #{tpu_custom_call.1} parent=51 // pred_region
          %s4663 = sand.u32 %s133, 1
          %s4664 = scalar_lea.sflag [#allocation4], %s4663
          %s4665 = sand.u32 %s133, 1
          %s4666 = smul.addr %s4665, 256
          %s4667 = scalar_lea.vmem [#allocation8], %s4666
          %4668 = dma.done %s4664, 4096
        $region56: #{tpu_custom_call.1} parent=51 // pred_fallthru
          _
      $region52: #{tpu_custom_call.1} parent=5 // pred_fallthru
        _
    $region6: #{tpu_custom_call.1} parent=1 // loop_footer
      %s20 = sadd.s32 1, %s16
    $region7: #{tpu_custom_call.1} parent=1 // loop_footer_branch
      %15 = sbr.rel target = $region3
    $region8: #{tpu_custom_call.1} parent=1 // loop_exit
      _
    %4669 = vsyncpa [#allocation3], 1
    %s4670 = scalar_lea.sflag [#allocation3], 1
    %4671 = vsyncpa %s4670, 1
    %4672 = vsyncpa [#allocation6], 1
    %4673 = vsyncpa [#allocation4], 1
    %s4674 = scalar_lea.sflag [#allocation4], 1
    %4675 = vsyncpa %s4674, 1

</llo_original>
